<compile_context>
chip_gen: v7x
topology: tpu7x:2x2x1
jax: 0.10.0
libtpu: 0.0.40
codegen_flags: <defaults>
</compile_context>

<pallas_src>
import functools
import math

import jax
import jax.numpy as jnp
from jax.experimental import pallas as pl
from jax.experimental.pallas import tpu as pltpu

# ---------------- config ----------------
VOCAB = 50          # BERT word-embedding vocab (synthetic)
OUT_VOCAB = 40      # len(word2idx) for the replaced decoder Linear
OUT_PAD = 128       # decoder output padded to a lane-dense 128 columns
HIDDEN = 32
N_LAYERS = 2
N_HEADS = 4
HEAD_DIM = HIDDEN // N_HEADS
INTER = 64
MAX_POS = 16
TYPE_VOCAB = 2
LN_EPS = 1e-12
NEG_INF = -1e9      # stands in for torch.finfo(float32).min in the extended mask


def _gelu_exact(x):
    # HF BERT "gelu" == exact erf-based gelu
    return 0.5 * x * (1.0 + jax.lax.erf(x / jnp.sqrt(jnp.float32(2.0))))


# ---------------- the fused kernel ----------------
def bert_fused_kernel(
    emb_ref, am_ref,
    emb_ln_g_ref, emb_ln_b_ref,
    qkv_w_ref, qkv_b_ref,
    o_w_ref, o_b_ref,
    ln1_g_ref, ln1_b_ref,
    i_w_ref, i_b_ref,
    fo_w_ref, fo_b_ref,
    ln2_g_ref, ln2_b_ref,
    tr_w_ref, tr_b_ref,
    tr_ln_g_ref, tr_ln_b_ref,
    dec_w_ref, dec_b_ref,
    out_ref,
    *, n_layers, n_heads, head_dim, eps, neg_inf,
):
    B = am_ref.shape[0]          # (B, 1, S)
    S = am_ref.shape[2]
    H = emb_ref.shape[1]         # (B*S, H)

    def layernorm(h, g, b):
        mu = jnp.mean(h, axis=-1, keepdims=True)
        d = h - mu
        var = jnp.mean(d * d, axis=-1, keepdims=True)
        return d * jax.lax.rsqrt(var + eps) * g + b

    def mm(a, w, b):
        # bf16 operands into the MXU, f32 accumulation, f32 bias add
        return jnp.dot(a.astype(w.dtype), w,
                       preferred_element_type=jnp.float32) + b

    # embeddings LayerNorm over the flattened (B*S, H) activations
    x = layernorm(emb_ref[...], emb_ln_g_ref[...], emb_ln_b_ref[...])

    # causal + padding additive bias, built once, shape (B, S, S)
    row = jax.lax.broadcasted_iota(jnp.int32, (S, S), 0)
    col = jax.lax.broadcasted_iota(jnp.int32, (S, S), 1)
    causal = (row >= col)[None, :, :]                       # (1, S, S)
    keep = causal & (am_ref[...] > 0.5)                     # (B, S, S)
    bias = jnp.where(keep, 0.0, neg_inf).astype(jnp.float32)

    for l in range(n_layers):
        # fused QKV projection on the flattened batch: (B*S, H) @ (H, 3H)
        # (the 1/sqrt(head_dim) scale is already folded into the Q columns)
        qkv = mm(x, qkv_w_ref[l], qkv_b_ref[l])             # (B*S, 3H) f32
        # split batch back out with cheap leading-axis ops (sublane-tile aligned)
        qkv3 = jnp.stack([qkv[b * S:(b + 1) * S, :] for b in range(B)], axis=0)

        ctx_heads = []
        for hh in range(n_heads):                           # static unrolled heads
            lo = hh * head_dim
            qh = qkv3[:, :, lo:lo + head_dim]               # (B, S, dh)
            kh = qkv3[:, :, H + lo:H + lo + head_dim]
            vh = qkv3[:, :, 2 * H + lo:2 * H + lo + head_dim]
            s = jnp.einsum('bqd,bkd->bqk', qh, kh,
                           preferred_element_type=jnp.float32) + bias
            s = s - jnp.max(s, axis=-1, keepdims=True)
            p = jnp.exp(s)
            p = p * pl.reciprocal(jnp.sum(p, axis=-1, keepdims=True), approx=True)
            ctx_heads.append(jnp.einsum('bqk,bkd->bqd', p, vh,
                                        preferred_element_type=jnp.float32))
        ctx = jnp.concatenate(ctx_heads, axis=-1)           # (B, S, H)
        ctx = jnp.concatenate([ctx[b] for b in range(B)], axis=0)   # (B*S, H)

        attn = mm(ctx, o_w_ref[l], o_b_ref[l])
        x = layernorm(attn + x, ln1_g_ref[l], ln1_b_ref[l])

        inter = _gelu_exact(mm(x, i_w_ref[l], i_b_ref[l]))
        ffn = mm(inter, fo_w_ref[l], fo_b_ref[l])
        x = layernorm(ffn + x, ln2_g_ref[l], ln2_b_ref[l])

    # cls.predictions head: transform (dense + gelu + LN) then replaced decoder
    h = _gelu_exact(mm(x, tr_w_ref[...], tr_b_ref[...]))
    h = layernorm(h, tr_ln_g_ref[...], tr_ln_b_ref[...])
    logits = mm(h, dec_w_ref[...], dec_b_ref[...])          # (B*S, OUT_PAD)
    out_ref[...] = logits.astype(out_ref.dtype)             # one unmasked 128-lane store


# ---------------- parameter init (deterministic, synthetic) ----------------
# TODO(synk): loading real bert-base-uncased pretrained weights is replaced by
# deterministic synthetic initialization (no file/network access allowed here).
def init_params(key):
    keys = iter(jax.random.split(key, 32))

    def w(shape, scale=0.02):
        return (scale * jax.random.normal(next(keys), shape)).astype(jnp.float32)

    def zeros(shape):
        return jnp.zeros(shape, jnp.float32)

    def ones(shape):
        return jnp.ones(shape, jnp.float32)

    # fold the attention 1/sqrt(head_dim) scale into the Q columns of the fused
    # QKV projection (one-time host-side transform; removes a per-layer VPU mul)
    q_scale = 1.0 / math.sqrt(HEAD_DIM)
    col_scale = jnp.concatenate([
        jnp.full((HIDDEN,), q_scale, jnp.float32),
        jnp.ones((2 * HIDDEN,), jnp.float32)])
    qkv_w = w((N_LAYERS, HIDDEN, 3 * HIDDEN)) * col_scale[None, None, :]
    qkv_b = zeros((N_LAYERS, 1, 3 * HIDDEN)) * col_scale[None, None, :]

    # decoder Linear(hidden, OUT_VOCAB) zero-padded to OUT_PAD lane-dense columns
    dec_w = jnp.pad(w((HIDDEN, OUT_VOCAB)), ((0, 0), (0, OUT_PAD - OUT_VOCAB)))

    bf16 = jnp.bfloat16
    return {
        "word_emb": w((VOCAB, HIDDEN)),
        "pos_emb": w((MAX_POS, HIDDEN)),
        "type_emb": w((TYPE_VOCAB, HIDDEN)),
        "emb_ln_g": ones((1, HIDDEN)), "emb_ln_b": zeros((1, HIDDEN)),
        # stacked per-layer weights (layer axis leading); matmul weights in bf16,
        # biases / LayerNorm params stay f32.
        "qkv_w": qkv_w.astype(bf16), "qkv_b": qkv_b,
        "o_w": w((N_LAYERS, HIDDEN, HIDDEN)).astype(bf16),
        "o_b": zeros((N_LAYERS, 1, HIDDEN)),
        "ln1_g": ones((N_LAYERS, 1, HIDDEN)), "ln1_b": zeros((N_LAYERS, 1, HIDDEN)),
        "i_w": w((N_LAYERS, HIDDEN, INTER)).astype(bf16),
        "i_b": zeros((N_LAYERS, 1, INTER)),
        "fo_w": w((N_LAYERS, INTER, HIDDEN)).astype(bf16),
        "fo_b": zeros((N_LAYERS, 1, HIDDEN)),
        "ln2_g": ones((N_LAYERS, 1, HIDDEN)), "ln2_b": zeros((N_LAYERS, 1, HIDDEN)),
        # cls.predictions.transform + replaced decoder
        "tr_w": w((HIDDEN, HIDDEN)).astype(bf16), "tr_b": zeros((1, HIDDEN)),
        "tr_ln_g": ones((1, HIDDEN)), "tr_ln_b": zeros((1, HIDDEN)),
        "dec_w": dec_w.astype(bf16), "dec_b": zeros((1, OUT_PAD)),
    }


# ---------------- forward: one fused pallas_call, no grid ----------------
def bert_seq_forward(params, input_ids, attention_mask, token_type_ids):
    B, S = input_ids.shape
    H = HIDDEN

    # Embedding-table gathers stay in JAX glue (tiny, data-dependent gather).
    we = jnp.take(params["word_emb"], input_ids, axis=0)            # (B,S,H)
    pe = params["pos_emb"][:S][None, :, :]                          # (1,S,H)
    te = jnp.take(params["type_emb"], token_type_ids, axis=0)       # (B,S,H)
    emb = (we + pe + te).astype(jnp.float32).reshape(B * S, H)      # (B*S,H)
    am = attention_mask.astype(jnp.float32).reshape(B, 1, S)        # (B,1,S)

    ordered_weights = [
        params["emb_ln_g"], params["emb_ln_b"],
        params["qkv_w"], params["qkv_b"],
        params["o_w"], params["o_b"],
        params["ln1_g"], params["ln1_b"],
        params["i_w"], params["i_b"],
        params["fo_w"], params["fo_b"],
        params["ln2_g"], params["ln2_b"],
        params["tr_w"], params["tr_b"],
        params["tr_ln_g"], params["tr_ln_b"],
        params["dec_w"], params["dec_b"],
    ]

    n_in = 2 + len(ordered_weights)
    in_specs = [pl.BlockSpec(memory_space=pltpu.MemorySpace.VMEM)
                for _ in range(n_in)]
    out_specs = pl.BlockSpec(memory_space=pltpu.MemorySpace.VMEM)

    out = pl.pallas_call(
        functools.partial(
            bert_fused_kernel,
            n_layers=N_LAYERS, n_heads=N_HEADS, head_dim=HEAD_DIM,
            eps=LN_EPS, neg_inf=NEG_INF),
        out_shape=jax.ShapeDtypeStruct((B * S, OUT_PAD), jnp.float32),
        in_specs=in_specs,
        out_specs=out_specs,
    )(emb, am, *ordered_weights)

    return out.reshape(B, S, OUT_PAD)[:, :, :OUT_VOCAB]             # (B,S,OUT_VOCAB)


if __name__ == "__main__":
    key = jax.random.PRNGKey(0)
    k_param, k_ids = jax.random.split(key)

    params = init_params(k_param)

    B, S = 2, 8
    input_ids = jax.random.randint(k_ids, (B, S), 0, VOCAB, dtype=jnp.int32)
    attention_mask = jnp.ones((B, S), jnp.int32)
    token_type_ids = jnp.zeros((B, S), jnp.int32)

    fwd = jax.jit(bert_seq_forward)
    logits = jax.block_until_ready(
        fwd(params, input_ids, attention_mask, token_type_ids))

    assert logits.shape == (B, S, OUT_VOCAB)
    assert bool(jnp.all(jnp.isfinite(logits)))
    print("KERNEL_OK")
</pallas_src>

<mosaic_0001>
module attributes {stable_mosaic.version = 11 : i64} {
  func.func @bert_fused_kernel(%arg0: memref<16x32xf32, #tpu.memory_space<vmem>>, %arg1: memref<2x1x8xf32, #tpu.memory_space<vmem>>, %arg2: memref<1x32xf32, #tpu.memory_space<vmem>>, %arg3: memref<1x32xf32, #tpu.memory_space<vmem>>, %arg4: memref<2x32x96xbf16, #tpu.memory_space<vmem>>, %arg5: memref<2x1x96xf32, #tpu.memory_space<vmem>>, %arg6: memref<2x32x32xbf16, #tpu.memory_space<vmem>>, %arg7: memref<2x1x32xf32, #tpu.memory_space<vmem>>, %arg8: memref<2x1x32xf32, #tpu.memory_space<vmem>>, %arg9: memref<2x1x32xf32, #tpu.memory_space<vmem>>, %arg10: memref<2x32x64xbf16, #tpu.memory_space<vmem>>, %arg11: memref<2x1x64xf32, #tpu.memory_space<vmem>>, %arg12: memref<2x64x32xbf16, #tpu.memory_space<vmem>>, %arg13: memref<2x1x32xf32, #tpu.memory_space<vmem>>, %arg14: memref<2x1x32xf32, #tpu.memory_space<vmem>>, %arg15: memref<2x1x32xf32, #tpu.memory_space<vmem>>, %arg16: memref<32x32xbf16, #tpu.memory_space<vmem>>, %arg17: memref<1x32xf32, #tpu.memory_space<vmem>>, %arg18: memref<1x32xf32, #tpu.memory_space<vmem>>, %arg19: memref<1x32xf32, #tpu.memory_space<vmem>>, %arg20: memref<32x128xbf16, #tpu.memory_space<vmem>>, %arg21: memref<1x128xf32, #tpu.memory_space<vmem>>, %arg22: memref<16x128xf32, #tpu.memory_space<vmem>>) attributes {dimension_semantics = [], scalar_prefetch = 0 : i64, scratch_operands = 0 : i64, tpu.core_type = #tpu.core_type<tc>} {
    %c0 = arith.constant 0 : index
    %c0_0 = arith.constant 0 : index
    %0 = vector.load %arg0[%c0, %c0_0] : memref<16x32xf32, #tpu.memory_space<vmem>>, vector<16x32xf32>
    %c0_1 = arith.constant 0 : index
    %c0_2 = arith.constant 0 : index
    %1 = vector.load %arg2[%c0_1, %c0_2] : memref<1x32xf32, #tpu.memory_space<vmem>>, vector<1x32xf32>
    %c0_3 = arith.constant 0 : index
    %c0_4 = arith.constant 0 : index
    %2 = vector.load %arg3[%c0_3, %c0_4] : memref<1x32xf32, #tpu.memory_space<vmem>>, vector<1x32xf32>
    %cst = arith.constant dense<0.000000e+00> : vector<16xf32>
    %3 = vector.multi_reduction <add>, %0, %cst [1] : vector<16x32xf32> to vector<16xf32>
    %4 = vector.shape_cast %3 : vector<16xf32> to vector<16x1xf32>
    %cst_5 = arith.constant 3.200000e+01 : f32
    %5 = vector.broadcast %cst_5 : f32 to vector<16x1xf32>
    %6 = arith.divf %4, %5 : vector<16x1xf32>
    %7 = vector.broadcast %6 : vector<16x1xf32> to vector<16x32xf32>
    %8 = arith.subf %0, %7 : vector<16x32xf32>
    %9 = arith.mulf %8, %8 : vector<16x32xf32>
    %cst_6 = arith.constant dense<0.000000e+00> : vector<16xf32>
    %10 = vector.multi_reduction <add>, %9, %cst_6 [1] : vector<16x32xf32> to vector<16xf32>
    %11 = vector.shape_cast %10 : vector<16xf32> to vector<16x1xf32>
    %cst_7 = arith.constant 3.200000e+01 : f32
    %12 = vector.broadcast %cst_7 : f32 to vector<16x1xf32>
    %13 = arith.divf %11, %12 : vector<16x1xf32>
    %cst_8 = arith.constant 9.99999996E-13 : f32
    %14 = vector.broadcast %cst_8 : f32 to vector<16x1xf32>
    %15 = arith.addf %13, %14 : vector<16x1xf32>
    %16 = math.rsqrt %15 : vector<16x1xf32>
    %17 = vector.broadcast %16 : vector<16x1xf32> to vector<16x32xf32>
    %18 = arith.mulf %8, %17 : vector<16x32xf32>
    %19 = vector.broadcast %1 : vector<1x32xf32> to vector<16x32xf32>
    %20 = arith.mulf %18, %19 : vector<16x32xf32>
    %21 = vector.broadcast %2 : vector<1x32xf32> to vector<16x32xf32>
    %22 = arith.addf %20, %21 : vector<16x32xf32>
    %23 = tpu.iota {dimensions = array<i32: 0>} : vector<8x8xi32>
    %24 = tpu.iota {dimensions = array<i32: 1>} : vector<8x8xi32>
    %25 = arith.cmpi sge, %23, %24 : vector<8x8xi32>
    %26 = vector.shape_cast %25 : vector<8x8xi1> to vector<1x8x8xi1>
    %c0_9 = arith.constant 0 : index
    %c0_10 = arith.constant 0 : index
    %c0_11 = arith.constant 0 : index
    %27 = vector.load %arg1[%c0_9, %c0_10, %c0_11] : memref<2x1x8xf32, #tpu.memory_space<vmem>>, vector<2x1x8xf32>
    %cst_12 = arith.constant 5.000000e-01 : f32
    %28 = vector.broadcast %cst_12 : f32 to vector<2x1x8xf32>
    %29 = arith.cmpf ogt, %27, %28 : vector<2x1x8xf32>
    %30 = vector.broadcast %26 : vector<1x8x8xi1> to vector<2x8x8xi1>
    %31 = vector.broadcast %29 : vector<2x1x8xi1> to vector<2x8x8xi1>
    %32 = arith.andi %30, %31 : vector<2x8x8xi1>
    %cst_13 = arith.constant 0.000000e+00 : f32
    %cst_14 = arith.constant -1.000000e+09 : f32
    %33 = vector.broadcast %cst_13 : f32 to vector<2x8x8xf32>
    %34 = vector.broadcast %cst_14 : f32 to vector<2x8x8xf32>
    %35 = arith.select %32, %33, %34 : vector<2x8x8xi1>, vector<2x8x8xf32>
    %c0_15 = arith.constant 0 : index
    %c0_16 = arith.constant 0 : index
    %c0_17 = arith.constant 0 : index
    %36 = vector.load %arg4[%c0_15, %c0_16, %c0_17] : memref<2x32x96xbf16, #tpu.memory_space<vmem>>, vector<1x32x96xbf16>
    %37 = vector.shape_cast %36 : vector<1x32x96xbf16> to vector<32x96xbf16>
    %c0_18 = arith.constant 0 : index
    %c0_19 = arith.constant 0 : index
    %c0_20 = arith.constant 0 : index
    %38 = vector.load %arg5[%c0_18, %c0_19, %c0_20] : memref<2x1x96xf32, #tpu.memory_space<vmem>>, vector<1x1x96xf32>
    %39 = vector.shape_cast %38 : vector<1x1x96xf32> to vector<1x96xf32>
    %40 = arith.truncf %22 : vector<16x32xf32> to vector<16x32xbf16>
    %cst_21 = arith.constant dense<0.000000e+00> : vector<16x96xf32>
    %41 = tpu.matmul %40, %37, %cst_21 {dimension_numbers = #tpu.dot_dimension_numbers<[1], [0], [0], [1], [0, 0, 1, 1], [], []>} : vector<16x32xbf16>, vector<32x96xbf16>, vector<16x96xf32> -> vector<16x96xf32>
    %42 = vector.broadcast %39 : vector<1x96xf32> to vector<16x96xf32>
    %43 = arith.addf %41, %42 : vector<16x96xf32>
    %44 = vector.extract_strided_slice %43 {offsets = [0, 0], sizes = [8, 96], strides = [1, 1]} : vector<16x96xf32> to vector<8x96xf32>
    %45 = vector.extract_strided_slice %43 {offsets = [8, 0], sizes = [8, 96], strides = [1, 1]} : vector<16x96xf32> to vector<8x96xf32>
    %46 = vector.shape_cast %44 : vector<8x96xf32> to vector<1x8x96xf32>
    %47 = vector.shape_cast %45 : vector<8x96xf32> to vector<1x8x96xf32>
    %48 = tpu.concatenate %46, %47 in 0 : vector<1x8x96xf32>, vector<1x8x96xf32> -> vector<2x8x96xf32>
    %49 = vector.extract_strided_slice %48 {offsets = [0, 0, 0], sizes = [2, 8, 8], strides = [1, 1, 1]} : vector<2x8x96xf32> to vector<2x8x8xf32>
    %50 = vector.extract_strided_slice %48 {offsets = [0, 0, 32], sizes = [2, 8, 8], strides = [1, 1, 1]} : vector<2x8x96xf32> to vector<2x8x8xf32>
    %51 = vector.extract_strided_slice %48 {offsets = [0, 0, 64], sizes = [2, 8, 8], strides = [1, 1, 1]} : vector<2x8x96xf32> to vector<2x8x8xf32>
    "tpu.trace_start"() <{level = 10 : i32, message = "bqd,bkd->bqk"}> : () -> ()
    %cst_22 = arith.constant dense<0.000000e+00> : vector<2x8x8xf32>
    %52 = tpu.matmul %49, %50, %cst_22 {dimension_numbers = #tpu.dot_dimension_numbers<[2], [2], [1], [1], [0, 0, 0, 1, 1, 1], [0], [0]>} : vector<2x8x8xf32>, vector<2x8x8xf32>, vector<2x8x8xf32> -> vector<2x8x8xf32>
    "tpu.trace_stop"() : () -> ()
    %53 = arith.addf %52, %35 : vector<2x8x8xf32>
    %cst_23 = arith.constant dense<0xFF800000> : vector<2x8xf32>
    %54 = vector.multi_reduction <maximumf>, %53, %cst_23 [2] : vector<2x8x8xf32> to vector<2x8xf32>
    %55 = vector.shape_cast %54 : vector<2x8xf32> to vector<2x8x1xf32>
    %56 = vector.broadcast %55 : vector<2x8x1xf32> to vector<2x8x8xf32>
    %57 = arith.subf %53, %56 : vector<2x8x8xf32>
    %58 = math.exp %57 : vector<2x8x8xf32>
    %cst_24 = arith.constant dense<0.000000e+00> : vector<2x8xf32>
    %59 = vector.multi_reduction <add>, %58, %cst_24 [2] : vector<2x8x8xf32> to vector<2x8xf32>
    %60 = vector.shape_cast %59 : vector<2x8xf32> to vector<2x8x1xf32>
    %61 = tpu.reciprocal %60 {approx = true} : vector<2x8x1xf32> -> vector<2x8x1xf32>
    %62 = vector.broadcast %61 : vector<2x8x1xf32> to vector<2x8x8xf32>
    %63 = arith.mulf %58, %62 : vector<2x8x8xf32>
    "tpu.trace_start"() <{level = 10 : i32, message = "bqk,bkd->bqd"}> : () -> ()
    %cst_25 = arith.constant dense<0.000000e+00> : vector<2x8x8xf32>
    %64 = tpu.matmul %63, %51, %cst_25 {dimension_numbers = #tpu.dot_dimension_numbers<[2], [1], [1], [2], [0, 0, 0, 1, 1, 2], [0], [0]>} : vector<2x8x8xf32>, vector<2x8x8xf32>, vector<2x8x8xf32> -> vector<2x8x8xf32>
    "tpu.trace_stop"() : () -> ()
    %65 = vector.extract_strided_slice %48 {offsets = [0, 0, 8], sizes = [2, 8, 8], strides = [1, 1, 1]} : vector<2x8x96xf32> to vector<2x8x8xf32>
    %66 = vector.extract_strided_slice %48 {offsets = [0, 0, 40], sizes = [2, 8, 8], strides = [1, 1, 1]} : vector<2x8x96xf32> to vector<2x8x8xf32>
    %67 = vector.extract_strided_slice %48 {offsets = [0, 0, 72], sizes = [2, 8, 8], strides = [1, 1, 1]} : vector<2x8x96xf32> to vector<2x8x8xf32>
    "tpu.trace_start"() <{level = 10 : i32, message = "bqd,bkd->bqk"}> : () -> ()
    %cst_26 = arith.constant dense<0.000000e+00> : vector<2x8x8xf32>
    %68 = tpu.matmul %65, %66, %cst_26 {dimension_numbers = #tpu.dot_dimension_numbers<[2], [2], [1], [1], [0, 0, 0, 1, 1, 1], [0], [0]>} : vector<2x8x8xf32>, vector<2x8x8xf32>, vector<2x8x8xf32> -> vector<2x8x8xf32>
    "tpu.trace_stop"() : () -> ()
    %69 = arith.addf %68, %35 : vector<2x8x8xf32>
    %cst_27 = arith.constant dense<0xFF800000> : vector<2x8xf32>
    %70 = vector.multi_reduction <maximumf>, %69, %cst_27 [2] : vector<2x8x8xf32> to vector<2x8xf32>
    %71 = vector.shape_cast %70 : vector<2x8xf32> to vector<2x8x1xf32>
    %72 = vector.broadcast %71 : vector<2x8x1xf32> to vector<2x8x8xf32>
    %73 = arith.subf %69, %72 : vector<2x8x8xf32>
    %74 = math.exp %73 : vector<2x8x8xf32>
    %cst_28 = arith.constant dense<0.000000e+00> : vector<2x8xf32>
    %75 = vector.multi_reduction <add>, %74, %cst_28 [2] : vector<2x8x8xf32> to vector<2x8xf32>
    %76 = vector.shape_cast %75 : vector<2x8xf32> to vector<2x8x1xf32>
    %77 = tpu.reciprocal %76 {approx = true} : vector<2x8x1xf32> -> vector<2x8x1xf32>
    %78 = vector.broadcast %77 : vector<2x8x1xf32> to vector<2x8x8xf32>
    %79 = arith.mulf %74, %78 : vector<2x8x8xf32>
    "tpu.trace_start"() <{level = 10 : i32, message = "bqk,bkd->bqd"}> : () -> ()
    %cst_29 = arith.constant dense<0.000000e+00> : vector<2x8x8xf32>
    %80 = tpu.matmul %79, %67, %cst_29 {dimension_numbers = #tpu.dot_dimension_numbers<[2], [1], [1], [2], [0, 0, 0, 1, 1, 2], [0], [0]>} : vector<2x8x8xf32>, vector<2x8x8xf32>, vector<2x8x8xf32> -> vector<2x8x8xf32>
    "tpu.trace_stop"() : () -> ()
    %81 = vector.extract_strided_slice %48 {offsets = [0, 0, 16], sizes = [2, 8, 8], strides = [1, 1, 1]} : vector<2x8x96xf32> to vector<2x8x8xf32>
    %82 = vector.extract_strided_slice %48 {offsets = [0, 0, 48], sizes = [2, 8, 8], strides = [1, 1, 1]} : vector<2x8x96xf32> to vector<2x8x8xf32>
    %83 = vector.extract_strided_slice %48 {offsets = [0, 0, 80], sizes = [2, 8, 8], strides = [1, 1, 1]} : vector<2x8x96xf32> to vector<2x8x8xf32>
    "tpu.trace_start"() <{level = 10 : i32, message = "bqd,bkd->bqk"}> : () -> ()
    %cst_30 = arith.constant dense<0.000000e+00> : vector<2x8x8xf32>
    %84 = tpu.matmul %81, %82, %cst_30 {dimension_numbers = #tpu.dot_dimension_numbers<[2], [2], [1], [1], [0, 0, 0, 1, 1, 1], [0], [0]>} : vector<2x8x8xf32>, vector<2x8x8xf32>, vector<2x8x8xf32> -> vector<2x8x8xf32>
    "tpu.trace_stop"() : () -> ()
    %85 = arith.addf %84, %35 : vector<2x8x8xf32>
    %cst_31 = arith.constant dense<0xFF800000> : vector<2x8xf32>
    %86 = vector.multi_reduction <maximumf>, %85, %cst_31 [2] : vector<2x8x8xf32> to vector<2x8xf32>
    %87 = vector.shape_cast %86 : vector<2x8xf32> to vector<2x8x1xf32>
    %88 = vector.broadcast %87 : vector<2x8x1xf32> to vector<2x8x8xf32>
    %89 = arith.subf %85, %88 : vector<2x8x8xf32>
    %90 = math.exp %89 : vector<2x8x8xf32>
    %cst_32 = arith.constant dense<0.000000e+00> : vector<2x8xf32>
    %91 = vector.multi_reduction <add>, %90, %cst_32 [2] : vector<2x8x8xf32> to vector<2x8xf32>
    %92 = vector.shape_cast %91 : vector<2x8xf32> to vector<2x8x1xf32>
    %93 = tpu.reciprocal %92 {approx = true} : vector<2x8x1xf32> -> vector<2x8x1xf32>
    %94 = vector.broadcast %93 : vector<2x8x1xf32> to vector<2x8x8xf32>
    %95 = arith.mulf %90, %94 : vector<2x8x8xf32>
    "tpu.trace_start"() <{level = 10 : i32, message = "bqk,bkd->bqd"}> : () -> ()
    %cst_33 = arith.constant dense<0.000000e+00> : vector<2x8x8xf32>
    %96 = tpu.matmul %95, %83, %cst_33 {dimension_numbers = #tpu.dot_dimension_numbers<[2], [1], [1], [2], [0, 0, 0, 1, 1, 2], [0], [0]>} : vector<2x8x8xf32>, vector<2x8x8xf32>, vector<2x8x8xf32> -> vector<2x8x8xf32>
    "tpu.trace_stop"() : () -> ()
    %97 = vector.extract_strided_slice %48 {offsets = [0, 0, 24], sizes = [2, 8, 8], strides = [1, 1, 1]} : vector<2x8x96xf32> to vector<2x8x8xf32>
    %98 = vector.extract_strided_slice %48 {offsets = [0, 0, 56], sizes = [2, 8, 8], strides = [1, 1, 1]} : vector<2x8x96xf32> to vector<2x8x8xf32>
    %99 = vector.extract_strided_slice %48 {offsets = [0, 0, 88], sizes = [2, 8, 8], strides = [1, 1, 1]} : vector<2x8x96xf32> to vector<2x8x8xf32>
    "tpu.trace_start"() <{level = 10 : i32, message = "bqd,bkd->bqk"}> : () -> ()
    %cst_34 = arith.constant dense<0.000000e+00> : vector<2x8x8xf32>
    %100 = tpu.matmul %97, %98, %cst_34 {dimension_numbers = #tpu.dot_dimension_numbers<[2], [2], [1], [1], [0, 0, 0, 1, 1, 1], [0], [0]>} : vector<2x8x8xf32>, vector<2x8x8xf32>, vector<2x8x8xf32> -> vector<2x8x8xf32>
    "tpu.trace_stop"() : () -> ()
    %101 = arith.addf %100, %35 : vector<2x8x8xf32>
    %cst_35 = arith.constant dense<0xFF800000> : vector<2x8xf32>
    %102 = vector.multi_reduction <maximumf>, %101, %cst_35 [2] : vector<2x8x8xf32> to vector<2x8xf32>
    %103 = vector.shape_cast %102 : vector<2x8xf32> to vector<2x8x1xf32>
    %104 = vector.broadcast %103 : vector<2x8x1xf32> to vector<2x8x8xf32>
    %105 = arith.subf %101, %104 : vector<2x8x8xf32>
    %106 = math.exp %105 : vector<2x8x8xf32>
    %cst_36 = arith.constant dense<0.000000e+00> : vector<2x8xf32>
    %107 = vector.multi_reduction <add>, %106, %cst_36 [2] : vector<2x8x8xf32> to vector<2x8xf32>
    %108 = vector.shape_cast %107 : vector<2x8xf32> to vector<2x8x1xf32>
    %109 = tpu.reciprocal %108 {approx = true} : vector<2x8x1xf32> -> vector<2x8x1xf32>
    %110 = vector.broadcast %109 : vector<2x8x1xf32> to vector<2x8x8xf32>
    %111 = arith.mulf %106, %110 : vector<2x8x8xf32>
    "tpu.trace_start"() <{level = 10 : i32, message = "bqk,bkd->bqd"}> : () -> ()
    %cst_37 = arith.constant dense<0.000000e+00> : vector<2x8x8xf32>
    %112 = tpu.matmul %111, %99, %cst_37 {dimension_numbers = #tpu.dot_dimension_numbers<[2], [1], [1], [2], [0, 0, 0, 1, 1, 2], [0], [0]>} : vector<2x8x8xf32>, vector<2x8x8xf32>, vector<2x8x8xf32> -> vector<2x8x8xf32>
    "tpu.trace_stop"() : () -> ()
    %113 = tpu.concatenate %64, %80, %96, %112 in 2 : vector<2x8x8xf32>, vector<2x8x8xf32>, vector<2x8x8xf32>, vector<2x8x8xf32> -> vector<2x8x32xf32>
    %114 = vector.extract_strided_slice %113 {offsets = [0, 0, 0], sizes = [1, 8, 32], strides = [1, 1, 1]} : vector<2x8x32xf32> to vector<1x8x32xf32>
    %115 = vector.shape_cast %114 : vector<1x8x32xf32> to vector<8x32xf32>
    %116 = vector.extract_strided_slice %113 {offsets = [1, 0, 0], sizes = [1, 8, 32], strides = [1, 1, 1]} : vector<2x8x32xf32> to vector<1x8x32xf32>
    %117 = vector.shape_cast %116 : vector<1x8x32xf32> to vector<8x32xf32>
    %118 = tpu.concatenate %115, %117 in 0 : vector<8x32xf32>, vector<8x32xf32> -> vector<16x32xf32>
    %c0_38 = arith.constant 0 : index
    %c0_39 = arith.constant 0 : index
    %c0_40 = arith.constant 0 : index
    %119 = vector.load %arg6[%c0_38, %c0_39, %c0_40] : memref<2x32x32xbf16, #tpu.memory_space<vmem>>, vector<1x32x32xbf16>
    %120 = vector.shape_cast %119 : vector<1x32x32xbf16> to vector<32x32xbf16>
    %c0_41 = arith.constant 0 : index
    %c0_42 = arith.constant 0 : index
    %c0_43 = arith.constant 0 : index
    %121 = vector.load %arg7[%c0_41, %c0_42, %c0_43] : memref<2x1x32xf32, #tpu.memory_space<vmem>>, vector<1x1x32xf32>
    %122 = vector.shape_cast %121 : vector<1x1x32xf32> to vector<1x32xf32>
    %123 = arith.truncf %118 : vector<16x32xf32> to vector<16x32xbf16>
    %cst_44 = arith.constant dense<0.000000e+00> : vector<16x32xf32>
    %124 = tpu.matmul %123, %120, %cst_44 {dimension_numbers = #tpu.dot_dimension_numbers<[1], [0], [0], [1], [0, 0, 1, 1], [], []>} : vector<16x32xbf16>, vector<32x32xbf16>, vector<16x32xf32> -> vector<16x32xf32>
    %125 = vector.broadcast %122 : vector<1x32xf32> to vector<16x32xf32>
    %126 = arith.addf %124, %125 : vector<16x32xf32>
    %127 = arith.addf %126, %22 : vector<16x32xf32>
    %c0_45 = arith.constant 0 : index
    %c0_46 = arith.constant 0 : index
    %c0_47 = arith.constant 0 : index
    %128 = vector.load %arg8[%c0_45, %c0_46, %c0_47] : memref<2x1x32xf32, #tpu.memory_space<vmem>>, vector<1x1x32xf32>
    %129 = vector.shape_cast %128 : vector<1x1x32xf32> to vector<1x32xf32>
    %c0_48 = arith.constant 0 : index
    %c0_49 = arith.constant 0 : index
    %c0_50 = arith.constant 0 : index
    %130 = vector.load %arg9[%c0_48, %c0_49, %c0_50] : memref<2x1x32xf32, #tpu.memory_space<vmem>>, vector<1x1x32xf32>
    %131 = vector.shape_cast %130 : vector<1x1x32xf32> to vector<1x32xf32>
    %cst_51 = arith.constant dense<0.000000e+00> : vector<16xf32>
    %132 = vector.multi_reduction <add>, %127, %cst_51 [1] : vector<16x32xf32> to vector<16xf32>
    %133 = vector.shape_cast %132 : vector<16xf32> to vector<16x1xf32>
    %cst_52 = arith.constant 3.200000e+01 : f32
    %134 = vector.broadcast %cst_52 : f32 to vector<16x1xf32>
    %135 = arith.divf %133, %134 : vector<16x1xf32>
    %136 = vector.broadcast %135 : vector<16x1xf32> to vector<16x32xf32>
    %137 = arith.subf %127, %136 : vector<16x32xf32>
    %138 = arith.mulf %137, %137 : vector<16x32xf32>
    %cst_53 = arith.constant dense<0.000000e+00> : vector<16xf32>
    %139 = vector.multi_reduction <add>, %138, %cst_53 [1] : vector<16x32xf32> to vector<16xf32>
    %140 = vector.shape_cast %139 : vector<16xf32> to vector<16x1xf32>
    %cst_54 = arith.constant 3.200000e+01 : f32
    %141 = vector.broadcast %cst_54 : f32 to vector<16x1xf32>
    %142 = arith.divf %140, %141 : vector<16x1xf32>
    %cst_55 = arith.constant 9.99999996E-13 : f32
    %143 = vector.broadcast %cst_55 : f32 to vector<16x1xf32>
    %144 = arith.addf %142, %143 : vector<16x1xf32>
    %145 = math.rsqrt %144 : vector<16x1xf32>
    %146 = vector.broadcast %145 : vector<16x1xf32> to vector<16x32xf32>
    %147 = arith.mulf %137, %146 : vector<16x32xf32>
    %148 = vector.broadcast %129 : vector<1x32xf32> to vector<16x32xf32>
    %149 = arith.mulf %147, %148 : vector<16x32xf32>
    %150 = vector.broadcast %131 : vector<1x32xf32> to vector<16x32xf32>
    %151 = arith.addf %149, %150 : vector<16x32xf32>
    %c0_56 = arith.constant 0 : index
    %c0_57 = arith.constant 0 : index
    %c0_58 = arith.constant 0 : index
    %152 = vector.load %arg10[%c0_56, %c0_57, %c0_58] : memref<2x32x64xbf16, #tpu.memory_space<vmem>>, vector<1x32x64xbf16>
    %153 = vector.shape_cast %152 : vector<1x32x64xbf16> to vector<32x64xbf16>
    %c0_59 = arith.constant 0 : index
    %c0_60 = arith.constant 0 : index
    %c0_61 = arith.constant 0 : index
    %154 = vector.load %arg11[%c0_59, %c0_60, %c0_61] : memref<2x1x64xf32, #tpu.memory_space<vmem>>, vector<1x1x64xf32>
    %155 = vector.shape_cast %154 : vector<1x1x64xf32> to vector<1x64xf32>
    %156 = arith.truncf %151 : vector<16x32xf32> to vector<16x32xbf16>
    %cst_62 = arith.constant dense<0.000000e+00> : vector<16x64xf32>
    %157 = tpu.matmul %156, %153, %cst_62 {dimension_numbers = #tpu.dot_dimension_numbers<[1], [0], [0], [1], [0, 0, 1, 1], [], []>} : vector<16x32xbf16>, vector<32x64xbf16>, vector<16x64xf32> -> vector<16x64xf32>
    %158 = vector.broadcast %155 : vector<1x64xf32> to vector<16x64xf32>
    %159 = arith.addf %157, %158 : vector<16x64xf32>
    %cst_63 = arith.constant 5.000000e-01 : f32
    %160 = vector.broadcast %cst_63 : f32 to vector<16x64xf32>
    %161 = arith.mulf %160, %159 : vector<16x64xf32>
    %cst_64 = arith.constant 2.000000e+00 : f32
    %162 = math.sqrt %cst_64 : f32
    %163 = vector.broadcast %162 : f32 to vector<16x64xf32>
    %164 = arith.divf %159, %163 : vector<16x64xf32>
    %165 = math.erf %164 : vector<16x64xf32>
    %cst_65 = arith.constant 1.000000e+00 : f32
    %166 = vector.broadcast %cst_65 : f32 to vector<16x64xf32>
    %167 = arith.addf %166, %165 : vector<16x64xf32>
    %168 = arith.mulf %161, %167 : vector<16x64xf32>
    %c0_66 = arith.constant 0 : index
    %c0_67 = arith.constant 0 : index
    %c0_68 = arith.constant 0 : index
    %169 = vector.load %arg12[%c0_66, %c0_67, %c0_68] : memref<2x64x32xbf16, #tpu.memory_space<vmem>>, vector<1x64x32xbf16>
    %170 = vector.shape_cast %169 : vector<1x64x32xbf16> to vector<64x32xbf16>
    %c0_69 = arith.constant 0 : index
    %c0_70 = arith.constant 0 : index
    %c0_71 = arith.constant 0 : index
    %171 = vector.load %arg13[%c0_69, %c0_70, %c0_71] : memref<2x1x32xf32, #tpu.memory_space<vmem>>, vector<1x1x32xf32>
    %172 = vector.shape_cast %171 : vector<1x1x32xf32> to vector<1x32xf32>
    %173 = arith.truncf %168 : vector<16x64xf32> to vector<16x64xbf16>
    %cst_72 = arith.constant dense<0.000000e+00> : vector<16x32xf32>
    %174 = tpu.matmul %173, %170, %cst_72 {dimension_numbers = #tpu.dot_dimension_numbers<[1], [0], [0], [1], [0, 0, 1, 1], [], []>} : vector<16x64xbf16>, vector<64x32xbf16>, vector<16x32xf32> -> vector<16x32xf32>
    %175 = vector.broadcast %172 : vector<1x32xf32> to vector<16x32xf32>
    %176 = arith.addf %174, %175 : vector<16x32xf32>
    %177 = arith.addf %176, %151 : vector<16x32xf32>
    %c0_73 = arith.constant 0 : index
    %c0_74 = arith.constant 0 : index
    %c0_75 = arith.constant 0 : index
    %178 = vector.load %arg14[%c0_73, %c0_74, %c0_75] : memref<2x1x32xf32, #tpu.memory_space<vmem>>, vector<1x1x32xf32>
    %179 = vector.shape_cast %178 : vector<1x1x32xf32> to vector<1x32xf32>
    %c0_76 = arith.constant 0 : index
    %c0_77 = arith.constant 0 : index
    %c0_78 = arith.constant 0 : index
    %180 = vector.load %arg15[%c0_76, %c0_77, %c0_78] : memref<2x1x32xf32, #tpu.memory_space<vmem>>, vector<1x1x32xf32>
    %181 = vector.shape_cast %180 : vector<1x1x32xf32> to vector<1x32xf32>
    %cst_79 = arith.constant dense<0.000000e+00> : vector<16xf32>
    %182 = vector.multi_reduction <add>, %177, %cst_79 [1] : vector<16x32xf32> to vector<16xf32>
    %183 = vector.shape_cast %182 : vector<16xf32> to vector<16x1xf32>
    %cst_80 = arith.constant 3.200000e+01 : f32
    %184 = vector.broadcast %cst_80 : f32 to vector<16x1xf32>
    %185 = arith.divf %183, %184 : vector<16x1xf32>
    %186 = vector.broadcast %185 : vector<16x1xf32> to vector<16x32xf32>
    %187 = arith.subf %177, %186 : vector<16x32xf32>
    %188 = arith.mulf %187, %187 : vector<16x32xf32>
    %cst_81 = arith.constant dense<0.000000e+00> : vector<16xf32>
    %189 = vector.multi_reduction <add>, %188, %cst_81 [1] : vector<16x32xf32> to vector<16xf32>
    %190 = vector.shape_cast %189 : vector<16xf32> to vector<16x1xf32>
    %cst_82 = arith.constant 3.200000e+01 : f32
    %191 = vector.broadcast %cst_82 : f32 to vector<16x1xf32>
    %192 = arith.divf %190, %191 : vector<16x1xf32>
    %cst_83 = arith.constant 9.99999996E-13 : f32
    %193 = vector.broadcast %cst_83 : f32 to vector<16x1xf32>
    %194 = arith.addf %192, %193 : vector<16x1xf32>
    %195 = math.rsqrt %194 : vector<16x1xf32>
    %196 = vector.broadcast %195 : vector<16x1xf32> to vector<16x32xf32>
    %197 = arith.mulf %187, %196 : vector<16x32xf32>
    %198 = vector.broadcast %179 : vector<1x32xf32> to vector<16x32xf32>
    %199 = arith.mulf %197, %198 : vector<16x32xf32>
    %200 = vector.broadcast %181 : vector<1x32xf32> to vector<16x32xf32>
    %201 = arith.addf %199, %200 : vector<16x32xf32>
    %c1 = arith.constant 1 : index
    %c0_84 = arith.constant 0 : index
    %c0_85 = arith.constant 0 : index
    %202 = vector.load %arg4[%c1, %c0_84, %c0_85] : memref<2x32x96xbf16, #tpu.memory_space<vmem>>, vector<1x32x96xbf16>
    %203 = vector.shape_cast %202 : vector<1x32x96xbf16> to vector<32x96xbf16>
    %c1_86 = arith.constant 1 : index
    %c0_87 = arith.constant 0 : index
    %c0_88 = arith.constant 0 : index
    %204 = vector.load %arg5[%c1_86, %c0_87, %c0_88] : memref<2x1x96xf32, #tpu.memory_space<vmem>>, vector<1x1x96xf32>
    %205 = vector.shape_cast %204 : vector<1x1x96xf32> to vector<1x96xf32>
    %206 = arith.truncf %201 : vector<16x32xf32> to vector<16x32xbf16>
    %cst_89 = arith.constant dense<0.000000e+00> : vector<16x96xf32>
    %207 = tpu.matmul %206, %203, %cst_89 {dimension_numbers = #tpu.dot_dimension_numbers<[1], [0], [0], [1], [0, 0, 1, 1], [], []>} : vector<16x32xbf16>, vector<32x96xbf16>, vector<16x96xf32> -> vector<16x96xf32>
    %208 = vector.broadcast %205 : vector<1x96xf32> to vector<16x96xf32>
    %209 = arith.addf %207, %208 : vector<16x96xf32>
    %210 = vector.extract_strided_slice %209 {offsets = [0, 0], sizes = [8, 96], strides = [1, 1]} : vector<16x96xf32> to vector<8x96xf32>
    %211 = vector.extract_strided_slice %209 {offsets = [8, 0], sizes = [8, 96], strides = [1, 1]} : vector<16x96xf32> to vector<8x96xf32>
    %212 = vector.shape_cast %210 : vector<8x96xf32> to vector<1x8x96xf32>
    %213 = vector.shape_cast %211 : vector<8x96xf32> to vector<1x8x96xf32>
    %214 = tpu.concatenate %212, %213 in 0 : vector<1x8x96xf32>, vector<1x8x96xf32> -> vector<2x8x96xf32>
    %215 = vector.extract_strided_slice %214 {offsets = [0, 0, 0], sizes = [2, 8, 8], strides = [1, 1, 1]} : vector<2x8x96xf32> to vector<2x8x8xf32>
    %216 = vector.extract_strided_slice %214 {offsets = [0, 0, 32], sizes = [2, 8, 8], strides = [1, 1, 1]} : vector<2x8x96xf32> to vector<2x8x8xf32>
    %217 = vector.extract_strided_slice %214 {offsets = [0, 0, 64], sizes = [2, 8, 8], strides = [1, 1, 1]} : vector<2x8x96xf32> to vector<2x8x8xf32>
    "tpu.trace_start"() <{level = 10 : i32, message = "bqd,bkd->bqk"}> : () -> ()
    %cst_90 = arith.constant dense<0.000000e+00> : vector<2x8x8xf32>
    %218 = tpu.matmul %215, %216, %cst_90 {dimension_numbers = #tpu.dot_dimension_numbers<[2], [2], [1], [1], [0, 0, 0, 1, 1, 1], [0], [0]>} : vector<2x8x8xf32>, vector<2x8x8xf32>, vector<2x8x8xf32> -> vector<2x8x8xf32>
    "tpu.trace_stop"() : () -> ()
    %219 = arith.addf %218, %35 : vector<2x8x8xf32>
    %cst_91 = arith.constant dense<0xFF800000> : vector<2x8xf32>
    %220 = vector.multi_reduction <maximumf>, %219, %cst_91 [2] : vector<2x8x8xf32> to vector<2x8xf32>
    %221 = vector.shape_cast %220 : vector<2x8xf32> to vector<2x8x1xf32>
    %222 = vector.broadcast %221 : vector<2x8x1xf32> to vector<2x8x8xf32>
    %223 = arith.subf %219, %222 : vector<2x8x8xf32>
    %224 = math.exp %223 : vector<2x8x8xf32>
    %cst_92 = arith.constant dense<0.000000e+00> : vector<2x8xf32>
    %225 = vector.multi_reduction <add>, %224, %cst_92 [2] : vector<2x8x8xf32> to vector<2x8xf32>
    %226 = vector.shape_cast %225 : vector<2x8xf32> to vector<2x8x1xf32>
    %227 = tpu.reciprocal %226 {approx = true} : vector<2x8x1xf32> -> vector<2x8x1xf32>
    %228 = vector.broadcast %227 : vector<2x8x1xf32> to vector<2x8x8xf32>
    %229 = arith.mulf %224, %228 : vector<2x8x8xf32>
    "tpu.trace_start"() <{level = 10 : i32, message = "bqk,bkd->bqd"}> : () -> ()
    %cst_93 = arith.constant dense<0.000000e+00> : vector<2x8x8xf32>
    %230 = tpu.matmul %229, %217, %cst_93 {dimension_numbers = #tpu.dot_dimension_numbers<[2], [1], [1], [2], [0, 0, 0, 1, 1, 2], [0], [0]>} : vector<2x8x8xf32>, vector<2x8x8xf32>, vector<2x8x8xf32> -> vector<2x8x8xf32>
    "tpu.trace_stop"() : () -> ()
    %231 = vector.extract_strided_slice %214 {offsets = [0, 0, 8], sizes = [2, 8, 8], strides = [1, 1, 1]} : vector<2x8x96xf32> to vector<2x8x8xf32>
    %232 = vector.extract_strided_slice %214 {offsets = [0, 0, 40], sizes = [2, 8, 8], strides = [1, 1, 1]} : vector<2x8x96xf32> to vector<2x8x8xf32>
    %233 = vector.extract_strided_slice %214 {offsets = [0, 0, 72], sizes = [2, 8, 8], strides = [1, 1, 1]} : vector<2x8x96xf32> to vector<2x8x8xf32>
    "tpu.trace_start"() <{level = 10 : i32, message = "bqd,bkd->bqk"}> : () -> ()
    %cst_94 = arith.constant dense<0.000000e+00> : vector<2x8x8xf32>
    %234 = tpu.matmul %231, %232, %cst_94 {dimension_numbers = #tpu.dot_dimension_numbers<[2], [2], [1], [1], [0, 0, 0, 1, 1, 1], [0], [0]>} : vector<2x8x8xf32>, vector<2x8x8xf32>, vector<2x8x8xf32> -> vector<2x8x8xf32>
    "tpu.trace_stop"() : () -> ()
    %235 = arith.addf %234, %35 : vector<2x8x8xf32>
    %cst_95 = arith.constant dense<0xFF800000> : vector<2x8xf32>
    %236 = vector.multi_reduction <maximumf>, %235, %cst_95 [2] : vector<2x8x8xf32> to vector<2x8xf32>
    %237 = vector.shape_cast %236 : vector<2x8xf32> to vector<2x8x1xf32>
    %238 = vector.broadcast %237 : vector<2x8x1xf32> to vector<2x8x8xf32>
    %239 = arith.subf %235, %238 : vector<2x8x8xf32>
    %240 = math.exp %239 : vector<2x8x8xf32>
    %cst_96 = arith.constant dense<0.000000e+00> : vector<2x8xf32>
    %241 = vector.multi_reduction <add>, %240, %cst_96 [2] : vector<2x8x8xf32> to vector<2x8xf32>
    %242 = vector.shape_cast %241 : vector<2x8xf32> to vector<2x8x1xf32>
    %243 = tpu.reciprocal %242 {approx = true} : vector<2x8x1xf32> -> vector<2x8x1xf32>
    %244 = vector.broadcast %243 : vector<2x8x1xf32> to vector<2x8x8xf32>
    %245 = arith.mulf %240, %244 : vector<2x8x8xf32>
    "tpu.trace_start"() <{level = 10 : i32, message = "bqk,bkd->bqd"}> : () -> ()
    %cst_97 = arith.constant dense<0.000000e+00> : vector<2x8x8xf32>
    %246 = tpu.matmul %245, %233, %cst_97 {dimension_numbers = #tpu.dot_dimension_numbers<[2], [1], [1], [2], [0, 0, 0, 1, 1, 2], [0], [0]>} : vector<2x8x8xf32>, vector<2x8x8xf32>, vector<2x8x8xf32> -> vector<2x8x8xf32>
    "tpu.trace_stop"() : () -> ()
    %247 = vector.extract_strided_slice %214 {offsets = [0, 0, 16], sizes = [2, 8, 8], strides = [1, 1, 1]} : vector<2x8x96xf32> to vector<2x8x8xf32>
    %248 = vector.extract_strided_slice %214 {offsets = [0, 0, 48], sizes = [2, 8, 8], strides = [1, 1, 1]} : vector<2x8x96xf32> to vector<2x8x8xf32>
    %249 = vector.extract_strided_slice %214 {offsets = [0, 0, 80], sizes = [2, 8, 8], strides = [1, 1, 1]} : vector<2x8x96xf32> to vector<2x8x8xf32>
    "tpu.trace_start"() <{level = 10 : i32, message = "bqd,bkd->bqk"}> : () -> ()
    %cst_98 = arith.constant dense<0.000000e+00> : vector<2x8x8xf32>
    %250 = tpu.matmul %247, %248, %cst_98 {dimension_numbers = #tpu.dot_dimension_numbers<[2], [2], [1], [1], [0, 0, 0, 1, 1, 1], [0], [0]>} : vector<2x8x8xf32>, vector<2x8x8xf32>, vector<2x8x8xf32> -> vector<2x8x8xf32>
    "tpu.trace_stop"() : () -> ()
    %251 = arith.addf %250, %35 : vector<2x8x8xf32>
    %cst_99 = arith.constant dense<0xFF800000> : vector<2x8xf32>
    %252 = vector.multi_reduction <maximumf>, %251, %cst_99 [2] : vector<2x8x8xf32> to vector<2x8xf32>
    %253 = vector.shape_cast %252 : vector<2x8xf32> to vector<2x8x1xf32>
    %254 = vector.broadcast %253 : vector<2x8x1xf32> to vector<2x8x8xf32>
    %255 = arith.subf %251, %254 : vector<2x8x8xf32>
    %256 = math.exp %255 : vector<2x8x8xf32>
    %cst_100 = arith.constant dense<0.000000e+00> : vector<2x8xf32>
    %257 = vector.multi_reduction <add>, %256, %cst_100 [2] : vector<2x8x8xf32> to vector<2x8xf32>
    %258 = vector.shape_cast %257 : vector<2x8xf32> to vector<2x8x1xf32>
    %259 = tpu.reciprocal %258 {approx = true} : vector<2x8x1xf32> -> vector<2x8x1xf32>
    %260 = vector.broadcast %259 : vector<2x8x1xf32> to vector<2x8x8xf32>
    %261 = arith.mulf %256, %260 : vector<2x8x8xf32>
    "tpu.trace_start"() <{level = 10 : i32, message = "bqk,bkd->bqd"}> : () -> ()
    %cst_101 = arith.constant dense<0.000000e+00> : vector<2x8x8xf32>
    %262 = tpu.matmul %261, %249, %cst_101 {dimension_numbers = #tpu.dot_dimension_numbers<[2], [1], [1], [2], [0, 0, 0, 1, 1, 2], [0], [0]>} : vector<2x8x8xf32>, vector<2x8x8xf32>, vector<2x8x8xf32> -> vector<2x8x8xf32>
    "tpu.trace_stop"() : () -> ()
    %263 = vector.extract_strided_slice %214 {offsets = [0, 0, 24], sizes = [2, 8, 8], strides = [1, 1, 1]} : vector<2x8x96xf32> to vector<2x8x8xf32>
    %264 = vector.extract_strided_slice %214 {offsets = [0, 0, 56], sizes = [2, 8, 8], strides = [1, 1, 1]} : vector<2x8x96xf32> to vector<2x8x8xf32>
    %265 = vector.extract_strided_slice %214 {offsets = [0, 0, 88], sizes = [2, 8, 8], strides = [1, 1, 1]} : vector<2x8x96xf32> to vector<2x8x8xf32>
    "tpu.trace_start"() <{level = 10 : i32, message = "bqd,bkd->bqk"}> : () -> ()
    %cst_102 = arith.constant dense<0.000000e+00> : vector<2x8x8xf32>
    %266 = tpu.matmul %263, %264, %cst_102 {dimension_numbers = #tpu.dot_dimension_numbers<[2], [2], [1], [1], [0, 0, 0, 1, 1, 1], [0], [0]>} : vector<2x8x8xf32>, vector<2x8x8xf32>, vector<2x8x8xf32> -> vector<2x8x8xf32>
    "tpu.trace_stop"() : () -> ()
    %267 = arith.addf %266, %35 : vector<2x8x8xf32>
    %cst_103 = arith.constant dense<0xFF800000> : vector<2x8xf32>
    %268 = vector.multi_reduction <maximumf>, %267, %cst_103 [2] : vector<2x8x8xf32> to vector<2x8xf32>
    %269 = vector.shape_cast %268 : vector<2x8xf32> to vector<2x8x1xf32>
    %270 = vector.broadcast %269 : vector<2x8x1xf32> to vector<2x8x8xf32>
    %271 = arith.subf %267, %270 : vector<2x8x8xf32>
    %272 = math.exp %271 : vector<2x8x8xf32>
    %cst_104 = arith.constant dense<0.000000e+00> : vector<2x8xf32>
    %273 = vector.multi_reduction <add>, %272, %cst_104 [2] : vector<2x8x8xf32> to vector<2x8xf32>
    %274 = vector.shape_cast %273 : vector<2x8xf32> to vector<2x8x1xf32>
    %275 = tpu.reciprocal %274 {approx = true} : vector<2x8x1xf32> -> vector<2x8x1xf32>
    %276 = vector.broadcast %275 : vector<2x8x1xf32> to vector<2x8x8xf32>
    %277 = arith.mulf %272, %276 : vector<2x8x8xf32>
    "tpu.trace_start"() <{level = 10 : i32, message = "bqk,bkd->bqd"}> : () -> ()
    %cst_105 = arith.constant dense<0.000000e+00> : vector<2x8x8xf32>
    %278 = tpu.matmul %277, %265, %cst_105 {dimension_numbers = #tpu.dot_dimension_numbers<[2], [1], [1], [2], [0, 0, 0, 1, 1, 2], [0], [0]>} : vector<2x8x8xf32>, vector<2x8x8xf32>, vector<2x8x8xf32> -> vector<2x8x8xf32>
    "tpu.trace_stop"() : () -> ()
    %279 = tpu.concatenate %230, %246, %262, %278 in 2 : vector<2x8x8xf32>, vector<2x8x8xf32>, vector<2x8x8xf32>, vector<2x8x8xf32> -> vector<2x8x32xf32>
    %280 = vector.extract_strided_slice %279 {offsets = [0, 0, 0], sizes = [1, 8, 32], strides = [1, 1, 1]} : vector<2x8x32xf32> to vector<1x8x32xf32>
    %281 = vector.shape_cast %280 : vector<1x8x32xf32> to vector<8x32xf32>
    %282 = vector.extract_strided_slice %279 {offsets = [1, 0, 0], sizes = [1, 8, 32], strides = [1, 1, 1]} : vector<2x8x32xf32> to vector<1x8x32xf32>
    %283 = vector.shape_cast %282 : vector<1x8x32xf32> to vector<8x32xf32>
    %284 = tpu.concatenate %281, %283 in 0 : vector<8x32xf32>, vector<8x32xf32> -> vector<16x32xf32>
    %c1_106 = arith.constant 1 : index
    %c0_107 = arith.constant 0 : index
    %c0_108 = arith.constant 0 : index
    %285 = vector.load %arg6[%c1_106, %c0_107, %c0_108] : memref<2x32x32xbf16, #tpu.memory_space<vmem>>, vector<1x32x32xbf16>
    %286 = vector.shape_cast %285 : vector<1x32x32xbf16> to vector<32x32xbf16>
    %c1_109 = arith.constant 1 : index
    %c0_110 = arith.constant 0 : index
    %c0_111 = arith.constant 0 : index
    %287 = vector.load %arg7[%c1_109, %c0_110, %c0_111] : memref<2x1x32xf32, #tpu.memory_space<vmem>>, vector<1x1x32xf32>
    %288 = vector.shape_cast %287 : vector<1x1x32xf32> to vector<1x32xf32>
    %289 = arith.truncf %284 : vector<16x32xf32> to vector<16x32xbf16>
    %cst_112 = arith.constant dense<0.000000e+00> : vector<16x32xf32>
    %290 = tpu.matmul %289, %286, %cst_112 {dimension_numbers = #tpu.dot_dimension_numbers<[1], [0], [0], [1], [0, 0, 1, 1], [], []>} : vector<16x32xbf16>, vector<32x32xbf16>, vector<16x32xf32> -> vector<16x32xf32>
    %291 = vector.broadcast %288 : vector<1x32xf32> to vector<16x32xf32>
    %292 = arith.addf %290, %291 : vector<16x32xf32>
    %293 = arith.addf %292, %201 : vector<16x32xf32>
    %c1_113 = arith.constant 1 : index
    %c0_114 = arith.constant 0 : index
    %c0_115 = arith.constant 0 : index
    %294 = vector.load %arg8[%c1_113, %c0_114, %c0_115] : memref<2x1x32xf32, #tpu.memory_space<vmem>>, vector<1x1x32xf32>
    %295 = vector.shape_cast %294 : vector<1x1x32xf32> to vector<1x32xf32>
    %c1_116 = arith.constant 1 : index
    %c0_117 = arith.constant 0 : index
    %c0_118 = arith.constant 0 : index
    %296 = vector.load %arg9[%c1_116, %c0_117, %c0_118] : memref<2x1x32xf32, #tpu.memory_space<vmem>>, vector<1x1x32xf32>
    %297 = vector.shape_cast %296 : vector<1x1x32xf32> to vector<1x32xf32>
    %cst_119 = arith.constant dense<0.000000e+00> : vector<16xf32>
    %298 = vector.multi_reduction <add>, %293, %cst_119 [1] : vector<16x32xf32> to vector<16xf32>
    %299 = vector.shape_cast %298 : vector<16xf32> to vector<16x1xf32>
    %cst_120 = arith.constant 3.200000e+01 : f32
    %300 = vector.broadcast %cst_120 : f32 to vector<16x1xf32>
    %301 = arith.divf %299, %300 : vector<16x1xf32>
    %302 = vector.broadcast %301 : vector<16x1xf32> to vector<16x32xf32>
    %303 = arith.subf %293, %302 : vector<16x32xf32>
    %304 = arith.mulf %303, %303 : vector<16x32xf32>
    %cst_121 = arith.constant dense<0.000000e+00> : vector<16xf32>
    %305 = vector.multi_reduction <add>, %304, %cst_121 [1] : vector<16x32xf32> to vector<16xf32>
    %306 = vector.shape_cast %305 : vector<16xf32> to vector<16x1xf32>
    %cst_122 = arith.constant 3.200000e+01 : f32
    %307 = vector.broadcast %cst_122 : f32 to vector<16x1xf32>
    %308 = arith.divf %306, %307 : vector<16x1xf32>
    %cst_123 = arith.constant 9.99999996E-13 : f32
    %309 = vector.broadcast %cst_123 : f32 to vector<16x1xf32>
    %310 = arith.addf %308, %309 : vector<16x1xf32>
    %311 = math.rsqrt %310 : vector<16x1xf32>
    %312 = vector.broadcast %311 : vector<16x1xf32> to vector<16x32xf32>
    %313 = arith.mulf %303, %312 : vector<16x32xf32>
    %314 = vector.broadcast %295 : vector<1x32xf32> to vector<16x32xf32>
    %315 = arith.mulf %313, %314 : vector<16x32xf32>
    %316 = vector.broadcast %297 : vector<1x32xf32> to vector<16x32xf32>
    %317 = arith.addf %315, %316 : vector<16x32xf32>
    %c1_124 = arith.constant 1 : index
    %c0_125 = arith.constant 0 : index
    %c0_126 = arith.constant 0 : index
    %318 = vector.load %arg10[%c1_124, %c0_125, %c0_126] : memref<2x32x64xbf16, #tpu.memory_space<vmem>>, vector<1x32x64xbf16>
    %319 = vector.shape_cast %318 : vector<1x32x64xbf16> to vector<32x64xbf16>
    %c1_127 = arith.constant 1 : index
    %c0_128 = arith.constant 0 : index
    %c0_129 = arith.constant 0 : index
    %320 = vector.load %arg11[%c1_127, %c0_128, %c0_129] : memref<2x1x64xf32, #tpu.memory_space<vmem>>, vector<1x1x64xf32>
    %321 = vector.shape_cast %320 : vector<1x1x64xf32> to vector<1x64xf32>
    %322 = arith.truncf %317 : vector<16x32xf32> to vector<16x32xbf16>
    %cst_130 = arith.constant dense<0.000000e+00> : vector<16x64xf32>
    %323 = tpu.matmul %322, %319, %cst_130 {dimension_numbers = #tpu.dot_dimension_numbers<[1], [0], [0], [1], [0, 0, 1, 1], [], []>} : vector<16x32xbf16>, vector<32x64xbf16>, vector<16x64xf32> -> vector<16x64xf32>
    %324 = vector.broadcast %321 : vector<1x64xf32> to vector<16x64xf32>
    %325 = arith.addf %323, %324 : vector<16x64xf32>
    %cst_131 = arith.constant 5.000000e-01 : f32
    %326 = vector.broadcast %cst_131 : f32 to vector<16x64xf32>
    %327 = arith.mulf %326, %325 : vector<16x64xf32>
    %cst_132 = arith.constant 2.000000e+00 : f32
    %328 = math.sqrt %cst_132 : f32
    %329 = vector.broadcast %328 : f32 to vector<16x64xf32>
    %330 = arith.divf %325, %329 : vector<16x64xf32>
    %331 = math.erf %330 : vector<16x64xf32>
    %cst_133 = arith.constant 1.000000e+00 : f32
    %332 = vector.broadcast %cst_133 : f32 to vector<16x64xf32>
    %333 = arith.addf %332, %331 : vector<16x64xf32>
    %334 = arith.mulf %327, %333 : vector<16x64xf32>
    %c1_134 = arith.constant 1 : index
    %c0_135 = arith.constant 0 : index
    %c0_136 = arith.constant 0 : index
    %335 = vector.load %arg12[%c1_134, %c0_135, %c0_136] : memref<2x64x32xbf16, #tpu.memory_space<vmem>>, vector<1x64x32xbf16>
    %336 = vector.shape_cast %335 : vector<1x64x32xbf16> to vector<64x32xbf16>
    %c1_137 = arith.constant 1 : index
    %c0_138 = arith.constant 0 : index
    %c0_139 = arith.constant 0 : index
    %337 = vector.load %arg13[%c1_137, %c0_138, %c0_139] : memref<2x1x32xf32, #tpu.memory_space<vmem>>, vector<1x1x32xf32>
    %338 = vector.shape_cast %337 : vector<1x1x32xf32> to vector<1x32xf32>
    %339 = arith.truncf %334 : vector<16x64xf32> to vector<16x64xbf16>
    %cst_140 = arith.constant dense<0.000000e+00> : vector<16x32xf32>
    %340 = tpu.matmul %339, %336, %cst_140 {dimension_numbers = #tpu.dot_dimension_numbers<[1], [0], [0], [1], [0, 0, 1, 1], [], []>} : vector<16x64xbf16>, vector<64x32xbf16>, vector<16x32xf32> -> vector<16x32xf32>
    %341 = vector.broadcast %338 : vector<1x32xf32> to vector<16x32xf32>
    %342 = arith.addf %340, %341 : vector<16x32xf32>
    %343 = arith.addf %342, %317 : vector<16x32xf32>
    %c1_141 = arith.constant 1 : index
    %c0_142 = arith.constant 0 : index
    %c0_143 = arith.constant 0 : index
    %344 = vector.load %arg14[%c1_141, %c0_142, %c0_143] : memref<2x1x32xf32, #tpu.memory_space<vmem>>, vector<1x1x32xf32>
    %345 = vector.shape_cast %344 : vector<1x1x32xf32> to vector<1x32xf32>
    %c1_144 = arith.constant 1 : index
    %c0_145 = arith.constant 0 : index
    %c0_146 = arith.constant 0 : index
    %346 = vector.load %arg15[%c1_144, %c0_145, %c0_146] : memref<2x1x32xf32, #tpu.memory_space<vmem>>, vector<1x1x32xf32>
    %347 = vector.shape_cast %346 : vector<1x1x32xf32> to vector<1x32xf32>
    %cst_147 = arith.constant dense<0.000000e+00> : vector<16xf32>
    %348 = vector.multi_reduction <add>, %343, %cst_147 [1] : vector<16x32xf32> to vector<16xf32>
    %349 = vector.shape_cast %348 : vector<16xf32> to vector<16x1xf32>
    %cst_148 = arith.constant 3.200000e+01 : f32
    %350 = vector.broadcast %cst_148 : f32 to vector<16x1xf32>
    %351 = arith.divf %349, %350 : vector<16x1xf32>
    %352 = vector.broadcast %351 : vector<16x1xf32> to vector<16x32xf32>
    %353 = arith.subf %343, %352 : vector<16x32xf32>
    %354 = arith.mulf %353, %353 : vector<16x32xf32>
    %cst_149 = arith.constant dense<0.000000e+00> : vector<16xf32>
    %355 = vector.multi_reduction <add>, %354, %cst_149 [1] : vector<16x32xf32> to vector<16xf32>
    %356 = vector.shape_cast %355 : vector<16xf32> to vector<16x1xf32>
    %cst_150 = arith.constant 3.200000e+01 : f32
    %357 = vector.broadcast %cst_150 : f32 to vector<16x1xf32>
    %358 = arith.divf %356, %357 : vector<16x1xf32>
    %cst_151 = arith.constant 9.99999996E-13 : f32
    %359 = vector.broadcast %cst_151 : f32 to vector<16x1xf32>
    %360 = arith.addf %358, %359 : vector<16x1xf32>
    %361 = math.rsqrt %360 : vector<16x1xf32>
    %362 = vector.broadcast %361 : vector<16x1xf32> to vector<16x32xf32>
    %363 = arith.mulf %353, %362 : vector<16x32xf32>
    %364 = vector.broadcast %345 : vector<1x32xf32> to vector<16x32xf32>
    %365 = arith.mulf %363, %364 : vector<16x32xf32>
    %366 = vector.broadcast %347 : vector<1x32xf32> to vector<16x32xf32>
    %367 = arith.addf %365, %366 : vector<16x32xf32>
    %c0_152 = arith.constant 0 : index
    %c0_153 = arith.constant 0 : index
    %368 = vector.load %arg16[%c0_152, %c0_153] : memref<32x32xbf16, #tpu.memory_space<vmem>>, vector<32x32xbf16>
    %c0_154 = arith.constant 0 : index
    %c0_155 = arith.constant 0 : index
    %369 = vector.load %arg17[%c0_154, %c0_155] : memref<1x32xf32, #tpu.memory_space<vmem>>, vector<1x32xf32>
    %370 = arith.truncf %367 : vector<16x32xf32> to vector<16x32xbf16>
    %cst_156 = arith.constant dense<0.000000e+00> : vector<16x32xf32>
    %371 = tpu.matmul %370, %368, %cst_156 {dimension_numbers = #tpu.dot_dimension_numbers<[1], [0], [0], [1], [0, 0, 1, 1], [], []>} : vector<16x32xbf16>, vector<32x32xbf16>, vector<16x32xf32> -> vector<16x32xf32>
    %372 = vector.broadcast %369 : vector<1x32xf32> to vector<16x32xf32>
    %373 = arith.addf %371, %372 : vector<16x32xf32>
    %cst_157 = arith.constant 5.000000e-01 : f32
    %374 = vector.broadcast %cst_157 : f32 to vector<16x32xf32>
    %375 = arith.mulf %374, %373 : vector<16x32xf32>
    %cst_158 = arith.constant 2.000000e+00 : f32
    %376 = math.sqrt %cst_158 : f32
    %377 = vector.broadcast %376 : f32 to vector<16x32xf32>
    %378 = arith.divf %373, %377 : vector<16x32xf32>
    %379 = math.erf %378 : vector<16x32xf32>
    %cst_159 = arith.constant 1.000000e+00 : f32
    %380 = vector.broadcast %cst_159 : f32 to vector<16x32xf32>
    %381 = arith.addf %380, %379 : vector<16x32xf32>
    %382 = arith.mulf %375, %381 : vector<16x32xf32>
    %c0_160 = arith.constant 0 : index
    %c0_161 = arith.constant 0 : index
    %383 = vector.load %arg18[%c0_160, %c0_161] : memref<1x32xf32, #tpu.memory_space<vmem>>, vector<1x32xf32>
    %c0_162 = arith.constant 0 : index
    %c0_163 = arith.constant 0 : index
    %384 = vector.load %arg19[%c0_162, %c0_163] : memref<1x32xf32, #tpu.memory_space<vmem>>, vector<1x32xf32>
    %cst_164 = arith.constant dense<0.000000e+00> : vector<16xf32>
    %385 = vector.multi_reduction <add>, %382, %cst_164 [1] : vector<16x32xf32> to vector<16xf32>
    %386 = vector.shape_cast %385 : vector<16xf32> to vector<16x1xf32>
    %cst_165 = arith.constant 3.200000e+01 : f32
    %387 = vector.broadcast %cst_165 : f32 to vector<16x1xf32>
    %388 = arith.divf %386, %387 : vector<16x1xf32>
    %389 = vector.broadcast %388 : vector<16x1xf32> to vector<16x32xf32>
    %390 = arith.subf %382, %389 : vector<16x32xf32>
    %391 = arith.mulf %390, %390 : vector<16x32xf32>
    %cst_166 = arith.constant dense<0.000000e+00> : vector<16xf32>
    %392 = vector.multi_reduction <add>, %391, %cst_166 [1] : vector<16x32xf32> to vector<16xf32>
    %393 = vector.shape_cast %392 : vector<16xf32> to vector<16x1xf32>
    %cst_167 = arith.constant 3.200000e+01 : f32
    %394 = vector.broadcast %cst_167 : f32 to vector<16x1xf32>
    %395 = arith.divf %393, %394 : vector<16x1xf32>
    %cst_168 = arith.constant 9.99999996E-13 : f32
    %396 = vector.broadcast %cst_168 : f32 to vector<16x1xf32>
    %397 = arith.addf %395, %396 : vector<16x1xf32>
    %398 = math.rsqrt %397 : vector<16x1xf32>
    %399 = vector.broadcast %398 : vector<16x1xf32> to vector<16x32xf32>
    %400 = arith.mulf %390, %399 : vector<16x32xf32>
    %401 = vector.broadcast %383 : vector<1x32xf32> to vector<16x32xf32>
    %402 = arith.mulf %400, %401 : vector<16x32xf32>
    %403 = vector.broadcast %384 : vector<1x32xf32> to vector<16x32xf32>
    %404 = arith.addf %402, %403 : vector<16x32xf32>
    %c0_169 = arith.constant 0 : index
    %c0_170 = arith.constant 0 : index
    %405 = vector.load %arg20[%c0_169, %c0_170] : memref<32x128xbf16, #tpu.memory_space<vmem>>, vector<32x128xbf16>
    %c0_171 = arith.constant 0 : index
    %c0_172 = arith.constant 0 : index
    %406 = vector.load %arg21[%c0_171, %c0_172] : memref<1x128xf32, #tpu.memory_space<vmem>>, vector<1x128xf32>
    %407 = arith.truncf %404 : vector<16x32xf32> to vector<16x32xbf16>
    %cst_173 = arith.constant dense<0.000000e+00> : vector<16x128xf32>
    %408 = tpu.matmul %407, %405, %cst_173 {dimension_numbers = #tpu.dot_dimension_numbers<[1], [0], [0], [1], [0, 0, 1, 1], [], []>} : vector<16x32xbf16>, vector<32x128xbf16>, vector<16x128xf32> -> vector<16x128xf32>
    %409 = vector.broadcast %406 : vector<1x128xf32> to vector<16x128xf32>
    %410 = arith.addf %408, %409 : vector<16x128xf32>
    %c0_174 = arith.constant 0 : index
    %c0_175 = arith.constant 0 : index
    %411 = vector.load %arg22[%c0_174, %c0_175] : memref<16x128xf32, #tpu.memory_space<vmem>>, vector<16x128xf32>
    tpu.vector_store %arg22[%c0_174, %c0_175], %410 {strides = array<i32>} : memref<16x128xf32, #tpu.memory_space<vmem>>, vector<16x128xf32>,
    return
  }
}

</mosaic_0001>

<llo_original>
// kernel: bert_seq_forward.1
$region0: #{bert_seq_forward.1}
  #allocation0 [shape = 'u32[]', space=smem, size = 0x4, offset = 0x4, fixed_abs, tag = 'smem constant byte address 0x4 - core index']
  #allocation1 [shape = 'u32[144,128]{1,0:T(1,128)}', space=vmem, size = 0x12000, scoped, tag = 'internal scratch']
  %s0 = inlined_call_operand.vmem [shape: f32[16,32], index: 0, kind: input, shape index: {}]
  %s1 = inlined_call_operand.vmem [shape: f32[2,1,8], index: 1, kind: input, shape index: {}]
  %s2 = inlined_call_operand.vmem [shape: f32[1,32], index: 2, kind: input, shape index: {}]
  %s3 = inlined_call_operand.vmem [shape: f32[1,32], index: 3, kind: input, shape index: {}]
  %s4 = inlined_call_operand.vmem [shape: bf16[2,32,96], index: 4, kind: input, shape index: {}]
  %s5 = inlined_call_operand.vmem [shape: f32[2,1,96], index: 5, kind: input, shape index: {}]
  %s6 = inlined_call_operand.vmem [shape: bf16[2,32,32], index: 6, kind: input, shape index: {}]
  %s7 = inlined_call_operand.vmem [shape: f32[2,1,32], index: 7, kind: input, shape index: {}]
  %s8 = inlined_call_operand.vmem [shape: f32[2,1,32], index: 8, kind: input, shape index: {}]
  %s9 = inlined_call_operand.vmem [shape: f32[2,1,32], index: 9, kind: input, shape index: {}]
  %s10 = inlined_call_operand.vmem [shape: bf16[2,32,64], index: 10, kind: input, shape index: {}]
  %s11 = inlined_call_operand.vmem [shape: f32[2,1,64], index: 11, kind: input, shape index: {}]
  %s12 = inlined_call_operand.vmem [shape: bf16[2,64,32], index: 12, kind: input, shape index: {}]
  %s13 = inlined_call_operand.vmem [shape: f32[2,1,32], index: 13, kind: input, shape index: {}]
  %s14 = inlined_call_operand.vmem [shape: f32[2,1,32], index: 14, kind: input, shape index: {}]
  %s15 = inlined_call_operand.vmem [shape: f32[2,1,32], index: 15, kind: input, shape index: {}]
  %s16 = inlined_call_operand.vmem [shape: bf16[32,32], index: 16, kind: input, shape index: {}]
  %s17 = inlined_call_operand.vmem [shape: f32[1,32], index: 17, kind: input, shape index: {}]
  %s18 = inlined_call_operand.vmem [shape: f32[1,32], index: 18, kind: input, shape index: {}]
  %s19 = inlined_call_operand.vmem [shape: f32[1,32], index: 19, kind: input, shape index: {}]
  %s20 = inlined_call_operand.vmem [shape: bf16[32,128], index: 20, kind: input, shape index: {}]
  %s21 = inlined_call_operand.vmem [shape: f32[1,128], index: 21, kind: input, shape index: {}]
  %s22 = inlined_call_operand.hbm [shape: f32[16,128], index: 22, kind: output, shape index: {}]
  %s23 = sld [smem:[#allocation0]]
  $region98: #{bert_seq_forward.1} parent=0
    _
  %s25 = ssub.s32 1, %s23
  %s26 = scalar_select 0, %s25, %s23
  $region1: #{bert_seq_forward.1} parent=0
    #allocation2 [shape = 'u8[8192]{0}', space=vmem, size = 0x2000, scoped, tag = 'output window, operand 0, single buffered']
    #allocation3 [shape = 's32[1]{0}', space=sflag, size = 0x4, scoped, tag = 'scoped memory for bert_seq_forward.1']
    %27 = vsyncpa [#allocation3], 0
    // Predicated region
    $region2: #{bert_seq_forward.1} parent=1 // pred_check
      _
    $region3: #{bert_seq_forward.1} parent=1 // pred_check_branch
      %29 = sbr.rel (0) target = $region5
    $region4: #{bert_seq_forward.1} parent=1 // pred_region
      _
    $region5: #{bert_seq_forward.1} parent=1 // pred_fallthru
      _
    // Predicated region
    $region6: #{bert_seq_forward.1} parent=1 // pred_check
      _
    $region7: #{bert_seq_forward.1} parent=1 // pred_check_branch
      %31 = sbr.rel (0) target = $region9
    $region8: #{bert_seq_forward.1} parent=1 // pred_region
      _
    $region9: #{bert_seq_forward.1} parent=1 // pred_fallthru
      _
    // Predicated region
    $region10: #{bert_seq_forward.1} parent=1 // pred_check
      _
    $region11: #{bert_seq_forward.1} parent=1 // pred_check_branch
      %33 = sbr.rel (0) target = $region13
    $region12: #{bert_seq_forward.1} parent=1 // pred_region
      _
    $region13: #{bert_seq_forward.1} parent=1 // pred_fallthru
      _
    // Predicated region
    $region14: #{bert_seq_forward.1} parent=1 // pred_check
      _
    $region15: #{bert_seq_forward.1} parent=1 // pred_check_branch
      %35 = sbr.rel (0) target = $region17
    $region16: #{bert_seq_forward.1} parent=1 // pred_region
      _
    $region17: #{bert_seq_forward.1} parent=1 // pred_fallthru
      _
    // Predicated region
    $region18: #{bert_seq_forward.1} parent=1 // pred_check
      _
    $region19: #{bert_seq_forward.1} parent=1 // pred_check_branch
      %37 = sbr.rel (0) target = $region21
    $region20: #{bert_seq_forward.1} parent=1 // pred_region
      _
    $region21: #{bert_seq_forward.1} parent=1 // pred_fallthru
      _
    // Predicated region
    $region22: #{bert_seq_forward.1} parent=1 // pred_check
      _
    $region23: #{bert_seq_forward.1} parent=1 // pred_check_branch
      %39 = sbr.rel (0) target = $region25
    $region24: #{bert_seq_forward.1} parent=1 // pred_region
      _
    $region25: #{bert_seq_forward.1} parent=1 // pred_fallthru
      _
    // Predicated region
    $region26: #{bert_seq_forward.1} parent=1 // pred_check
      _
    $region27: #{bert_seq_forward.1} parent=1 // pred_check_branch
      %41 = sbr.rel (0) target = $region29
    $region28: #{bert_seq_forward.1} parent=1 // pred_region
      _
    $region29: #{bert_seq_forward.1} parent=1 // pred_fallthru
      _
    // Predicated region
    $region30: #{bert_seq_forward.1} parent=1 // pred_check
      _
    $region31: #{bert_seq_forward.1} parent=1 // pred_check_branch
      %43 = sbr.rel (0) target = $region33
    $region32: #{bert_seq_forward.1} parent=1 // pred_region
      _
    $region33: #{bert_seq_forward.1} parent=1 // pred_fallthru
      _
    // Predicated region
    $region34: #{bert_seq_forward.1} parent=1 // pred_check
      _
    $region35: #{bert_seq_forward.1} parent=1 // pred_check_branch
      %45 = sbr.rel (0) target = $region37
    $region36: #{bert_seq_forward.1} parent=1 // pred_region
      _
    $region37: #{bert_seq_forward.1} parent=1 // pred_fallthru
      _
    // Predicated region
    $region38: #{bert_seq_forward.1} parent=1 // pred_check
      _
    $region39: #{bert_seq_forward.1} parent=1 // pred_check_branch
      %47 = sbr.rel (0) target = $region41
    $region40: #{bert_seq_forward.1} parent=1 // pred_region
      _
    $region41: #{bert_seq_forward.1} parent=1 // pred_fallthru
      _
    // Predicated region
    $region42: #{bert_seq_forward.1} parent=1 // pred_check
      _
    $region43: #{bert_seq_forward.1} parent=1 // pred_check_branch
      %49 = sbr.rel (0) target = $region45
    $region44: #{bert_seq_forward.1} parent=1 // pred_region
      _
    $region45: #{bert_seq_forward.1} parent=1 // pred_fallthru
      _
    // Predicated region
    $region46: #{bert_seq_forward.1} parent=1 // pred_check
      _
    $region47: #{bert_seq_forward.1} parent=1 // pred_check_branch
      %51 = sbr.rel (0) target = $region49
    $region48: #{bert_seq_forward.1} parent=1 // pred_region
      _
    $region49: #{bert_seq_forward.1} parent=1 // pred_fallthru
      _
    // Predicated region
    $region50: #{bert_seq_forward.1} parent=1 // pred_check
      _
    $region51: #{bert_seq_forward.1} parent=1 // pred_check_branch
      %53 = sbr.rel (0) target = $region53
    $region52: #{bert_seq_forward.1} parent=1 // pred_region
      _
    $region53: #{bert_seq_forward.1} parent=1 // pred_fallthru
      _
    // Predicated region
    $region54: #{bert_seq_forward.1} parent=1 // pred_check
      _
    $region55: #{bert_seq_forward.1} parent=1 // pred_check_branch
      %55 = sbr.rel (0) target = $region57
    $region56: #{bert_seq_forward.1} parent=1 // pred_region
      _
    $region57: #{bert_seq_forward.1} parent=1 // pred_fallthru
      _
    // Predicated region
    $region58: #{bert_seq_forward.1} parent=1 // pred_check
      _
    $region59: #{bert_seq_forward.1} parent=1 // pred_check_branch
      %57 = sbr.rel (0) target = $region61
    $region60: #{bert_seq_forward.1} parent=1 // pred_region
      _
    $region61: #{bert_seq_forward.1} parent=1 // pred_fallthru
      _
    // Predicated region
    $region62: #{bert_seq_forward.1} parent=1 // pred_check
      _
    $region63: #{bert_seq_forward.1} parent=1 // pred_check_branch
      %59 = sbr.rel (0) target = $region65
    $region64: #{bert_seq_forward.1} parent=1 // pred_region
      _
    $region65: #{bert_seq_forward.1} parent=1 // pred_fallthru
      _
    // Predicated region
    $region66: #{bert_seq_forward.1} parent=1 // pred_check
      _
    $region67: #{bert_seq_forward.1} parent=1 // pred_check_branch
      %61 = sbr.rel (0) target = $region69
    $region68: #{bert_seq_forward.1} parent=1 // pred_region
      _
    $region69: #{bert_seq_forward.1} parent=1 // pred_fallthru
      _
    // Predicated region
    $region70: #{bert_seq_forward.1} parent=1 // pred_check
      _
    $region71: #{bert_seq_forward.1} parent=1 // pred_check_branch
      %63 = sbr.rel (0) target = $region73
    $region72: #{bert_seq_forward.1} parent=1 // pred_region
      _
    $region73: #{bert_seq_forward.1} parent=1 // pred_fallthru
      _
    // Predicated region
    $region74: #{bert_seq_forward.1} parent=1 // pred_check
      _
    $region75: #{bert_seq_forward.1} parent=1 // pred_check_branch
      %65 = sbr.rel (0) target = $region77
    $region76: #{bert_seq_forward.1} parent=1 // pred_region
      _
    $region77: #{bert_seq_forward.1} parent=1 // pred_fallthru
      _
    // Predicated region
    $region78: #{bert_seq_forward.1} parent=1 // pred_check
      _
    $region79: #{bert_seq_forward.1} parent=1 // pred_check_branch
      %67 = sbr.rel (0) target = $region81
    $region80: #{bert_seq_forward.1} parent=1 // pred_region
      _
    $region81: #{bert_seq_forward.1} parent=1 // pred_fallthru
      _
    // Predicated region
    $region82: #{bert_seq_forward.1} parent=1 // pred_check
      _
    $region83: #{bert_seq_forward.1} parent=1 // pred_check_branch
      %69 = sbr.rel (0) target = $region85
    $region84: #{bert_seq_forward.1} parent=1 // pred_region
      _
    $region85: #{bert_seq_forward.1} parent=1 // pred_fallthru
      _
    // Predicated region
    $region86: #{bert_seq_forward.1} parent=1 // pred_check
      _
    $region87: #{bert_seq_forward.1} parent=1 // pred_check_branch
      %71 = sbr.rel (0) target = $region89
    $region88: #{bert_seq_forward.1} parent=1 // pred_region
      _
    $region89: #{bert_seq_forward.1} parent=1 // pred_fallthru
      _
    %v73 = vld [vmem:[%s0] sm:$0xff]
    %v74 = vld [vmem:[%s0 + $0x8] sm:$0xff]
    %v75 = vld [vmem:[%s2] sm:$0x1]
    %v76 = vld [vmem:[%s3] sm:$0x1]
    %vm77 = vcmask 261120
    %v78 = vsel %vm77, %v73, 0.0
    %79 = vadd.xlane.f32.xlu0 %v78
    %v80 = vpop.xlane.xlu0 %79
    %v81 = vsel %vm77, %v74, 0.0
    %82 = vadd.xlane.f32.xlu0 %v81
    %v83 = vpop.xlane.xlu0 %82
    %v84 = vrcp.pop 32.0
    %v85 = vmul.f32 %v80, %v84
    %v86 = vmul.f32 %v83, %v84
    %v87 = vsub.f32 %v73, %v85
    %v88 = vsub.f32 %v74, %v86
    %v89 = vmul.f32 %v87, %v87
    %v90 = vmul.f32 %v88, %v88
    %v91 = vsel %vm77, %v89, 0.0
    %92 = vadd.xlane.f32.xlu0 %v91
    %v93 = vpop.xlane.xlu0 %92
    %v94 = vsel %vm77, %v90, 0.0
    %95 = vadd.xlane.f32.xlu0 %v94
    %v96 = vpop.xlane.xlu0 %95
    %v97 = vmul.f32 %v93, %v84
    %v98 = vmul.f32 %v96, %v84
    %v99 = vadd.f32 %v97, 1e-12
    %v100 = vadd.f32 %v98, 1e-12
    %v101 = vrsqrt.pop %v99
    %v102 = vrsqrt.pop %v100
    %v103 = vmul.f32 %v87, %v101
    %v104 = vmul.f32 %v88, %v102
    %v106 = vlaneseq
    %v107 = vshrl.u32 %v106, 7
    %v108 = vsub.s32 0, %v107
    %v109 = vrot.slane %v75, %v108
    %v111 = vmul.f32 %v103, %v109
    %v112 = vmul.f32 %v104, %v109
    %v114 = vlaneseq
    %v115 = vshrl.u32 %v114, 7
    %v116 = vsub.s32 0, %v115
    %v117 = vrot.slane %v76, %v116
    %v119 = vadd.f32 %v111, %v117
    %v120 = vadd.f32 %v112, %v117
    %v121 = vlaneseq
    %v122 = vshrl.u32 %v121, 7
    %v123 = vlaneseq
    %v124 = vand.u32 %v123, 127
    %vm125 = vcmp.ge.s32.totalorder %v122, %v124
    %v126 = vld [vmem:[%s1] sm:$0x1]
    %v127 = vld [vmem:[%s1 + $0x1] sm:$0x1]
    %vm128 = vcmp.gt.f32.partialorder %v126, 0.5
    %vm129 = vcmp.gt.f32.partialorder %v127, 0.5
    %v130 = vsel %vm125, 1, 0
    %vm131 = vcmp.eq.s32.totalorder %v130, 1
    %v132 = vsel %vm128, 1, 0
    %v133 = vsel %vm129, 1, 0
    %v134 = vlaneseq
    %v135 = vshrl.u32 %v134, 7
    %v136 = vsub.s32 0, %v135
    %v137 = vrot.slane %v132, %v136
    %v138 = vlaneseq
    %v139 = vshrl.u32 %v138, 7
    %v140 = vsub.s32 0, %v139
    %v141 = vrot.slane %v133, %v140
    %vm142 = vcmp.eq.s32.totalorder %v137, 1
    %vm143 = vcmp.eq.s32.totalorder %v141, 1
    %vm144 = vmand %vm131, %vm142
    %vm145 = vmand %vm131, %vm143
    %v146 = vsel %vm144, 0.0, -1e+09
    %v147 = vsel %vm145, 0.0, -1e+09
    %v148 = vld [vmem:[%s4] sm:$0xf]
    %v149 = vld [vmem:[%s4 + $0x4] sm:$0xf]
    %v150 = vld [vmem:[%s4 + $0x8] sm:$0xf]
    %v151 = vld [vmem:[%s4 + $0xc] sm:$0xf]
    %v152 = vld [vmem:[%s5] sm:$0x1]
    %v153 = vpack.c.bf16 %v120, %v119
    %v155 = vlaneseq
    %v156 = vshrl.u32 %v155, 7
    %v157 = vsub.s32 0, %v156
    %v158 = vrot.slane %v152, %v157
    %v164 = vunpack.c.l.b16 %v148
    %v165 = vunpack.c.l.b16 %v149
    %v166 = vunpack.c.l.b16 %v150
    %v167 = vunpack.c.l.b16 %v151
    %v168 = vpack.c.b16 %v165, %v164
    %v169 = vpack.c.b16 %v167, %v166
    %v173 = vsel %vm77, %v153, 0
    %175 = vmatprep.subr.bf16.mxu0 0
    %176 = vmatpush1.bf16.msra.mxu0 %v168
    %177 = vmatprep.subr.bf16.mxu0 0
    %178 = vmatpush1.bf16.msra.mxu0 %v169
    %179 = vmatprep.subr.bf16.mxu0 0
    %180 = vmatpush1.bf16.msra.mxu0 0
    %181 = vmatprep.subr.bf16.mxu0 0
    %182 = vmatpush1.bf16.msra.mxu0 0
    %183 = vmatprep.subr.bf16.mxu0 0
    %184 = vmatpush1.bf16.msra.mxu0 0
    %185 = vmatprep.subr.bf16.mxu0 0
    %186 = vmatpush1.bf16.msra.mxu0 0
    %187 = vmatprep.subr.bf16.mxu0 0
    %188 = vmatpush1.bf16.msra.mxu0 0
    %189 = vmatprep.subr.bf16.mxu0 0
    %190 = vmatpush1.bf16.msra.mxu0 0
    %191 = vmatprep.subr.bf16.mxu0 0
    %192 = vmatpush1.bf16.msra.mxu0 0
    %193 = vmatprep.subr.bf16.mxu0 0
    %194 = vmatpush1.bf16.msra.mxu0 0
    %195 = vmatprep.subr.bf16.mxu0 0
    %196 = vmatpush1.bf16.msra.mxu0 0
    %197 = vmatprep.subr.bf16.mxu0 0
    %198 = vmatpush1.bf16.msra.mxu0 0
    %199 = vmatprep.subr.bf16.mxu0 0
    %200 = vmatpush1.bf16.msra.mxu0 0
    %201 = vmatprep.subr.bf16.mxu0 0
    %202 = vmatpush1.bf16.msra.mxu0 0
    %203 = vmatprep.subr.bf16.mxu0 0
    %204 = vmatpush1.bf16.msra.mxu0 0
    %205 = vmatprep.subr.bf16.mxu0 0
    %206 = vmatpush1.bf16.msra.mxu0 0
    %207 = vmatprep.mubr.bf16.mxu0 0
    %208 = vmatmul.mubr.bf16.gmra.mrb[0].mxu0 %v173
    %v209 = vpop.f32.mrb[0].mxu0
    %v210 = vadd.f32 %v158, %v209
    %v211 = vpop.f32.mrb[0].mxu0
    %v212 = vpop.f32.mrb[0].mxu0
    %v213 = vadd.f32 %v158, %v212
    %v214 = vpop.f32.mrb[0].mxu0
    %215 = vdwg.mxu0
    %217 = vrot.lane.b32.xlu0 %v210, 96
    %v218 = vpop.permute.xlu0 %217
    %vm219 = vcmask 64512
    %v220 = vsel %vm219, %v210, 0
    %v222 = vsel %vm219, %v218, 0
    %224 = vmatprep.subr.mxu0 0.0
    %225 = vmatpush1.xpose.msra.mxu0 %v222
    %226 = vmatprep.subr.mxu0 0.0
    %227 = vmatpush1.xpose.msra.mxu0 0.0
    %228 = vmatprep.subr.mxu0 0.0
    %229 = vmatpush1.xpose.msra.mxu0 0.0
    %230 = vmatprep.subr.mxu0 0.0
    %231 = vmatpush1.xpose.msra.mxu0 0.0
    %232 = vmatprep.subr.mxu0 0.0
    %233 = vmatpush1.xpose.msra.mxu0 0.0
    %234 = vmatprep.subr.mxu0 0.0
    %235 = vmatpush1.xpose.msra.mxu0 0.0
    %236 = vmatprep.subr.mxu0 0.0
    %237 = vmatpush1.xpose.msra.mxu0 0.0
    %238 = vmatprep.subr.mxu0 0.0
    %239 = vmatpush1.xpose.msra.mxu0 0.0
    %240 = vmatprep.subr.mxu0 0.0
    %241 = vmatpush1.xpose.msra.mxu0 0.0
    %242 = vmatprep.subr.mxu0 0.0
    %243 = vmatpush1.xpose.msra.mxu0 0.0
    %244 = vmatprep.subr.mxu0 0.0
    %245 = vmatpush1.xpose.msra.mxu0 0.0
    %246 = vmatprep.subr.mxu0 0.0
    %247 = vmatpush1.xpose.msra.mxu0 0.0
    %248 = vmatprep.subr.mxu0 0.0
    %249 = vmatpush1.xpose.msra.mxu0 0.0
    %250 = vmatprep.subr.mxu0 0.0
    %251 = vmatpush1.xpose.msra.mxu0 0.0
    %252 = vmatprep.subr.mxu0 0.0
    %253 = vmatpush1.xpose.msra.mxu0 0.0
    %254 = vmatprep.subr.mxu0 0.0
    %255 = vmatpush1.xpose.msra.mxu0 0.0
    %256 = vmatprep.subr.mxu0 0.0
    %257 = vmatpush1.xpose.msra.mxu0 0.0
    %258 = vmatprep.subr.mxu0 0.0
    %259 = vmatpush1.xpose.msra.mxu0 0.0
    %260 = vmatprep.subr.mxu0 0.0
    %261 = vmatpush1.xpose.msra.mxu0 0.0
    %262 = vmatprep.subr.mxu0 0.0
    %263 = vmatpush1.xpose.msra.mxu0 0.0
    %264 = vmatprep.subr.mxu0 0.0
    %265 = vmatpush1.xpose.msra.mxu0 0.0
    %266 = vmatprep.subr.mxu0 0.0
    %267 = vmatpush1.xpose.msra.mxu0 0.0
    %268 = vmatprep.subr.mxu0 0.0
    %269 = vmatpush1.xpose.msra.mxu0 0.0
    %270 = vmatprep.subr.mxu0 0.0
    %271 = vmatpush1.xpose.msra.mxu0 0.0
    %272 = vmatprep.subr.mxu0 0.0
    %273 = vmatpush1.xpose.msra.mxu0 0.0
    %274 = vmatprep.subr.mxu0 0.0
    %275 = vmatpush1.xpose.msra.mxu0 0.0
    %276 = vmatprep.subr.mxu0 0.0
    %277 = vmatpush1.xpose.msra.mxu0 0.0
    %278 = vmatprep.subr.mxu0 0.0
    %279 = vmatpush1.xpose.msra.mxu0 0.0
    %280 = vmatprep.subr.mxu0 0.0
    %281 = vmatpush1.xpose.msra.mxu0 0.0
    %282 = vmatprep.subr.mxu0 0.0
    %283 = vmatpush1.xpose.msra.mxu0 0.0
    %284 = vmatprep.subr.mxu0 0.0
    %285 = vmatpush1.xpose.msra.mxu0 0.0
    %286 = vmatprep.subr.mxu0 0.0
    %287 = vmatpush1.xpose.msra.mxu0 0.0
    %288 = vmatprep.mubr.f32.mxu0 0.0
    %289 = vmatmul.mubr.f32.gmra.mrb[0].mxu0 %v220
    %v290 = vpop.f32.mrb[0].mxu0
    %v291 = vadd.f32 %v146, %v290
    %v292 = vpop.f32.mrb[0].mxu0
    %293 = vdwg.mxu0
    %295 = vrot.lane.b32.xlu0 %v213, 96
    %v296 = vpop.permute.xlu0 %295
    %v297 = vsel %vm219, %v213, 0
    %v299 = vsel %vm219, %v296, 0
    %301 = vmatprep.subr.mxu0 0.0
    %302 = vmatpush1.xpose.msra.mxu0 %v299
    %303 = vmatprep.subr.mxu0 0.0
    %304 = vmatpush1.xpose.msra.mxu0 0.0
    %305 = vmatprep.subr.mxu0 0.0
    %306 = vmatpush1.xpose.msra.mxu0 0.0
    %307 = vmatprep.subr.mxu0 0.0
    %308 = vmatpush1.xpose.msra.mxu0 0.0
    %309 = vmatprep.subr.mxu0 0.0
    %310 = vmatpush1.xpose.msra.mxu0 0.0
    %311 = vmatprep.subr.mxu0 0.0
    %312 = vmatpush1.xpose.msra.mxu0 0.0
    %313 = vmatprep.subr.mxu0 0.0
    %314 = vmatpush1.xpose.msra.mxu0 0.0
    %315 = vmatprep.subr.mxu0 0.0
    %316 = vmatpush1.xpose.msra.mxu0 0.0
    %317 = vmatprep.subr.mxu0 0.0
    %318 = vmatpush1.xpose.msra.mxu0 0.0
    %319 = vmatprep.subr.mxu0 0.0
    %320 = vmatpush1.xpose.msra.mxu0 0.0
    %321 = vmatprep.subr.mxu0 0.0
    %322 = vmatpush1.xpose.msra.mxu0 0.0
    %323 = vmatprep.subr.mxu0 0.0
    %324 = vmatpush1.xpose.msra.mxu0 0.0
    %325 = vmatprep.subr.mxu0 0.0
    %326 = vmatpush1.xpose.msra.mxu0 0.0
    %327 = vmatprep.subr.mxu0 0.0
    %328 = vmatpush1.xpose.msra.mxu0 0.0
    %329 = vmatprep.subr.mxu0 0.0
    %330 = vmatpush1.xpose.msra.mxu0 0.0
    %331 = vmatprep.subr.mxu0 0.0
    %332 = vmatpush1.xpose.msra.mxu0 0.0
    %333 = vmatprep.subr.mxu0 0.0
    %334 = vmatpush1.xpose.msra.mxu0 0.0
    %335 = vmatprep.subr.mxu0 0.0
    %336 = vmatpush1.xpose.msra.mxu0 0.0
    %337 = vmatprep.subr.mxu0 0.0
    %338 = vmatpush1.xpose.msra.mxu0 0.0
    %339 = vmatprep.subr.mxu0 0.0
    %340 = vmatpush1.xpose.msra.mxu0 0.0
    %341 = vmatprep.subr.mxu0 0.0
    %342 = vmatpush1.xpose.msra.mxu0 0.0
    %343 = vmatprep.subr.mxu0 0.0
    %344 = vmatpush1.xpose.msra.mxu0 0.0
    %345 = vmatprep.subr.mxu0 0.0
    %346 = vmatpush1.xpose.msra.mxu0 0.0
    %347 = vmatprep.subr.mxu0 0.0
    %348 = vmatpush1.xpose.msra.mxu0 0.0
    %349 = vmatprep.subr.mxu0 0.0
    %350 = vmatpush1.xpose.msra.mxu0 0.0
    %351 = vmatprep.subr.mxu0 0.0
    %352 = vmatpush1.xpose.msra.mxu0 0.0
    %353 = vmatprep.subr.mxu0 0.0
    %354 = vmatpush1.xpose.msra.mxu0 0.0
    %355 = vmatprep.subr.mxu0 0.0
    %356 = vmatpush1.xpose.msra.mxu0 0.0
    %357 = vmatprep.subr.mxu0 0.0
    %358 = vmatpush1.xpose.msra.mxu0 0.0
    %359 = vmatprep.subr.mxu0 0.0
    %360 = vmatpush1.xpose.msra.mxu0 0.0
    %361 = vmatprep.subr.mxu0 0.0
    %362 = vmatpush1.xpose.msra.mxu0 0.0
    %363 = vmatprep.subr.mxu0 0.0
    %364 = vmatpush1.xpose.msra.mxu0 0.0
    %365 = vmatprep.mubr.f32.mxu0 0.0
    %366 = vmatmul.mubr.f32.gmra.mrb[0].mxu0 %v297
    %v367 = vpop.f32.mrb[0].mxu0
    %v368 = vadd.f32 %v147, %v367
    %v369 = vpop.f32.mrb[0].mxu0
    %370 = vdwg.mxu0
    %v371 = vsel %vm219, %v291, -inf
    %372 = vmax.xlane.f32.xlu0 %v371
    %v373 = vpop.xlane.xlu0 %372
    %v374 = vsel %vm219, %v368, -inf
    %375 = vmax.xlane.f32.xlu0 %v374
    %v376 = vpop.xlane.xlu0 %375
    %v377 = vsub.f32 %v291, %v373
    %v378 = vsub.f32 %v368, %v376
    %v379 = vmul.f32 %v377, 1.442695
    %v380 = vpow.pop %v379
    %v381 = vmul.f32 %v378, 1.442695
    %v382 = vpow.pop %v381
    %v383 = vsel %vm219, %v380, 0.0
    %384 = vadd.xlane.f32.xlu0 %v383
    %v385 = vpop.xlane.xlu0 %384
    %v386 = vsel %vm219, %v382, 0.0
    %387 = vadd.xlane.f32.xlu0 %v386
    %v388 = vpop.xlane.xlu0 %387
    %v389 = vrcp.pop %v385
    %v390 = vrcp.pop %v388
    %v391 = vmul.f32 %v380, %v389
    %v392 = vmul.f32 %v382, %v390
    %393 = vrot.lane.b32.xlu0 %v210, 64
    %v394 = vpop.permute.xlu0 %393
    %v397 = vsel %vm219, %v391, 0
    %399 = vmatprep.subr.mxu0 0.0
    %400 = vmatpush1.msra.mxu0 %v394
    %401 = vmatprep.subr.mxu0 0.0
    %402 = vmatpush1.msra.mxu0 0.0
    %403 = vmatprep.subr.mxu0 0.0
    %404 = vmatpush1.msra.mxu0 0.0
    %405 = vmatprep.subr.mxu0 0.0
    %406 = vmatpush1.msra.mxu0 0.0
    %407 = vmatprep.subr.mxu0 0.0
    %408 = vmatpush1.msra.mxu0 0.0
    %409 = vmatprep.subr.mxu0 0.0
    %410 = vmatpush1.msra.mxu0 0.0
    %411 = vmatprep.subr.mxu0 0.0
    %412 = vmatpush1.msra.mxu0 0.0
    %413 = vmatprep.subr.mxu0 0.0
    %414 = vmatpush1.msra.mxu0 0.0
    %415 = vmatprep.subr.mxu0 0.0
    %416 = vmatpush1.msra.mxu0 0.0
    %417 = vmatprep.subr.mxu0 0.0
    %418 = vmatpush1.msra.mxu0 0.0
    %419 = vmatprep.subr.mxu0 0.0
    %420 = vmatpush1.msra.mxu0 0.0
    %421 = vmatprep.subr.mxu0 0.0
    %422 = vmatpush1.msra.mxu0 0.0
    %423 = vmatprep.subr.mxu0 0.0
    %424 = vmatpush1.msra.mxu0 0.0
    %425 = vmatprep.subr.mxu0 0.0
    %426 = vmatpush1.msra.mxu0 0.0
    %427 = vmatprep.subr.mxu0 0.0
    %428 = vmatpush1.msra.mxu0 0.0
    %429 = vmatprep.subr.mxu0 0.0
    %430 = vmatpush1.msra.mxu0 0.0
    %431 = vmatprep.subr.mxu0 0.0
    %432 = vmatpush1.msra.mxu0 0.0
    %433 = vmatprep.subr.mxu0 0.0
    %434 = vmatpush1.msra.mxu0 0.0
    %435 = vmatprep.subr.mxu0 0.0
    %436 = vmatpush1.msra.mxu0 0.0
    %437 = vmatprep.subr.mxu0 0.0
    %438 = vmatpush1.msra.mxu0 0.0
    %439 = vmatprep.subr.mxu0 0.0
    %440 = vmatpush1.msra.mxu0 0.0
    %441 = vmatprep.subr.mxu0 0.0
    %442 = vmatpush1.msra.mxu0 0.0
    %443 = vmatprep.subr.mxu0 0.0
    %444 = vmatpush1.msra.mxu0 0.0
    %445 = vmatprep.subr.mxu0 0.0
    %446 = vmatpush1.msra.mxu0 0.0
    %447 = vmatprep.subr.mxu0 0.0
    %448 = vmatpush1.msra.mxu0 0.0
    %449 = vmatprep.subr.mxu0 0.0
    %450 = vmatpush1.msra.mxu0 0.0
    %451 = vmatprep.subr.mxu0 0.0
    %452 = vmatpush1.msra.mxu0 0.0
    %453 = vmatprep.subr.mxu0 0.0
    %454 = vmatpush1.msra.mxu0 0.0
    %455 = vmatprep.subr.mxu0 0.0
    %456 = vmatpush1.msra.mxu0 0.0
    %457 = vmatprep.subr.mxu0 0.0
    %458 = vmatpush1.msra.mxu0 0.0
    %459 = vmatprep.subr.mxu0 0.0
    %460 = vmatpush1.msra.mxu0 0.0
    %461 = vmatprep.subr.mxu0 0.0
    %462 = vmatpush1.msra.mxu0 0.0
    %463 = vmatprep.mubr.f32.mxu0 0.0
    %464 = vmatmul.mubr.f32.gmra.mrb[0].mxu0 %v397
    %v465 = vpop.f32.mrb[0].mxu0
    %v466 = vadd.f32 0.0, %v465
    %v467 = vpop.f32.mrb[0].mxu0
    %468 = vdwg.mxu0
    %469 = vrot.lane.b32.xlu0 %v213, 64
    %v470 = vpop.permute.xlu0 %469
    %v473 = vsel %vm219, %v392, 0
    %475 = vmatprep.subr.mxu0 0.0
    %476 = vmatpush1.msra.mxu0 %v470
    %477 = vmatprep.subr.mxu0 0.0
    %478 = vmatpush1.msra.mxu0 0.0
    %479 = vmatprep.subr.mxu0 0.0
    %480 = vmatpush1.msra.mxu0 0.0
    %481 = vmatprep.subr.mxu0 0.0
    %482 = vmatpush1.msra.mxu0 0.0
    %483 = vmatprep.subr.mxu0 0.0
    %484 = vmatpush1.msra.mxu0 0.0
    %485 = vmatprep.subr.mxu0 0.0
    %486 = vmatpush1.msra.mxu0 0.0
    %487 = vmatprep.subr.mxu0 0.0
    %488 = vmatpush1.msra.mxu0 0.0
    %489 = vmatprep.subr.mxu0 0.0
    %490 = vmatpush1.msra.mxu0 0.0
    %491 = vmatprep.subr.mxu0 0.0
    %492 = vmatpush1.msra.mxu0 0.0
    %493 = vmatprep.subr.mxu0 0.0
    %494 = vmatpush1.msra.mxu0 0.0
    %495 = vmatprep.subr.mxu0 0.0
    %496 = vmatpush1.msra.mxu0 0.0
    %497 = vmatprep.subr.mxu0 0.0
    %498 = vmatpush1.msra.mxu0 0.0
    %499 = vmatprep.subr.mxu0 0.0
    %500 = vmatpush1.msra.mxu0 0.0
    %501 = vmatprep.subr.mxu0 0.0
    %502 = vmatpush1.msra.mxu0 0.0
    %503 = vmatprep.subr.mxu0 0.0
    %504 = vmatpush1.msra.mxu0 0.0
    %505 = vmatprep.subr.mxu0 0.0
    %506 = vmatpush1.msra.mxu0 0.0
    %507 = vmatprep.subr.mxu0 0.0
    %508 = vmatpush1.msra.mxu0 0.0
    %509 = vmatprep.subr.mxu0 0.0
    %510 = vmatpush1.msra.mxu0 0.0
    %511 = vmatprep.subr.mxu0 0.0
    %512 = vmatpush1.msra.mxu0 0.0
    %513 = vmatprep.subr.mxu0 0.0
    %514 = vmatpush1.msra.mxu0 0.0
    %515 = vmatprep.subr.mxu0 0.0
    %516 = vmatpush1.msra.mxu0 0.0
    %517 = vmatprep.subr.mxu0 0.0
    %518 = vmatpush1.msra.mxu0 0.0
    %519 = vmatprep.subr.mxu0 0.0
    %520 = vmatpush1.msra.mxu0 0.0
    %521 = vmatprep.subr.mxu0 0.0
    %522 = vmatpush1.msra.mxu0 0.0
    %523 = vmatprep.subr.mxu0 0.0
    %524 = vmatpush1.msra.mxu0 0.0
    %525 = vmatprep.subr.mxu0 0.0
    %526 = vmatpush1.msra.mxu0 0.0
    %527 = vmatprep.subr.mxu0 0.0
    %528 = vmatpush1.msra.mxu0 0.0
    %529 = vmatprep.subr.mxu0 0.0
    %530 = vmatpush1.msra.mxu0 0.0
    %531 = vmatprep.subr.mxu0 0.0
    %532 = vmatpush1.msra.mxu0 0.0
    %533 = vmatprep.subr.mxu0 0.0
    %534 = vmatpush1.msra.mxu0 0.0
    %535 = vmatprep.subr.mxu0 0.0
    %536 = vmatpush1.msra.mxu0 0.0
    %537 = vmatprep.subr.mxu0 0.0
    %538 = vmatpush1.msra.mxu0 0.0
    %539 = vmatprep.mubr.f32.mxu0 0.0
    %540 = vmatmul.mubr.f32.gmra.mrb[0].mxu0 %v473
    %v541 = vpop.f32.mrb[0].mxu0
    %v542 = vadd.f32 0.0, %v541
    %v543 = vpop.f32.mrb[0].mxu0
    %544 = vdwg.mxu0
    %545 = vrot.lane.b32.xlu0 %v210, 120
    %v546 = vpop.permute.xlu0 %545
    %547 = vrot.lane.b32.xlu0 %v210, 88
    %v548 = vpop.permute.xlu0 %547
    %v549 = vsel %vm219, %v546, 0
    %v551 = vsel %vm219, %v548, 0
    %553 = vmatprep.subr.mxu0 0.0
    %554 = vmatpush1.xpose.msra.mxu0 %v551
    %555 = vmatprep.subr.mxu0 0.0
    %556 = vmatpush1.xpose.msra.mxu0 0.0
    %557 = vmatprep.subr.mxu0 0.0
    %558 = vmatpush1.xpose.msra.mxu0 0.0
    %559 = vmatprep.subr.mxu0 0.0
    %560 = vmatpush1.xpose.msra.mxu0 0.0
    %561 = vmatprep.subr.mxu0 0.0
    %562 = vmatpush1.xpose.msra.mxu0 0.0
    %563 = vmatprep.subr.mxu0 0.0
    %564 = vmatpush1.xpose.msra.mxu0 0.0
    %565 = vmatprep.subr.mxu0 0.0
    %566 = vmatpush1.xpose.msra.mxu0 0.0
    %567 = vmatprep.subr.mxu0 0.0
    %568 = vmatpush1.xpose.msra.mxu0 0.0
    %569 = vmatprep.subr.mxu0 0.0
    %570 = vmatpush1.xpose.msra.mxu0 0.0
    %571 = vmatprep.subr.mxu0 0.0
    %572 = vmatpush1.xpose.msra.mxu0 0.0
    %573 = vmatprep.subr.mxu0 0.0
    %574 = vmatpush1.xpose.msra.mxu0 0.0
    %575 = vmatprep.subr.mxu0 0.0
    %576 = vmatpush1.xpose.msra.mxu0 0.0
    %577 = vmatprep.subr.mxu0 0.0
    %578 = vmatpush1.xpose.msra.mxu0 0.0
    %579 = vmatprep.subr.mxu0 0.0
    %580 = vmatpush1.xpose.msra.mxu0 0.0
    %581 = vmatprep.subr.mxu0 0.0
    %582 = vmatpush1.xpose.msra.mxu0 0.0
    %583 = vmatprep.subr.mxu0 0.0
    %584 = vmatpush1.xpose.msra.mxu0 0.0
    %585 = vmatprep.subr.mxu0 0.0
    %586 = vmatpush1.xpose.msra.mxu0 0.0
    %587 = vmatprep.subr.mxu0 0.0
    %588 = vmatpush1.xpose.msra.mxu0 0.0
    %589 = vmatprep.subr.mxu0 0.0
    %590 = vmatpush1.xpose.msra.mxu0 0.0
    %591 = vmatprep.subr.mxu0 0.0
    %592 = vmatpush1.xpose.msra.mxu0 0.0
    %593 = vmatprep.subr.mxu0 0.0
    %594 = vmatpush1.xpose.msra.mxu0 0.0
    %595 = vmatprep.subr.mxu0 0.0
    %596 = vmatpush1.xpose.msra.mxu0 0.0
    %597 = vmatprep.subr.mxu0 0.0
    %598 = vmatpush1.xpose.msra.mxu0 0.0
    %599 = vmatprep.subr.mxu0 0.0
    %600 = vmatpush1.xpose.msra.mxu0 0.0
    %601 = vmatprep.subr.mxu0 0.0
    %602 = vmatpush1.xpose.msra.mxu0 0.0
    %603 = vmatprep.subr.mxu0 0.0
    %604 = vmatpush1.xpose.msra.mxu0 0.0
    %605 = vmatprep.subr.mxu0 0.0
    %606 = vmatpush1.xpose.msra.mxu0 0.0
    %607 = vmatprep.subr.mxu0 0.0
    %608 = vmatpush1.xpose.msra.mxu0 0.0
    %609 = vmatprep.subr.mxu0 0.0
    %610 = vmatpush1.xpose.msra.mxu0 0.0
    %611 = vmatprep.subr.mxu0 0.0
    %612 = vmatpush1.xpose.msra.mxu0 0.0
    %613 = vmatprep.subr.mxu0 0.0
    %614 = vmatpush1.xpose.msra.mxu0 0.0
    %615 = vmatprep.subr.mxu0 0.0
    %616 = vmatpush1.xpose.msra.mxu0 0.0
    %617 = vmatprep.mubr.f32.mxu0 0.0
    %618 = vmatmul.mubr.f32.gmra.mrb[0].mxu0 %v549
    %v619 = vpop.f32.mrb[0].mxu0
    %v620 = vadd.f32 %v146, %v619
    %v621 = vpop.f32.mrb[0].mxu0
    %622 = vdwg.mxu0
    %623 = vrot.lane.b32.xlu0 %v213, 120
    %v624 = vpop.permute.xlu0 %623
    %625 = vrot.lane.b32.xlu0 %v213, 88
    %v626 = vpop.permute.xlu0 %625
    %v627 = vsel %vm219, %v624, 0
    %v629 = vsel %vm219, %v626, 0
    %631 = vmatprep.subr.mxu0 0.0
    %632 = vmatpush1.xpose.msra.mxu0 %v629
    %633 = vmatprep.subr.mxu0 0.0
    %634 = vmatpush1.xpose.msra.mxu0 0.0
    %635 = vmatprep.subr.mxu0 0.0
    %636 = vmatpush1.xpose.msra.mxu0 0.0
    %637 = vmatprep.subr.mxu0 0.0
    %638 = vmatpush1.xpose.msra.mxu0 0.0
    %639 = vmatprep.subr.mxu0 0.0
    %640 = vmatpush1.xpose.msra.mxu0 0.0
    %641 = vmatprep.subr.mxu0 0.0
    %642 = vmatpush1.xpose.msra.mxu0 0.0
    %643 = vmatprep.subr.mxu0 0.0
    %644 = vmatpush1.xpose.msra.mxu0 0.0
    %645 = vmatprep.subr.mxu0 0.0
    %646 = vmatpush1.xpose.msra.mxu0 0.0
    %647 = vmatprep.subr.mxu0 0.0
    %648 = vmatpush1.xpose.msra.mxu0 0.0
    %649 = vmatprep.subr.mxu0 0.0
    %650 = vmatpush1.xpose.msra.mxu0 0.0
    %651 = vmatprep.subr.mxu0 0.0
    %652 = vmatpush1.xpose.msra.mxu0 0.0
    %653 = vmatprep.subr.mxu0 0.0
    %654 = vmatpush1.xpose.msra.mxu0 0.0
    %655 = vmatprep.subr.mxu0 0.0
    %656 = vmatpush1.xpose.msra.mxu0 0.0
    %657 = vmatprep.subr.mxu0 0.0
    %658 = vmatpush1.xpose.msra.mxu0 0.0
    %659 = vmatprep.subr.mxu0 0.0
    %660 = vmatpush1.xpose.msra.mxu0 0.0
    %661 = vmatprep.subr.mxu0 0.0
    %662 = vmatpush1.xpose.msra.mxu0 0.0
    %663 = vmatprep.subr.mxu0 0.0
    %664 = vmatpush1.xpose.msra.mxu0 0.0
    %665 = vmatprep.subr.mxu0 0.0
    %666 = vmatpush1.xpose.msra.mxu0 0.0
    %667 = vmatprep.subr.mxu0 0.0
    %668 = vmatpush1.xpose.msra.mxu0 0.0
    %669 = vmatprep.subr.mxu0 0.0
    %670 = vmatpush1.xpose.msra.mxu0 0.0
    %671 = vmatprep.subr.mxu0 0.0
    %672 = vmatpush1.xpose.msra.mxu0 0.0
    %673 = vmatprep.subr.mxu0 0.0
    %674 = vmatpush1.xpose.msra.mxu0 0.0
    %675 = vmatprep.subr.mxu0 0.0
    %676 = vmatpush1.xpose.msra.mxu0 0.0
    %677 = vmatprep.subr.mxu0 0.0
    %678 = vmatpush1.xpose.msra.mxu0 0.0
    %679 = vmatprep.subr.mxu0 0.0
    %680 = vmatpush1.xpose.msra.mxu0 0.0
    %681 = vmatprep.subr.mxu0 0.0
    %682 = vmatpush1.xpose.msra.mxu0 0.0
    %683 = vmatprep.subr.mxu0 0.0
    %684 = vmatpush1.xpose.msra.mxu0 0.0
    %685 = vmatprep.subr.mxu0 0.0
    %686 = vmatpush1.xpose.msra.mxu0 0.0
    %687 = vmatprep.subr.mxu0 0.0
    %688 = vmatpush1.xpose.msra.mxu0 0.0
    %689 = vmatprep.subr.mxu0 0.0
    %690 = vmatpush1.xpose.msra.mxu0 0.0
    %691 = vmatprep.subr.mxu0 0.0
    %692 = vmatpush1.xpose.msra.mxu0 0.0
    %693 = vmatprep.subr.mxu0 0.0
    %694 = vmatpush1.xpose.msra.mxu0 0.0
    %695 = vmatprep.mubr.f32.mxu0 0.0
    %696 = vmatmul.mubr.f32.gmra.mrb[0].mxu0 %v627
    %v697 = vpop.f32.mrb[0].mxu0
    %v698 = vadd.f32 %v147, %v697
    %v699 = vpop.f32.mrb[0].mxu0
    %700 = vdwg.mxu0
    %v701 = vsel %vm219, %v620, -inf
    %702 = vmax.xlane.f32.xlu0 %v701
    %v703 = vpop.xlane.xlu0 %702
    %v704 = vsel %vm219, %v698, -inf
    %705 = vmax.xlane.f32.xlu0 %v704
    %v706 = vpop.xlane.xlu0 %705
    %v707 = vsub.f32 %v620, %v703
    %v708 = vsub.f32 %v698, %v706
    %v709 = vmul.f32 %v707, 1.442695
    %v710 = vpow.pop %v709
    %v711 = vmul.f32 %v708, 1.442695
    %v712 = vpow.pop %v711
    %v713 = vsel %vm219, %v710, 0.0
    %714 = vadd.xlane.f32.xlu0 %v713
    %v715 = vpop.xlane.xlu0 %714
    %v716 = vsel %vm219, %v712, 0.0
    %717 = vadd.xlane.f32.xlu0 %v716
    %v718 = vpop.xlane.xlu0 %717
    %v719 = vrcp.pop %v715
    %v720 = vrcp.pop %v718
    %v721 = vmul.f32 %v710, %v719
    %v722 = vmul.f32 %v712, %v720
    %723 = vrot.lane.b32.xlu0 %v210, 56
    %v724 = vpop.permute.xlu0 %723
    %v727 = vsel %vm219, %v721, 0
    %729 = vmatprep.subr.mxu0 0.0
    %730 = vmatpush1.msra.mxu0 %v724
    %731 = vmatprep.subr.mxu0 0.0
    %732 = vmatpush1.msra.mxu0 0.0
    %733 = vmatprep.subr.mxu0 0.0
    %734 = vmatpush1.msra.mxu0 0.0
    %735 = vmatprep.subr.mxu0 0.0
    %736 = vmatpush1.msra.mxu0 0.0
    %737 = vmatprep.subr.mxu0 0.0
    %738 = vmatpush1.msra.mxu0 0.0
    %739 = vmatprep.subr.mxu0 0.0
    %740 = vmatpush1.msra.mxu0 0.0
    %741 = vmatprep.subr.mxu0 0.0
    %742 = vmatpush1.msra.mxu0 0.0
    %743 = vmatprep.subr.mxu0 0.0
    %744 = vmatpush1.msra.mxu0 0.0
    %745 = vmatprep.subr.mxu0 0.0
    %746 = vmatpush1.msra.mxu0 0.0
    %747 = vmatprep.subr.mxu0 0.0
    %748 = vmatpush1.msra.mxu0 0.0
    %749 = vmatprep.subr.mxu0 0.0
    %750 = vmatpush1.msra.mxu0 0.0
    %751 = vmatprep.subr.mxu0 0.0
    %752 = vmatpush1.msra.mxu0 0.0
    %753 = vmatprep.subr.mxu0 0.0
    %754 = vmatpush1.msra.mxu0 0.0
    %755 = vmatprep.subr.mxu0 0.0
    %756 = vmatpush1.msra.mxu0 0.0
    %757 = vmatprep.subr.mxu0 0.0
    %758 = vmatpush1.msra.mxu0 0.0
    %759 = vmatprep.subr.mxu0 0.0
    %760 = vmatpush1.msra.mxu0 0.0
    %761 = vmatprep.subr.mxu0 0.0
    %762 = vmatpush1.msra.mxu0 0.0
    %763 = vmatprep.subr.mxu0 0.0
    %764 = vmatpush1.msra.mxu0 0.0
    %765 = vmatprep.subr.mxu0 0.0
    %766 = vmatpush1.msra.mxu0 0.0
    %767 = vmatprep.subr.mxu0 0.0
    %768 = vmatpush1.msra.mxu0 0.0
    %769 = vmatprep.subr.mxu0 0.0
    %770 = vmatpush1.msra.mxu0 0.0
    %771 = vmatprep.subr.mxu0 0.0
    %772 = vmatpush1.msra.mxu0 0.0
    %773 = vmatprep.subr.mxu0 0.0
    %774 = vmatpush1.msra.mxu0 0.0
    %775 = vmatprep.subr.mxu0 0.0
    %776 = vmatpush1.msra.mxu0 0.0
    %777 = vmatprep.subr.mxu0 0.0
    %778 = vmatpush1.msra.mxu0 0.0
    %779 = vmatprep.subr.mxu0 0.0
    %780 = vmatpush1.msra.mxu0 0.0
    %781 = vmatprep.subr.mxu0 0.0
    %782 = vmatpush1.msra.mxu0 0.0
    %783 = vmatprep.subr.mxu0 0.0
    %784 = vmatpush1.msra.mxu0 0.0
    %785 = vmatprep.subr.mxu0 0.0
    %786 = vmatpush1.msra.mxu0 0.0
    %787 = vmatprep.subr.mxu0 0.0
    %788 = vmatpush1.msra.mxu0 0.0
    %789 = vmatprep.subr.mxu0 0.0
    %790 = vmatpush1.msra.mxu0 0.0
    %791 = vmatprep.subr.mxu0 0.0
    %792 = vmatpush1.msra.mxu0 0.0
    %793 = vmatprep.mubr.f32.mxu0 0.0
    %794 = vmatmul.mubr.f32.gmra.mrb[0].mxu0 %v727
    %v795 = vpop.f32.mrb[0].mxu0
    %v796 = vadd.f32 0.0, %v795
    %v797 = vpop.f32.mrb[0].mxu0
    %798 = vdwg.mxu0
    %799 = vrot.lane.b32.xlu0 %v213, 56
    %v800 = vpop.permute.xlu0 %799
    %v803 = vsel %vm219, %v722, 0
    %805 = vmatprep.subr.mxu0 0.0
    %806 = vmatpush1.msra.mxu0 %v800
    %807 = vmatprep.subr.mxu0 0.0
    %808 = vmatpush1.msra.mxu0 0.0
    %809 = vmatprep.subr.mxu0 0.0
    %810 = vmatpush1.msra.mxu0 0.0
    %811 = vmatprep.subr.mxu0 0.0
    %812 = vmatpush1.msra.mxu0 0.0
    %813 = vmatprep.subr.mxu0 0.0
    %814 = vmatpush1.msra.mxu0 0.0
    %815 = vmatprep.subr.mxu0 0.0
    %816 = vmatpush1.msra.mxu0 0.0
    %817 = vmatprep.subr.mxu0 0.0
    %818 = vmatpush1.msra.mxu0 0.0
    %819 = vmatprep.subr.mxu0 0.0
    %820 = vmatpush1.msra.mxu0 0.0
    %821 = vmatprep.subr.mxu0 0.0
    %822 = vmatpush1.msra.mxu0 0.0
    %823 = vmatprep.subr.mxu0 0.0
    %824 = vmatpush1.msra.mxu0 0.0
    %825 = vmatprep.subr.mxu0 0.0
    %826 = vmatpush1.msra.mxu0 0.0
    %827 = vmatprep.subr.mxu0 0.0
    %828 = vmatpush1.msra.mxu0 0.0
    %829 = vmatprep.subr.mxu0 0.0
    %830 = vmatpush1.msra.mxu0 0.0
    %831 = vmatprep.subr.mxu0 0.0
    %832 = vmatpush1.msra.mxu0 0.0
    %833 = vmatprep.subr.mxu0 0.0
    %834 = vmatpush1.msra.mxu0 0.0
    %835 = vmatprep.subr.mxu0 0.0
    %836 = vmatpush1.msra.mxu0 0.0
    %837 = vmatprep.subr.mxu0 0.0
    %838 = vmatpush1.msra.mxu0 0.0
    %839 = vmatprep.subr.mxu0 0.0
    %840 = vmatpush1.msra.mxu0 0.0
    %841 = vmatprep.subr.mxu0 0.0
    %842 = vmatpush1.msra.mxu0 0.0
    %843 = vmatprep.subr.mxu0 0.0
    %844 = vmatpush1.msra.mxu0 0.0
    %845 = vmatprep.subr.mxu0 0.0
    %846 = vmatpush1.msra.mxu0 0.0
    %847 = vmatprep.subr.mxu0 0.0
    %848 = vmatpush1.msra.mxu0 0.0
    %849 = vmatprep.subr.mxu0 0.0
    %850 = vmatpush1.msra.mxu0 0.0
    %851 = vmatprep.subr.mxu0 0.0
    %852 = vmatpush1.msra.mxu0 0.0
    %853 = vmatprep.subr.mxu0 0.0
    %854 = vmatpush1.msra.mxu0 0.0
    %855 = vmatprep.subr.mxu0 0.0
    %856 = vmatpush1.msra.mxu0 0.0
    %857 = vmatprep.subr.mxu0 0.0
    %858 = vmatpush1.msra.mxu0 0.0
    %859 = vmatprep.subr.mxu0 0.0
    %860 = vmatpush1.msra.mxu0 0.0
    %861 = vmatprep.subr.mxu0 0.0
    %862 = vmatpush1.msra.mxu0 0.0
    %863 = vmatprep.subr.mxu0 0.0
    %864 = vmatpush1.msra.mxu0 0.0
    %865 = vmatprep.subr.mxu0 0.0
    %866 = vmatpush1.msra.mxu0 0.0
    %867 = vmatprep.subr.mxu0 0.0
    %868 = vmatpush1.msra.mxu0 0.0
    %869 = vmatprep.mubr.f32.mxu0 0.0
    %870 = vmatmul.mubr.f32.gmra.mrb[0].mxu0 %v803
    %v871 = vpop.f32.mrb[0].mxu0
    %v872 = vadd.f32 0.0, %v871
    %v873 = vpop.f32.mrb[0].mxu0
    %874 = vdwg.mxu0
    %875 = vrot.lane.b32.xlu0 %v210, 112
    %v876 = vpop.permute.xlu0 %875
    %877 = vrot.lane.b32.xlu0 %v210, 80
    %v878 = vpop.permute.xlu0 %877
    %v879 = vsel %vm219, %v876, 0
    %v881 = vsel %vm219, %v878, 0
    %883 = vmatprep.subr.mxu0 0.0
    %884 = vmatpush1.xpose.msra.mxu0 %v881
    %885 = vmatprep.subr.mxu0 0.0
    %886 = vmatpush1.xpose.msra.mxu0 0.0
    %887 = vmatprep.subr.mxu0 0.0
    %888 = vmatpush1.xpose.msra.mxu0 0.0
    %889 = vmatprep.subr.mxu0 0.0
    %890 = vmatpush1.xpose.msra.mxu0 0.0
    %891 = vmatprep.subr.mxu0 0.0
    %892 = vmatpush1.xpose.msra.mxu0 0.0
    %893 = vmatprep.subr.mxu0 0.0
    %894 = vmatpush1.xpose.msra.mxu0 0.0
    %895 = vmatprep.subr.mxu0 0.0
    %896 = vmatpush1.xpose.msra.mxu0 0.0
    %897 = vmatprep.subr.mxu0 0.0
    %898 = vmatpush1.xpose.msra.mxu0 0.0
    %899 = vmatprep.subr.mxu0 0.0
    %900 = vmatpush1.xpose.msra.mxu0 0.0
    %901 = vmatprep.subr.mxu0 0.0
    %902 = vmatpush1.xpose.msra.mxu0 0.0
    %903 = vmatprep.subr.mxu0 0.0
    %904 = vmatpush1.xpose.msra.mxu0 0.0
    %905 = vmatprep.subr.mxu0 0.0
    %906 = vmatpush1.xpose.msra.mxu0 0.0
    %907 = vmatprep.subr.mxu0 0.0
    %908 = vmatpush1.xpose.msra.mxu0 0.0
    %909 = vmatprep.subr.mxu0 0.0
    %910 = vmatpush1.xpose.msra.mxu0 0.0
    %911 = vmatprep.subr.mxu0 0.0
    %912 = vmatpush1.xpose.msra.mxu0 0.0
    %913 = vmatprep.subr.mxu0 0.0
    %914 = vmatpush1.xpose.msra.mxu0 0.0
    %915 = vmatprep.subr.mxu0 0.0
    %916 = vmatpush1.xpose.msra.mxu0 0.0
    %917 = vmatprep.subr.mxu0 0.0
    %918 = vmatpush1.xpose.msra.mxu0 0.0
    %919 = vmatprep.subr.mxu0 0.0
    %920 = vmatpush1.xpose.msra.mxu0 0.0
    %921 = vmatprep.subr.mxu0 0.0
    %922 = vmatpush1.xpose.msra.mxu0 0.0
    %923 = vmatprep.subr.mxu0 0.0
    %924 = vmatpush1.xpose.msra.mxu0 0.0
    %925 = vmatprep.subr.mxu0 0.0
    %926 = vmatpush1.xpose.msra.mxu0 0.0
    %927 = vmatprep.subr.mxu0 0.0
    %928 = vmatpush1.xpose.msra.mxu0 0.0
    %929 = vmatprep.subr.mxu0 0.0
    %930 = vmatpush1.xpose.msra.mxu0 0.0
    %931 = vmatprep.subr.mxu0 0.0
    %932 = vmatpush1.xpose.msra.mxu0 0.0
    %933 = vmatprep.subr.mxu0 0.0
    %934 = vmatpush1.xpose.msra.mxu0 0.0
    %935 = vmatprep.subr.mxu0 0.0
    %936 = vmatpush1.xpose.msra.mxu0 0.0
    %937 = vmatprep.subr.mxu0 0.0
    %938 = vmatpush1.xpose.msra.mxu0 0.0
    %939 = vmatprep.subr.mxu0 0.0
    %940 = vmatpush1.xpose.msra.mxu0 0.0
    %941 = vmatprep.subr.mxu0 0.0
    %942 = vmatpush1.xpose.msra.mxu0 0.0
    %943 = vmatprep.subr.mxu0 0.0
    %944 = vmatpush1.xpose.msra.mxu0 0.0
    %945 = vmatprep.subr.mxu0 0.0
    %946 = vmatpush1.xpose.msra.mxu0 0.0
    %947 = vmatprep.mubr.f32.mxu0 0.0
    %948 = vmatmul.mubr.f32.gmra.mrb[0].mxu0 %v879
    %v949 = vpop.f32.mrb[0].mxu0
    %v950 = vadd.f32 %v146, %v949
    %v951 = vpop.f32.mrb[0].mxu0
    %952 = vdwg.mxu0
    %953 = vrot.lane.b32.xlu0 %v213, 112
    %v954 = vpop.permute.xlu0 %953
    %955 = vrot.lane.b32.xlu0 %v213, 80
    %v956 = vpop.permute.xlu0 %955
    %v957 = vsel %vm219, %v954, 0
    %v959 = vsel %vm219, %v956, 0
    %961 = vmatprep.subr.mxu0 0.0
    %962 = vmatpush1.xpose.msra.mxu0 %v959
    %963 = vmatprep.subr.mxu0 0.0
    %964 = vmatpush1.xpose.msra.mxu0 0.0
    %965 = vmatprep.subr.mxu0 0.0
    %966 = vmatpush1.xpose.msra.mxu0 0.0
    %967 = vmatprep.subr.mxu0 0.0
    %968 = vmatpush1.xpose.msra.mxu0 0.0
    %969 = vmatprep.subr.mxu0 0.0
    %970 = vmatpush1.xpose.msra.mxu0 0.0
    %971 = vmatprep.subr.mxu0 0.0
    %972 = vmatpush1.xpose.msra.mxu0 0.0
    %973 = vmatprep.subr.mxu0 0.0
    %974 = vmatpush1.xpose.msra.mxu0 0.0
    %975 = vmatprep.subr.mxu0 0.0
    %976 = vmatpush1.xpose.msra.mxu0 0.0
    %977 = vmatprep.subr.mxu0 0.0
    %978 = vmatpush1.xpose.msra.mxu0 0.0
    %979 = vmatprep.subr.mxu0 0.0
    %980 = vmatpush1.xpose.msra.mxu0 0.0
    %981 = vmatprep.subr.mxu0 0.0
    %982 = vmatpush1.xpose.msra.mxu0 0.0
    %983 = vmatprep.subr.mxu0 0.0
    %984 = vmatpush1.xpose.msra.mxu0 0.0
    %985 = vmatprep.subr.mxu0 0.0
    %986 = vmatpush1.xpose.msra.mxu0 0.0
    %987 = vmatprep.subr.mxu0 0.0
    %988 = vmatpush1.xpose.msra.mxu0 0.0
    %989 = vmatprep.subr.mxu0 0.0
    %990 = vmatpush1.xpose.msra.mxu0 0.0
    %991 = vmatprep.subr.mxu0 0.0
    %992 = vmatpush1.xpose.msra.mxu0 0.0
    %993 = vmatprep.subr.mxu0 0.0
    %994 = vmatpush1.xpose.msra.mxu0 0.0
    %995 = vmatprep.subr.mxu0 0.0
    %996 = vmatpush1.xpose.msra.mxu0 0.0
    %997 = vmatprep.subr.mxu0 0.0
    %998 = vmatpush1.xpose.msra.mxu0 0.0
    %999 = vmatprep.subr.mxu0 0.0
    %1000 = vmatpush1.xpose.msra.mxu0 0.0
    %1001 = vmatprep.subr.mxu0 0.0
    %1002 = vmatpush1.xpose.msra.mxu0 0.0
    %1003 = vmatprep.subr.mxu0 0.0
    %1004 = vmatpush1.xpose.msra.mxu0 0.0
    %1005 = vmatprep.subr.mxu0 0.0
    %1006 = vmatpush1.xpose.msra.mxu0 0.0
    %1007 = vmatprep.subr.mxu0 0.0
    %1008 = vmatpush1.xpose.msra.mxu0 0.0
    %1009 = vmatprep.subr.mxu0 0.0
    %1010 = vmatpush1.xpose.msra.mxu0 0.0
    %1011 = vmatprep.subr.mxu0 0.0
    %1012 = vmatpush1.xpose.msra.mxu0 0.0
    %1013 = vmatprep.subr.mxu0 0.0
    %1014 = vmatpush1.xpose.msra.mxu0 0.0
    %1015 = vmatprep.subr.mxu0 0.0
    %1016 = vmatpush1.xpose.msra.mxu0 0.0
    %1017 = vmatprep.subr.mxu0 0.0
    %1018 = vmatpush1.xpose.msra.mxu0 0.0
    %1019 = vmatprep.subr.mxu0 0.0
    %1020 = vmatpush1.xpose.msra.mxu0 0.0
    %1021 = vmatprep.subr.mxu0 0.0
    %1022 = vmatpush1.xpose.msra.mxu0 0.0
    %1023 = vmatprep.subr.mxu0 0.0
    %1024 = vmatpush1.xpose.msra.mxu0 0.0
    %1025 = vmatprep.mubr.f32.mxu0 0.0
    %1026 = vmatmul.mubr.f32.gmra.mrb[0].mxu0 %v957
    %v1027 = vpop.f32.mrb[0].mxu0
    %v1028 = vadd.f32 %v147, %v1027
    %v1029 = vpop.f32.mrb[0].mxu0
    %1030 = vdwg.mxu0
    %v1031 = vsel %vm219, %v950, -inf
    %1032 = vmax.xlane.f32.xlu0 %v1031
    %v1033 = vpop.xlane.xlu0 %1032
    %v1034 = vsel %vm219, %v1028, -inf
    %1035 = vmax.xlane.f32.xlu0 %v1034
    %v1036 = vpop.xlane.xlu0 %1035
    %v1037 = vsub.f32 %v950, %v1033
    %v1038 = vsub.f32 %v1028, %v1036
    %v1039 = vmul.f32 %v1037, 1.442695
    %v1040 = vpow.pop %v1039
    %v1041 = vmul.f32 %v1038, 1.442695
    %v1042 = vpow.pop %v1041
    %v1043 = vsel %vm219, %v1040, 0.0
    %1044 = vadd.xlane.f32.xlu0 %v1043
    %v1045 = vpop.xlane.xlu0 %1044
    %v1046 = vsel %vm219, %v1042, 0.0
    %1047 = vadd.xlane.f32.xlu0 %v1046
    %v1048 = vpop.xlane.xlu0 %1047
    %v1049 = vrcp.pop %v1045
    %v1050 = vrcp.pop %v1048
    %v1051 = vmul.f32 %v1040, %v1049
    %v1052 = vmul.f32 %v1042, %v1050
    %1053 = vrot.lane.b32.xlu0 %v210, 48
    %v1054 = vpop.permute.xlu0 %1053
    %v1057 = vsel %vm219, %v1051, 0
    %1059 = vmatprep.subr.mxu0 0.0
    %1060 = vmatpush1.msra.mxu0 %v1054
    %1061 = vmatprep.subr.mxu0 0.0
    %1062 = vmatpush1.msra.mxu0 0.0
    %1063 = vmatprep.subr.mxu0 0.0
    %1064 = vmatpush1.msra.mxu0 0.0
    %1065 = vmatprep.subr.mxu0 0.0
    %1066 = vmatpush1.msra.mxu0 0.0
    %1067 = vmatprep.subr.mxu0 0.0
    %1068 = vmatpush1.msra.mxu0 0.0
    %1069 = vmatprep.subr.mxu0 0.0
    %1070 = vmatpush1.msra.mxu0 0.0
    %1071 = vmatprep.subr.mxu0 0.0
    %1072 = vmatpush1.msra.mxu0 0.0
    %1073 = vmatprep.subr.mxu0 0.0
    %1074 = vmatpush1.msra.mxu0 0.0
    %1075 = vmatprep.subr.mxu0 0.0
    %1076 = vmatpush1.msra.mxu0 0.0
    %1077 = vmatprep.subr.mxu0 0.0
    %1078 = vmatpush1.msra.mxu0 0.0
    %1079 = vmatprep.subr.mxu0 0.0
    %1080 = vmatpush1.msra.mxu0 0.0
    %1081 = vmatprep.subr.mxu0 0.0
    %1082 = vmatpush1.msra.mxu0 0.0
    %1083 = vmatprep.subr.mxu0 0.0
    %1084 = vmatpush1.msra.mxu0 0.0
    %1085 = vmatprep.subr.mxu0 0.0
    %1086 = vmatpush1.msra.mxu0 0.0
    %1087 = vmatprep.subr.mxu0 0.0
    %1088 = vmatpush1.msra.mxu0 0.0
    %1089 = vmatprep.subr.mxu0 0.0
    %1090 = vmatpush1.msra.mxu0 0.0
    %1091 = vmatprep.subr.mxu0 0.0
    %1092 = vmatpush1.msra.mxu0 0.0
    %1093 = vmatprep.subr.mxu0 0.0
    %1094 = vmatpush1.msra.mxu0 0.0
    %1095 = vmatprep.subr.mxu0 0.0
    %1096 = vmatpush1.msra.mxu0 0.0
    %1097 = vmatprep.subr.mxu0 0.0
    %1098 = vmatpush1.msra.mxu0 0.0
    %1099 = vmatprep.subr.mxu0 0.0
    %1100 = vmatpush1.msra.mxu0 0.0
    %1101 = vmatprep.subr.mxu0 0.0
    %1102 = vmatpush1.msra.mxu0 0.0
    %1103 = vmatprep.subr.mxu0 0.0
    %1104 = vmatpush1.msra.mxu0 0.0
    %1105 = vmatprep.subr.mxu0 0.0
    %1106 = vmatpush1.msra.mxu0 0.0
    %1107 = vmatprep.subr.mxu0 0.0
    %1108 = vmatpush1.msra.mxu0 0.0
    %1109 = vmatprep.subr.mxu0 0.0
    %1110 = vmatpush1.msra.mxu0 0.0
    %1111 = vmatprep.subr.mxu0 0.0
    %1112 = vmatpush1.msra.mxu0 0.0
    %1113 = vmatprep.subr.mxu0 0.0
    %1114 = vmatpush1.msra.mxu0 0.0
    %1115 = vmatprep.subr.mxu0 0.0
    %1116 = vmatpush1.msra.mxu0 0.0
    %1117 = vmatprep.subr.mxu0 0.0
    %1118 = vmatpush1.msra.mxu0 0.0
    %1119 = vmatprep.subr.mxu0 0.0
    %1120 = vmatpush1.msra.mxu0 0.0
    %1121 = vmatprep.subr.mxu0 0.0
    %1122 = vmatpush1.msra.mxu0 0.0
    %1123 = vmatprep.mubr.f32.mxu0 0.0
    %1124 = vmatmul.mubr.f32.gmra.mrb[0].mxu0 %v1057
    %v1125 = vpop.f32.mrb[0].mxu0
    %v1126 = vadd.f32 0.0, %v1125
    %v1127 = vpop.f32.mrb[0].mxu0
    %1128 = vdwg.mxu0
    %1129 = vrot.lane.b32.xlu0 %v213, 48
    %v1130 = vpop.permute.xlu0 %1129
    %v1133 = vsel %vm219, %v1052, 0
    %1135 = vmatprep.subr.mxu0 0.0
    %1136 = vmatpush1.msra.mxu0 %v1130
    %1137 = vmatprep.subr.mxu0 0.0
    %1138 = vmatpush1.msra.mxu0 0.0
    %1139 = vmatprep.subr.mxu0 0.0
    %1140 = vmatpush1.msra.mxu0 0.0
    %1141 = vmatprep.subr.mxu0 0.0
    %1142 = vmatpush1.msra.mxu0 0.0
    %1143 = vmatprep.subr.mxu0 0.0
    %1144 = vmatpush1.msra.mxu0 0.0
    %1145 = vmatprep.subr.mxu0 0.0
    %1146 = vmatpush1.msra.mxu0 0.0
    %1147 = vmatprep.subr.mxu0 0.0
    %1148 = vmatpush1.msra.mxu0 0.0
    %1149 = vmatprep.subr.mxu0 0.0
    %1150 = vmatpush1.msra.mxu0 0.0
    %1151 = vmatprep.subr.mxu0 0.0
    %1152 = vmatpush1.msra.mxu0 0.0
    %1153 = vmatprep.subr.mxu0 0.0
    %1154 = vmatpush1.msra.mxu0 0.0
    %1155 = vmatprep.subr.mxu0 0.0
    %1156 = vmatpush1.msra.mxu0 0.0
    %1157 = vmatprep.subr.mxu0 0.0
    %1158 = vmatpush1.msra.mxu0 0.0
    %1159 = vmatprep.subr.mxu0 0.0
    %1160 = vmatpush1.msra.mxu0 0.0
    %1161 = vmatprep.subr.mxu0 0.0
    %1162 = vmatpush1.msra.mxu0 0.0
    %1163 = vmatprep.subr.mxu0 0.0
    %1164 = vmatpush1.msra.mxu0 0.0
    %1165 = vmatprep.subr.mxu0 0.0
    %1166 = vmatpush1.msra.mxu0 0.0
    %1167 = vmatprep.subr.mxu0 0.0
    %1168 = vmatpush1.msra.mxu0 0.0
    %1169 = vmatprep.subr.mxu0 0.0
    %1170 = vmatpush1.msra.mxu0 0.0
    %1171 = vmatprep.subr.mxu0 0.0
    %1172 = vmatpush1.msra.mxu0 0.0
    %1173 = vmatprep.subr.mxu0 0.0
    %1174 = vmatpush1.msra.mxu0 0.0
    %1175 = vmatprep.subr.mxu0 0.0
    %1176 = vmatpush1.msra.mxu0 0.0
    %1177 = vmatprep.subr.mxu0 0.0
    %1178 = vmatpush1.msra.mxu0 0.0
    %1179 = vmatprep.subr.mxu0 0.0
    %1180 = vmatpush1.msra.mxu0 0.0
    %1181 = vmatprep.subr.mxu0 0.0
    %1182 = vmatpush1.msra.mxu0 0.0
    %1183 = vmatprep.subr.mxu0 0.0
    %1184 = vmatpush1.msra.mxu0 0.0
    %1185 = vmatprep.subr.mxu0 0.0
    %1186 = vmatpush1.msra.mxu0 0.0
    %1187 = vmatprep.subr.mxu0 0.0
    %1188 = vmatpush1.msra.mxu0 0.0
    %1189 = vmatprep.subr.mxu0 0.0
    %1190 = vmatpush1.msra.mxu0 0.0
    %1191 = vmatprep.subr.mxu0 0.0
    %1192 = vmatpush1.msra.mxu0 0.0
    %1193 = vmatprep.subr.mxu0 0.0
    %1194 = vmatpush1.msra.mxu0 0.0
    %1195 = vmatprep.subr.mxu0 0.0
    %1196 = vmatpush1.msra.mxu0 0.0
    %1197 = vmatprep.subr.mxu0 0.0
    %1198 = vmatpush1.msra.mxu0 0.0
    %1199 = vmatprep.mubr.f32.mxu0 0.0
    %1200 = vmatmul.mubr.f32.gmra.mrb[0].mxu0 %v1133
    %v1201 = vpop.f32.mrb[0].mxu0
    %v1202 = vadd.f32 0.0, %v1201
    %v1203 = vpop.f32.mrb[0].mxu0
    %1204 = vdwg.mxu0
    %1205 = vrot.lane.b32.xlu0 %v210, 104
    %v1206 = vpop.permute.xlu0 %1205
    %1207 = vrot.lane.b32.xlu0 %v210, 72
    %v1208 = vpop.permute.xlu0 %1207
    %v1209 = vsel %vm219, %v1206, 0
    %v1211 = vsel %vm219, %v1208, 0
    %1213 = vmatprep.subr.mxu0 0.0
    %1214 = vmatpush1.xpose.msra.mxu0 %v1211
    %1215 = vmatprep.subr.mxu0 0.0
    %1216 = vmatpush1.xpose.msra.mxu0 0.0
    %1217 = vmatprep.subr.mxu0 0.0
    %1218 = vmatpush1.xpose.msra.mxu0 0.0
    %1219 = vmatprep.subr.mxu0 0.0
    %1220 = vmatpush1.xpose.msra.mxu0 0.0
    %1221 = vmatprep.subr.mxu0 0.0
    %1222 = vmatpush1.xpose.msra.mxu0 0.0
    %1223 = vmatprep.subr.mxu0 0.0
    %1224 = vmatpush1.xpose.msra.mxu0 0.0
    %1225 = vmatprep.subr.mxu0 0.0
    %1226 = vmatpush1.xpose.msra.mxu0 0.0
    %1227 = vmatprep.subr.mxu0 0.0
    %1228 = vmatpush1.xpose.msra.mxu0 0.0
    %1229 = vmatprep.subr.mxu0 0.0
    %1230 = vmatpush1.xpose.msra.mxu0 0.0
    %1231 = vmatprep.subr.mxu0 0.0
    %1232 = vmatpush1.xpose.msra.mxu0 0.0
    %1233 = vmatprep.subr.mxu0 0.0
    %1234 = vmatpush1.xpose.msra.mxu0 0.0
    %1235 = vmatprep.subr.mxu0 0.0
    %1236 = vmatpush1.xpose.msra.mxu0 0.0
    %1237 = vmatprep.subr.mxu0 0.0
    %1238 = vmatpush1.xpose.msra.mxu0 0.0
    %1239 = vmatprep.subr.mxu0 0.0
    %1240 = vmatpush1.xpose.msra.mxu0 0.0
    %1241 = vmatprep.subr.mxu0 0.0
    %1242 = vmatpush1.xpose.msra.mxu0 0.0
    %1243 = vmatprep.subr.mxu0 0.0
    %1244 = vmatpush1.xpose.msra.mxu0 0.0
    %1245 = vmatprep.subr.mxu0 0.0
    %1246 = vmatpush1.xpose.msra.mxu0 0.0
    %1247 = vmatprep.subr.mxu0 0.0
    %1248 = vmatpush1.xpose.msra.mxu0 0.0
    %1249 = vmatprep.subr.mxu0 0.0
    %1250 = vmatpush1.xpose.msra.mxu0 0.0
    %1251 = vmatprep.subr.mxu0 0.0
    %1252 = vmatpush1.xpose.msra.mxu0 0.0
    %1253 = vmatprep.subr.mxu0 0.0
    %1254 = vmatpush1.xpose.msra.mxu0 0.0
    %1255 = vmatprep.subr.mxu0 0.0
    %1256 = vmatpush1.xpose.msra.mxu0 0.0
    %1257 = vmatprep.subr.mxu0 0.0
    %1258 = vmatpush1.xpose.msra.mxu0 0.0
    %1259 = vmatprep.subr.mxu0 0.0
    %1260 = vmatpush1.xpose.msra.mxu0 0.0
    %1261 = vmatprep.subr.mxu0 0.0
    %1262 = vmatpush1.xpose.msra.mxu0 0.0
    %1263 = vmatprep.subr.mxu0 0.0
    %1264 = vmatpush1.xpose.msra.mxu0 0.0
    %1265 = vmatprep.subr.mxu0 0.0
    %1266 = vmatpush1.xpose.msra.mxu0 0.0
    %1267 = vmatprep.subr.mxu0 0.0
    %1268 = vmatpush1.xpose.msra.mxu0 0.0
    %1269 = vmatprep.subr.mxu0 0.0
    %1270 = vmatpush1.xpose.msra.mxu0 0.0
    %1271 = vmatprep.subr.mxu0 0.0
    %1272 = vmatpush1.xpose.msra.mxu0 0.0
    %1273 = vmatprep.subr.mxu0 0.0
    %1274 = vmatpush1.xpose.msra.mxu0 0.0
    %1275 = vmatprep.subr.mxu0 0.0
    %1276 = vmatpush1.xpose.msra.mxu0 0.0
    %1277 = vmatprep.mubr.f32.mxu0 0.0
    %1278 = vmatmul.mubr.f32.gmra.mrb[0].mxu0 %v1209
    %v1279 = vpop.f32.mrb[0].mxu0
    %v1280 = vadd.f32 %v146, %v1279
    %v1281 = vpop.f32.mrb[0].mxu0
    %1282 = vdwg.mxu0
    %1283 = vrot.lane.b32.xlu0 %v213, 104
    %v1284 = vpop.permute.xlu0 %1283
    %1285 = vrot.lane.b32.xlu0 %v213, 72
    %v1286 = vpop.permute.xlu0 %1285
    %v1287 = vsel %vm219, %v1284, 0
    %v1289 = vsel %vm219, %v1286, 0
    %1291 = vmatprep.subr.mxu0 0.0
    %1292 = vmatpush1.xpose.msra.mxu0 %v1289
    %1293 = vmatprep.subr.mxu0 0.0
    %1294 = vmatpush1.xpose.msra.mxu0 0.0
    %1295 = vmatprep.subr.mxu0 0.0
    %1296 = vmatpush1.xpose.msra.mxu0 0.0
    %1297 = vmatprep.subr.mxu0 0.0
    %1298 = vmatpush1.xpose.msra.mxu0 0.0
    %1299 = vmatprep.subr.mxu0 0.0
    %1300 = vmatpush1.xpose.msra.mxu0 0.0
    %1301 = vmatprep.subr.mxu0 0.0
    %1302 = vmatpush1.xpose.msra.mxu0 0.0
    %1303 = vmatprep.subr.mxu0 0.0
    %1304 = vmatpush1.xpose.msra.mxu0 0.0
    %1305 = vmatprep.subr.mxu0 0.0
    %1306 = vmatpush1.xpose.msra.mxu0 0.0
    %1307 = vmatprep.subr.mxu0 0.0
    %1308 = vmatpush1.xpose.msra.mxu0 0.0
    %1309 = vmatprep.subr.mxu0 0.0
    %1310 = vmatpush1.xpose.msra.mxu0 0.0
    %1311 = vmatprep.subr.mxu0 0.0
    %1312 = vmatpush1.xpose.msra.mxu0 0.0
    %1313 = vmatprep.subr.mxu0 0.0
    %1314 = vmatpush1.xpose.msra.mxu0 0.0
    %1315 = vmatprep.subr.mxu0 0.0
    %1316 = vmatpush1.xpose.msra.mxu0 0.0
    %1317 = vmatprep.subr.mxu0 0.0
    %1318 = vmatpush1.xpose.msra.mxu0 0.0
    %1319 = vmatprep.subr.mxu0 0.0
    %1320 = vmatpush1.xpose.msra.mxu0 0.0
    %1321 = vmatprep.subr.mxu0 0.0
    %1322 = vmatpush1.xpose.msra.mxu0 0.0
    %1323 = vmatprep.subr.mxu0 0.0
    %1324 = vmatpush1.xpose.msra.mxu0 0.0
    %1325 = vmatprep.subr.mxu0 0.0
    %1326 = vmatpush1.xpose.msra.mxu0 0.0
    %1327 = vmatprep.subr.mxu0 0.0
    %1328 = vmatpush1.xpose.msra.mxu0 0.0
    %1329 = vmatprep.subr.mxu0 0.0
    %1330 = vmatpush1.xpose.msra.mxu0 0.0
    %1331 = vmatprep.subr.mxu0 0.0
    %1332 = vmatpush1.xpose.msra.mxu0 0.0
    %1333 = vmatprep.subr.mxu0 0.0
    %1334 = vmatpush1.xpose.msra.mxu0 0.0
    %1335 = vmatprep.subr.mxu0 0.0
    %1336 = vmatpush1.xpose.msra.mxu0 0.0
    %1337 = vmatprep.subr.mxu0 0.0
    %1338 = vmatpush1.xpose.msra.mxu0 0.0
    %1339 = vmatprep.subr.mxu0 0.0
    %1340 = vmatpush1.xpose.msra.mxu0 0.0
    %1341 = vmatprep.subr.mxu0 0.0
    %1342 = vmatpush1.xpose.msra.mxu0 0.0
    %1343 = vmatprep.subr.mxu0 0.0
    %1344 = vmatpush1.xpose.msra.mxu0 0.0
    %1345 = vmatprep.subr.mxu0 0.0
    %1346 = vmatpush1.xpose.msra.mxu0 0.0
    %1347 = vmatprep.subr.mxu0 0.0
    %1348 = vmatpush1.xpose.msra.mxu0 0.0
    %1349 = vmatprep.subr.mxu0 0.0
    %1350 = vmatpush1.xpose.msra.mxu0 0.0
    %1351 = vmatprep.subr.mxu0 0.0
    %1352 = vmatpush1.xpose.msra.mxu0 0.0
    %1353 = vmatprep.subr.mxu0 0.0
    %1354 = vmatpush1.xpose.msra.mxu0 0.0
    %1355 = vmatprep.mubr.f32.mxu0 0.0
    %1356 = vmatmul.mubr.f32.gmra.mrb[0].mxu0 %v1287
    %v1357 = vpop.f32.mrb[0].mxu0
    %v1358 = vadd.f32 %v147, %v1357
    %v1359 = vpop.f32.mrb[0].mxu0
    %1360 = vdwg.mxu0
    %v1361 = vsel %vm219, %v1280, -inf
    %1362 = vmax.xlane.f32.xlu0 %v1361
    %v1363 = vpop.xlane.xlu0 %1362
    %v1364 = vsel %vm219, %v1358, -inf
    %1365 = vmax.xlane.f32.xlu0 %v1364
    %v1366 = vpop.xlane.xlu0 %1365
    %v1367 = vsub.f32 %v1280, %v1363
    %v1368 = vsub.f32 %v1358, %v1366
    %v1369 = vmul.f32 %v1367, 1.442695
    %v1370 = vpow.pop %v1369
    %v1371 = vmul.f32 %v1368, 1.442695
    %v1372 = vpow.pop %v1371
    %v1373 = vsel %vm219, %v1370, 0.0
    %1374 = vadd.xlane.f32.xlu0 %v1373
    %v1375 = vpop.xlane.xlu0 %1374
    %v1376 = vsel %vm219, %v1372, 0.0
    %1377 = vadd.xlane.f32.xlu0 %v1376
    %v1378 = vpop.xlane.xlu0 %1377
    %v1379 = vrcp.pop %v1375
    %v1380 = vrcp.pop %v1378
    %v1381 = vmul.f32 %v1370, %v1379
    %v1382 = vmul.f32 %v1372, %v1380
    %1383 = vrot.lane.b32.xlu0 %v210, 40
    %v1384 = vpop.permute.xlu0 %1383
    %v1387 = vsel %vm219, %v1381, 0
    %1389 = vmatprep.subr.mxu0 0.0
    %1390 = vmatpush1.msra.mxu0 %v1384
    %1391 = vmatprep.subr.mxu0 0.0
    %1392 = vmatpush1.msra.mxu0 0.0
    %1393 = vmatprep.subr.mxu0 0.0
    %1394 = vmatpush1.msra.mxu0 0.0
    %1395 = vmatprep.subr.mxu0 0.0
    %1396 = vmatpush1.msra.mxu0 0.0
    %1397 = vmatprep.subr.mxu0 0.0
    %1398 = vmatpush1.msra.mxu0 0.0
    %1399 = vmatprep.subr.mxu0 0.0
    %1400 = vmatpush1.msra.mxu0 0.0
    %1401 = vmatprep.subr.mxu0 0.0
    %1402 = vmatpush1.msra.mxu0 0.0
    %1403 = vmatprep.subr.mxu0 0.0
    %1404 = vmatpush1.msra.mxu0 0.0
    %1405 = vmatprep.subr.mxu0 0.0
    %1406 = vmatpush1.msra.mxu0 0.0
    %1407 = vmatprep.subr.mxu0 0.0
    %1408 = vmatpush1.msra.mxu0 0.0
    %1409 = vmatprep.subr.mxu0 0.0
    %1410 = vmatpush1.msra.mxu0 0.0
    %1411 = vmatprep.subr.mxu0 0.0
    %1412 = vmatpush1.msra.mxu0 0.0
    %1413 = vmatprep.subr.mxu0 0.0
    %1414 = vmatpush1.msra.mxu0 0.0
    %1415 = vmatprep.subr.mxu0 0.0
    %1416 = vmatpush1.msra.mxu0 0.0
    %1417 = vmatprep.subr.mxu0 0.0
    %1418 = vmatpush1.msra.mxu0 0.0
    %1419 = vmatprep.subr.mxu0 0.0
    %1420 = vmatpush1.msra.mxu0 0.0
    %1421 = vmatprep.subr.mxu0 0.0
    %1422 = vmatpush1.msra.mxu0 0.0
    %1423 = vmatprep.subr.mxu0 0.0
    %1424 = vmatpush1.msra.mxu0 0.0
    %1425 = vmatprep.subr.mxu0 0.0
    %1426 = vmatpush1.msra.mxu0 0.0
    %1427 = vmatprep.subr.mxu0 0.0
    %1428 = vmatpush1.msra.mxu0 0.0
    %1429 = vmatprep.subr.mxu0 0.0
    %1430 = vmatpush1.msra.mxu0 0.0
    %1431 = vmatprep.subr.mxu0 0.0
    %1432 = vmatpush1.msra.mxu0 0.0
    %1433 = vmatprep.subr.mxu0 0.0
    %1434 = vmatpush1.msra.mxu0 0.0
    %1435 = vmatprep.subr.mxu0 0.0
    %1436 = vmatpush1.msra.mxu0 0.0
    %1437 = vmatprep.subr.mxu0 0.0
    %1438 = vmatpush1.msra.mxu0 0.0
    %1439 = vmatprep.subr.mxu0 0.0
    %1440 = vmatpush1.msra.mxu0 0.0
    %1441 = vmatprep.subr.mxu0 0.0
    %1442 = vmatpush1.msra.mxu0 0.0
    %1443 = vmatprep.subr.mxu0 0.0
    %1444 = vmatpush1.msra.mxu0 0.0
    %1445 = vmatprep.subr.mxu0 0.0
    %1446 = vmatpush1.msra.mxu0 0.0
    %1447 = vmatprep.subr.mxu0 0.0
    %1448 = vmatpush1.msra.mxu0 0.0
    %1449 = vmatprep.subr.mxu0 0.0
    %1450 = vmatpush1.msra.mxu0 0.0
    %1451 = vmatprep.subr.mxu0 0.0
    %1452 = vmatpush1.msra.mxu0 0.0
    %1453 = vmatprep.mubr.f32.mxu0 0.0
    %1454 = vmatmul.mubr.f32.gmra.mrb[0].mxu0 %v1387
    %v1455 = vpop.f32.mrb[0].mxu0
    %v1456 = vadd.f32 0.0, %v1455
    %v1457 = vpop.f32.mrb[0].mxu0
    %1458 = vdwg.mxu0
    %1459 = vrot.lane.b32.xlu0 %v213, 40
    %v1460 = vpop.permute.xlu0 %1459
    %v1463 = vsel %vm219, %v1382, 0
    %1465 = vmatprep.subr.mxu0 0.0
    %1466 = vmatpush1.msra.mxu0 %v1460
    %1467 = vmatprep.subr.mxu0 0.0
    %1468 = vmatpush1.msra.mxu0 0.0
    %1469 = vmatprep.subr.mxu0 0.0
    %1470 = vmatpush1.msra.mxu0 0.0
    %1471 = vmatprep.subr.mxu0 0.0
    %1472 = vmatpush1.msra.mxu0 0.0
    %1473 = vmatprep.subr.mxu0 0.0
    %1474 = vmatpush1.msra.mxu0 0.0
    %1475 = vmatprep.subr.mxu0 0.0
    %1476 = vmatpush1.msra.mxu0 0.0
    %1477 = vmatprep.subr.mxu0 0.0
    %1478 = vmatpush1.msra.mxu0 0.0
    %1479 = vmatprep.subr.mxu0 0.0
    %1480 = vmatpush1.msra.mxu0 0.0
    %1481 = vmatprep.subr.mxu0 0.0
    %1482 = vmatpush1.msra.mxu0 0.0
    %1483 = vmatprep.subr.mxu0 0.0
    %1484 = vmatpush1.msra.mxu0 0.0
    %1485 = vmatprep.subr.mxu0 0.0
    %1486 = vmatpush1.msra.mxu0 0.0
    %1487 = vmatprep.subr.mxu0 0.0
    %1488 = vmatpush1.msra.mxu0 0.0
    %1489 = vmatprep.subr.mxu0 0.0
    %1490 = vmatpush1.msra.mxu0 0.0
    %1491 = vmatprep.subr.mxu0 0.0
    %1492 = vmatpush1.msra.mxu0 0.0
    %1493 = vmatprep.subr.mxu0 0.0
    %1494 = vmatpush1.msra.mxu0 0.0
    %1495 = vmatprep.subr.mxu0 0.0
    %1496 = vmatpush1.msra.mxu0 0.0
    %1497 = vmatprep.subr.mxu0 0.0
    %1498 = vmatpush1.msra.mxu0 0.0
    %1499 = vmatprep.subr.mxu0 0.0
    %1500 = vmatpush1.msra.mxu0 0.0
    %1501 = vmatprep.subr.mxu0 0.0
    %1502 = vmatpush1.msra.mxu0 0.0
    %1503 = vmatprep.subr.mxu0 0.0
    %1504 = vmatpush1.msra.mxu0 0.0
    %1505 = vmatprep.subr.mxu0 0.0
    %1506 = vmatpush1.msra.mxu0 0.0
    %1507 = vmatprep.subr.mxu0 0.0
    %1508 = vmatpush1.msra.mxu0 0.0
    %1509 = vmatprep.subr.mxu0 0.0
    %1510 = vmatpush1.msra.mxu0 0.0
    %1511 = vmatprep.subr.mxu0 0.0
    %1512 = vmatpush1.msra.mxu0 0.0
    %1513 = vmatprep.subr.mxu0 0.0
    %1514 = vmatpush1.msra.mxu0 0.0
    %1515 = vmatprep.subr.mxu0 0.0
    %1516 = vmatpush1.msra.mxu0 0.0
    %1517 = vmatprep.subr.mxu0 0.0
    %1518 = vmatpush1.msra.mxu0 0.0
    %1519 = vmatprep.subr.mxu0 0.0
    %1520 = vmatpush1.msra.mxu0 0.0
    %1521 = vmatprep.subr.mxu0 0.0
    %1522 = vmatpush1.msra.mxu0 0.0
    %1523 = vmatprep.subr.mxu0 0.0
    %1524 = vmatpush1.msra.mxu0 0.0
    %1525 = vmatprep.subr.mxu0 0.0
    %1526 = vmatpush1.msra.mxu0 0.0
    %1527 = vmatprep.subr.mxu0 0.0
    %1528 = vmatpush1.msra.mxu0 0.0
    %1529 = vmatprep.mubr.f32.mxu0 0.0
    %1530 = vmatmul.mubr.f32.gmra.mrb[0].mxu0 %v1463
    %v1531 = vpop.f32.mrb[0].mxu0
    %v1532 = vadd.f32 0.0, %v1531
    %v1533 = vpop.f32.mrb[0].mxu0
    %1534 = vdwg.mxu0
    %1537 = vrot.lane.b32.xlu0 %v796, 8
    %v1538 = vpop.permute.xlu0 %1537
    %1539 = vrot.lane.b32.xlu0 %v872, 8
    %v1540 = vpop.permute.xlu0 %1539
    %1545 = vrot.lane.b32.xlu0 %v1126, 16
    %v1546 = vpop.permute.xlu0 %1545
    %1547 = vrot.lane.b32.xlu0 %v1202, 16
    %v1548 = vpop.permute.xlu0 %1547
    %1553 = vrot.lane.b32.xlu0 %v1456, 24
    %v1554 = vpop.permute.xlu0 %1553
    %1555 = vrot.lane.b32.xlu0 %v1532, 24
    %v1556 = vpop.permute.xlu0 %1555
    %v1559 = vsel %vm219, %v466, %v1538
    %v1560 = vsel %vm219, %v542, %v1540
    %vm1561 = vcmask 130048
    %v1562 = vsel %vm1561, %v1559, %v1546
    %v1563 = vsel %vm1561, %v1560, %v1548
    %vm1564 = vcmask 195584
    %v1565 = vsel %vm1564, %v1562, %v1554
    %v1566 = vsel %vm1564, %v1563, %v1556
    %v1567 = vld [vmem:[%s6] sm:$0xf]
    %v1568 = vld [vmem:[%s6 + $0x4] sm:$0xf]
    %v1569 = vld [vmem:[%s6 + $0x8] sm:$0xf]
    %v1570 = vld [vmem:[%s6 + $0xc] sm:$0xf]
    %v1571 = vld [vmem:[%s7] sm:$0x1]
    %v1572 = vpack.c.bf16 %v1566, %v1565
    %v1574 = vlaneseq
    %v1575 = vshrl.u32 %v1574, 7
    %v1576 = vsub.s32 0, %v1575
    %v1577 = vrot.slane %v1571, %v1576
    %v1583 = vunpack.c.l.b16 %v1567
    %v1584 = vunpack.c.l.b16 %v1568
    %v1585 = vunpack.c.l.b16 %v1569
    %v1586 = vunpack.c.l.b16 %v1570
    %v1587 = vpack.c.b16 %v1584, %v1583
    %v1588 = vpack.c.b16 %v1586, %v1585
    %v1592 = vsel %vm77, %v1572, 0
    %1594 = vmatprep.subr.bf16.mxu0 0
    %1595 = vmatpush1.bf16.msra.mxu0 %v1587
    %1596 = vmatprep.subr.bf16.mxu0 0
    %1597 = vmatpush1.bf16.msra.mxu0 %v1588
    %1598 = vmatprep.subr.bf16.mxu0 0
    %1599 = vmatpush1.bf16.msra.mxu0 0
    %1600 = vmatprep.subr.bf16.mxu0 0
    %1601 = vmatpush1.bf16.msra.mxu0 0
    %1602 = vmatprep.subr.bf16.mxu0 0
    %1603 = vmatpush1.bf16.msra.mxu0 0
    %1604 = vmatprep.subr.bf16.mxu0 0
    %1605 = vmatpush1.bf16.msra.mxu0 0
    %1606 = vmatprep.subr.bf16.mxu0 0
    %1607 = vmatpush1.bf16.msra.mxu0 0
    %1608 = vmatprep.subr.bf16.mxu0 0
    %1609 = vmatpush1.bf16.msra.mxu0 0
    %1610 = vmatprep.subr.bf16.mxu0 0
    %1611 = vmatpush1.bf16.msra.mxu0 0
    %1612 = vmatprep.subr.bf16.mxu0 0
    %1613 = vmatpush1.bf16.msra.mxu0 0
    %1614 = vmatprep.subr.bf16.mxu0 0
    %1615 = vmatpush1.bf16.msra.mxu0 0
    %1616 = vmatprep.subr.bf16.mxu0 0
    %1617 = vmatpush1.bf16.msra.mxu0 0
    %1618 = vmatprep.subr.bf16.mxu0 0
    %1619 = vmatpush1.bf16.msra.mxu0 0
    %1620 = vmatprep.subr.bf16.mxu0 0
    %1621 = vmatpush1.bf16.msra.mxu0 0
    %1622 = vmatprep.subr.bf16.mxu0 0
    %1623 = vmatpush1.bf16.msra.mxu0 0
    %1624 = vmatprep.subr.bf16.mxu0 0
    %1625 = vmatpush1.bf16.msra.mxu0 0
    %1626 = vmatprep.mubr.bf16.mxu0 0
    %1627 = vmatmul.mubr.bf16.gmra.mrb[0].mxu0 %v1592
    %v1628 = vpop.f32.mrb[0].mxu0
    %v1629 = vadd.f32 %v1577, %v1628
    %v1630 = vpop.f32.mrb[0].mxu0
    %v1631 = vpop.f32.mrb[0].mxu0
    %v1632 = vadd.f32 %v1577, %v1631
    %v1633 = vpop.f32.mrb[0].mxu0
    %1634 = vdwg.mxu0
    %v1635 = vadd.f32 %v1629, %v119
    %v1636 = vadd.f32 %v1632, %v120
    %v1637 = vld [vmem:[%s8] sm:$0x1]
    %v1638 = vld [vmem:[%s9] sm:$0x1]
    %v1639 = vsel %vm77, %v1635, 0.0
    %1640 = vadd.xlane.f32.xlu0 %v1639
    %v1641 = vpop.xlane.xlu0 %1640
    %v1642 = vsel %vm77, %v1636, 0.0
    %1643 = vadd.xlane.f32.xlu0 %v1642
    %v1644 = vpop.xlane.xlu0 %1643
    %v1645 = vmul.f32 %v1641, %v84
    %v1646 = vmul.f32 %v1644, %v84
    %v1647 = vsub.f32 %v1635, %v1645
    %v1648 = vsub.f32 %v1636, %v1646
    %v1649 = vmul.f32 %v1647, %v1647
    %v1650 = vmul.f32 %v1648, %v1648
    %v1651 = vsel %vm77, %v1649, 0.0
    %1652 = vadd.xlane.f32.xlu0 %v1651
    %v1653 = vpop.xlane.xlu0 %1652
    %v1654 = vsel %vm77, %v1650, 0.0
    %1655 = vadd.xlane.f32.xlu0 %v1654
    %v1656 = vpop.xlane.xlu0 %1655
    %v1657 = vmul.f32 %v1653, %v84
    %v1658 = vmul.f32 %v1656, %v84
    %v1659 = vadd.f32 %v1657, 1e-12
    %v1660 = vadd.f32 %v1658, 1e-12
    %v1661 = vrsqrt.pop %v1659
    %v1662 = vrsqrt.pop %v1660
    %v1663 = vmul.f32 %v1647, %v1661
    %v1664 = vmul.f32 %v1648, %v1662
    %v1666 = vlaneseq
    %v1667 = vshrl.u32 %v1666, 7
    %v1668 = vsub.s32 0, %v1667
    %v1669 = vrot.slane %v1637, %v1668
    %v1671 = vmul.f32 %v1663, %v1669
    %v1672 = vmul.f32 %v1664, %v1669
    %v1674 = vlaneseq
    %v1675 = vshrl.u32 %v1674, 7
    %v1676 = vsub.s32 0, %v1675
    %v1677 = vrot.slane %v1638, %v1676
    %v1679 = vadd.f32 %v1671, %v1677
    %v1680 = vadd.f32 %v1672, %v1677
    %v1681 = vld [vmem:[%s10] sm:$0xf]
    %v1682 = vld [vmem:[%s10 + $0x4] sm:$0xf]
    %v1683 = vld [vmem:[%s10 + $0x8] sm:$0xf]
    %v1684 = vld [vmem:[%s10 + $0xc] sm:$0xf]
    %v1685 = vld [vmem:[%s11] sm:$0x1]
    %v1686 = vpack.c.bf16 %v1680, %v1679
    %v1688 = vlaneseq
    %v1689 = vshrl.u32 %v1688, 7
    %v1690 = vsub.s32 0, %v1689
    %v1691 = vrot.slane %v1685, %v1690
    %v1697 = vunpack.c.l.b16 %v1681
    %v1698 = vunpack.c.l.b16 %v1682
    %v1699 = vunpack.c.l.b16 %v1683
    %v1700 = vunpack.c.l.b16 %v1684
    %v1701 = vpack.c.b16 %v1698, %v1697
    %v1702 = vpack.c.b16 %v1700, %v1699
    %v1706 = vsel %vm77, %v1686, 0
    %1708 = vmatprep.subr.bf16.mxu0 0
    %1709 = vmatpush1.bf16.msra.mxu0 %v1701
    %1710 = vmatprep.subr.bf16.mxu0 0
    %1711 = vmatpush1.bf16.msra.mxu0 %v1702
    %1712 = vmatprep.subr.bf16.mxu0 0
    %1713 = vmatpush1.bf16.msra.mxu0 0
    %1714 = vmatprep.subr.bf16.mxu0 0
    %1715 = vmatpush1.bf16.msra.mxu0 0
    %1716 = vmatprep.subr.bf16.mxu0 0
    %1717 = vmatpush1.bf16.msra.mxu0 0
    %1718 = vmatprep.subr.bf16.mxu0 0
    %1719 = vmatpush1.bf16.msra.mxu0 0
    %1720 = vmatprep.subr.bf16.mxu0 0
    %1721 = vmatpush1.bf16.msra.mxu0 0
    %1722 = vmatprep.subr.bf16.mxu0 0
    %1723 = vmatpush1.bf16.msra.mxu0 0
    %1724 = vmatprep.subr.bf16.mxu0 0
    %1725 = vmatpush1.bf16.msra.mxu0 0
    %1726 = vmatprep.subr.bf16.mxu0 0
    %1727 = vmatpush1.bf16.msra.mxu0 0
    %1728 = vmatprep.subr.bf16.mxu0 0
    %1729 = vmatpush1.bf16.msra.mxu0 0
    %1730 = vmatprep.subr.bf16.mxu0 0
    %1731 = vmatpush1.bf16.msra.mxu0 0
    %1732 = vmatprep.subr.bf16.mxu0 0
    %1733 = vmatpush1.bf16.msra.mxu0 0
    %1734 = vmatprep.subr.bf16.mxu0 0
    %1735 = vmatpush1.bf16.msra.mxu0 0
    %1736 = vmatprep.subr.bf16.mxu0 0
    %1737 = vmatpush1.bf16.msra.mxu0 0
    %1738 = vmatprep.subr.bf16.mxu0 0
    %1739 = vmatpush1.bf16.msra.mxu0 0
    %1740 = vmatprep.mubr.bf16.mxu0 0
    %1741 = vmatmul.mubr.bf16.gmra.mrb[0].mxu0 %v1706
    %v1742 = vpop.f32.mrb[0].mxu0
    %v1743 = vadd.f32 %v1691, %v1742
    %v1744 = vpop.f32.mrb[0].mxu0
    %v1745 = vpop.f32.mrb[0].mxu0
    %v1746 = vadd.f32 %v1691, %v1745
    %v1747 = vpop.f32.mrb[0].mxu0
    %1748 = vdwg.mxu0
    %v1749 = vmul.f32 %v1743, 0.5
    %v1750 = vmul.f32 %v1746, 0.5
    %v1751 = vrcp.pop 1.4142135
    %v1752 = vmul.f32 %v1743, %v1751
    %v1753 = vmul.f32 %v1746, %v1751
    %v1754 = verf.f32.pop %v1752
    %v1755 = verf.f32.pop %v1753
    %v1756 = vadd.f32 %v1754, 1.0
    %v1757 = vadd.f32 %v1755, 1.0
    %v1758 = vmul.f32 %v1749, %v1756
    %v1759 = vmul.f32 %v1750, %v1757
    %v1760 = vld [vmem:[%s12] sm:$0xf]
    %v1761 = vld [vmem:[%s12 + $0x4] sm:$0xf]
    %v1762 = vld [vmem:[%s12 + $0x8] sm:$0xf]
    %v1763 = vld [vmem:[%s12 + $0xc] sm:$0xf]
    %v1764 = vld [vmem:[%s12 + $0x10] sm:$0xf]
    %v1765 = vld [vmem:[%s12 + $0x14] sm:$0xf]
    %v1766 = vld [vmem:[%s12 + $0x18] sm:$0xf]
    %v1767 = vld [vmem:[%s12 + $0x1c] sm:$0xf]
    %v1768 = vld [vmem:[%s13] sm:$0x1]
    %v1769 = vpack.c.bf16 %v1759, %v1758
    %v1771 = vlaneseq
    %v1772 = vshrl.u32 %v1771, 7
    %v1773 = vsub.s32 0, %v1772
    %v1774 = vrot.slane %v1768, %v1773
    %v1784 = vunpack.c.l.b16 %v1760
    %v1785 = vunpack.c.l.b16 %v1761
    %v1786 = vunpack.c.l.b16 %v1762
    %v1787 = vunpack.c.l.b16 %v1763
    %v1788 = vunpack.c.l.b16 %v1764
    %v1789 = vunpack.c.l.b16 %v1765
    %v1790 = vunpack.c.l.b16 %v1766
    %v1791 = vunpack.c.l.b16 %v1767
    %v1792 = vpack.c.b16 %v1785, %v1784
    %v1793 = vpack.c.b16 %v1787, %v1786
    %v1794 = vpack.c.b16 %v1789, %v1788
    %v1795 = vpack.c.b16 %v1791, %v1790
    %vm1800 = vcmask 523264
    %v1802 = vsel %vm1800, %v1769, 0
    %1804 = vmatprep.subr.bf16.mxu0 0
    %1805 = vmatpush1.bf16.msra.mxu0 %v1792
    %1806 = vmatprep.subr.bf16.mxu0 0
    %1807 = vmatpush1.bf16.msra.mxu0 %v1793
    %1808 = vmatprep.subr.bf16.mxu0 0
    %1809 = vmatpush1.bf16.msra.mxu0 %v1794
    %1810 = vmatprep.subr.bf16.mxu0 0
    %1811 = vmatpush1.bf16.msra.mxu0 %v1795
    %1812 = vmatprep.subr.bf16.mxu0 0
    %1813 = vmatpush1.bf16.msra.mxu0 0
    %1814 = vmatprep.subr.bf16.mxu0 0
    %1815 = vmatpush1.bf16.msra.mxu0 0
    %1816 = vmatprep.subr.bf16.mxu0 0
    %1817 = vmatpush1.bf16.msra.mxu0 0
    %1818 = vmatprep.subr.bf16.mxu0 0
    %1819 = vmatpush1.bf16.msra.mxu0 0
    %1820 = vmatprep.subr.bf16.mxu0 0
    %1821 = vmatpush1.bf16.msra.mxu0 0
    %1822 = vmatprep.subr.bf16.mxu0 0
    %1823 = vmatpush1.bf16.msra.mxu0 0
    %1824 = vmatprep.subr.bf16.mxu0 0
    %1825 = vmatpush1.bf16.msra.mxu0 0
    %1826 = vmatprep.subr.bf16.mxu0 0
    %1827 = vmatpush1.bf16.msra.mxu0 0
    %1828 = vmatprep.subr.bf16.mxu0 0
    %1829 = vmatpush1.bf16.msra.mxu0 0
    %1830 = vmatprep.subr.bf16.mxu0 0
    %1831 = vmatpush1.bf16.msra.mxu0 0
    %1832 = vmatprep.subr.bf16.mxu0 0
    %1833 = vmatpush1.bf16.msra.mxu0 0
    %1834 = vmatprep.subr.bf16.mxu0 0
    %1835 = vmatpush1.bf16.msra.mxu0 0
    %1836 = vmatprep.mubr.bf16.mxu0 0
    %1837 = vmatmul.mubr.bf16.gmra.mrb[0].mxu0 %v1802
    %v1838 = vpop.f32.mrb[0].mxu0
    %v1839 = vadd.f32 %v1774, %v1838
    %v1840 = vpop.f32.mrb[0].mxu0
    %v1841 = vpop.f32.mrb[0].mxu0
    %v1842 = vadd.f32 %v1774, %v1841
    %v1843 = vpop.f32.mrb[0].mxu0
    %1844 = vdwg.mxu0
    %v1845 = vadd.f32 %v1839, %v1679
    %v1846 = vadd.f32 %v1842, %v1680
    %v1847 = vld [vmem:[%s14] sm:$0x1]
    %v1848 = vld [vmem:[%s15] sm:$0x1]
    %v1849 = vsel %vm77, %v1845, 0.0
    %1850 = vadd.xlane.f32.xlu0 %v1849
    %v1851 = vpop.xlane.xlu0 %1850
    %v1852 = vsel %vm77, %v1846, 0.0
    %1853 = vadd.xlane.f32.xlu0 %v1852
    %v1854 = vpop.xlane.xlu0 %1853
    %v1855 = vmul.f32 %v1851, %v84
    %v1856 = vmul.f32 %v1854, %v84
    %v1857 = vsub.f32 %v1845, %v1855
    %v1858 = vsub.f32 %v1846, %v1856
    %v1859 = vmul.f32 %v1857, %v1857
    %v1860 = vmul.f32 %v1858, %v1858
    %v1861 = vsel %vm77, %v1859, 0.0
    %1862 = vadd.xlane.f32.xlu0 %v1861
    %v1863 = vpop.xlane.xlu0 %1862
    %v1864 = vsel %vm77, %v1860, 0.0
    %1865 = vadd.xlane.f32.xlu0 %v1864
    %v1866 = vpop.xlane.xlu0 %1865
    %v1867 = vmul.f32 %v1863, %v84
    %v1868 = vmul.f32 %v1866, %v84
    %v1869 = vadd.f32 %v1867, 1e-12
    %v1870 = vadd.f32 %v1868, 1e-12
    %v1871 = vrsqrt.pop %v1869
    %v1872 = vrsqrt.pop %v1870
    %v1873 = vmul.f32 %v1857, %v1871
    %v1874 = vmul.f32 %v1858, %v1872
    %v1876 = vlaneseq
    %v1877 = vshrl.u32 %v1876, 7
    %v1878 = vsub.s32 0, %v1877
    %v1879 = vrot.slane %v1847, %v1878
    %v1881 = vmul.f32 %v1873, %v1879
    %v1882 = vmul.f32 %v1874, %v1879
    %v1884 = vlaneseq
    %v1885 = vshrl.u32 %v1884, 7
    %v1886 = vsub.s32 0, %v1885
    %v1887 = vrot.slane %v1848, %v1886
    %v1889 = vadd.f32 %v1881, %v1887
    %v1890 = vadd.f32 %v1882, %v1887
    %s1891 = scalar_lea.vmem %s4, 16
    %v1892 = vld [vmem:[%s1891] sm:$0xf]
    %v1893 = vld [vmem:[%s1891 + $0x4] sm:$0xf]
    %v1894 = vld [vmem:[%s1891 + $0x8] sm:$0xf]
    %v1895 = vld [vmem:[%s1891 + $0xc] sm:$0xf]
    %s1896 = scalar_lea.vmem %s5, 1
    %v1897 = vld [vmem:[%s1896] sm:$0x1]
    %v1898 = vpack.c.bf16 %v1890, %v1889
    %v1900 = vlaneseq
    %v1901 = vshrl.u32 %v1900, 7
    %v1902 = vsub.s32 0, %v1901
    %v1903 = vrot.slane %v1897, %v1902
    %v1909 = vunpack.c.l.b16 %v1892
    %v1910 = vunpack.c.l.b16 %v1893
    %v1911 = vunpack.c.l.b16 %v1894
    %v1912 = vunpack.c.l.b16 %v1895
    %v1913 = vpack.c.b16 %v1910, %v1909
    %v1914 = vpack.c.b16 %v1912, %v1911
    %v1918 = vsel %vm77, %v1898, 0
    %1920 = vmatprep.subr.bf16.mxu0 0
    %1921 = vmatpush1.bf16.msra.mxu0 %v1913
    %1922 = vmatprep.subr.bf16.mxu0 0
    %1923 = vmatpush1.bf16.msra.mxu0 %v1914
    %1924 = vmatprep.subr.bf16.mxu0 0
    %1925 = vmatpush1.bf16.msra.mxu0 0
    %1926 = vmatprep.subr.bf16.mxu0 0
    %1927 = vmatpush1.bf16.msra.mxu0 0
    %1928 = vmatprep.subr.bf16.mxu0 0
    %1929 = vmatpush1.bf16.msra.mxu0 0
    %1930 = vmatprep.subr.bf16.mxu0 0
    %1931 = vmatpush1.bf16.msra.mxu0 0
    %1932 = vmatprep.subr.bf16.mxu0 0
    %1933 = vmatpush1.bf16.msra.mxu0 0
    %1934 = vmatprep.subr.bf16.mxu0 0
    %1935 = vmatpush1.bf16.msra.mxu0 0
    %1936 = vmatprep.subr.bf16.mxu0 0
    %1937 = vmatpush1.bf16.msra.mxu0 0
    %1938 = vmatprep.subr.bf16.mxu0 0
    %1939 = vmatpush1.bf16.msra.mxu0 0
    %1940 = vmatprep.subr.bf16.mxu0 0
    %1941 = vmatpush1.bf16.msra.mxu0 0
    %1942 = vmatprep.subr.bf16.mxu0 0
    %1943 = vmatpush1.bf16.msra.mxu0 0
    %1944 = vmatprep.subr.bf16.mxu0 0
    %1945 = vmatpush1.bf16.msra.mxu0 0
    %1946 = vmatprep.subr.bf16.mxu0 0
    %1947 = vmatpush1.bf16.msra.mxu0 0
    %1948 = vmatprep.subr.bf16.mxu0 0
    %1949 = vmatpush1.bf16.msra.mxu0 0
    %1950 = vmatprep.subr.bf16.mxu0 0
    %1951 = vmatpush1.bf16.msra.mxu0 0
    %1952 = vmatprep.mubr.bf16.mxu0 0
    %1953 = vmatmul.mubr.bf16.gmra.mrb[0].mxu0 %v1918
    %v1954 = vpop.f32.mrb[0].mxu0
    %v1955 = vadd.f32 %v1903, %v1954
    %v1956 = vpop.f32.mrb[0].mxu0
    %v1957 = vpop.f32.mrb[0].mxu0
    %v1958 = vadd.f32 %v1903, %v1957
    %v1959 = vpop.f32.mrb[0].mxu0
    %1960 = vdwg.mxu0
    %1962 = vrot.lane.b32.xlu0 %v1955, 96
    %v1963 = vpop.permute.xlu0 %1962
    %v1964 = vsel %vm219, %v1955, 0
    %v1966 = vsel %vm219, %v1963, 0
    %1968 = vmatprep.subr.mxu0 0.0
    %1969 = vmatpush1.xpose.msra.mxu0 %v1966
    %1970 = vmatprep.subr.mxu0 0.0
    %1971 = vmatpush1.xpose.msra.mxu0 0.0
    %1972 = vmatprep.subr.mxu0 0.0
    %1973 = vmatpush1.xpose.msra.mxu0 0.0
    %1974 = vmatprep.subr.mxu0 0.0
    %1975 = vmatpush1.xpose.msra.mxu0 0.0
    %1976 = vmatprep.subr.mxu0 0.0
    %1977 = vmatpush1.xpose.msra.mxu0 0.0
    %1978 = vmatprep.subr.mxu0 0.0
    %1979 = vmatpush1.xpose.msra.mxu0 0.0
    %1980 = vmatprep.subr.mxu0 0.0
    %1981 = vmatpush1.xpose.msra.mxu0 0.0
    %1982 = vmatprep.subr.mxu0 0.0
    %1983 = vmatpush1.xpose.msra.mxu0 0.0
    %1984 = vmatprep.subr.mxu0 0.0
    %1985 = vmatpush1.xpose.msra.mxu0 0.0
    %1986 = vmatprep.subr.mxu0 0.0
    %1987 = vmatpush1.xpose.msra.mxu0 0.0
    %1988 = vmatprep.subr.mxu0 0.0
    %1989 = vmatpush1.xpose.msra.mxu0 0.0
    %1990 = vmatprep.subr.mxu0 0.0
    %1991 = vmatpush1.xpose.msra.mxu0 0.0
    %1992 = vmatprep.subr.mxu0 0.0
    %1993 = vmatpush1.xpose.msra.mxu0 0.0
    %1994 = vmatprep.subr.mxu0 0.0
    %1995 = vmatpush1.xpose.msra.mxu0 0.0
    %1996 = vmatprep.subr.mxu0 0.0
    %1997 = vmatpush1.xpose.msra.mxu0 0.0
    %1998 = vmatprep.subr.mxu0 0.0
    %1999 = vmatpush1.xpose.msra.mxu0 0.0
    %2000 = vmatprep.subr.mxu0 0.0
    %2001 = vmatpush1.xpose.msra.mxu0 0.0
    %2002 = vmatprep.subr.mxu0 0.0
    %2003 = vmatpush1.xpose.msra.mxu0 0.0
    %2004 = vmatprep.subr.mxu0 0.0
    %2005 = vmatpush1.xpose.msra.mxu0 0.0
    %2006 = vmatprep.subr.mxu0 0.0
    %2007 = vmatpush1.xpose.msra.mxu0 0.0
    %2008 = vmatprep.subr.mxu0 0.0
    %2009 = vmatpush1.xpose.msra.mxu0 0.0
    %2010 = vmatprep.subr.mxu0 0.0
    %2011 = vmatpush1.xpose.msra.mxu0 0.0
    %2012 = vmatprep.subr.mxu0 0.0
    %2013 = vmatpush1.xpose.msra.mxu0 0.0
    %2014 = vmatprep.subr.mxu0 0.0
    %2015 = vmatpush1.xpose.msra.mxu0 0.0
    %2016 = vmatprep.subr.mxu0 0.0
    %2017 = vmatpush1.xpose.msra.mxu0 0.0
    %2018 = vmatprep.subr.mxu0 0.0
    %2019 = vmatpush1.xpose.msra.mxu0 0.0
    %2020 = vmatprep.subr.mxu0 0.0
    %2021 = vmatpush1.xpose.msra.mxu0 0.0
    %2022 = vmatprep.subr.mxu0 0.0
    %2023 = vmatpush1.xpose.msra.mxu0 0.0
    %2024 = vmatprep.subr.mxu0 0.0
    %2025 = vmatpush1.xpose.msra.mxu0 0.0
    %2026 = vmatprep.subr.mxu0 0.0
    %2027 = vmatpush1.xpose.msra.mxu0 0.0
    %2028 = vmatprep.subr.mxu0 0.0
    %2029 = vmatpush1.xpose.msra.mxu0 0.0
    %2030 = vmatprep.subr.mxu0 0.0
    %2031 = vmatpush1.xpose.msra.mxu0 0.0
    %2032 = vmatprep.mubr.f32.mxu0 0.0
    %2033 = vmatmul.mubr.f32.gmra.mrb[0].mxu0 %v1964
    %v2034 = vpop.f32.mrb[0].mxu0
    %v2035 = vadd.f32 %v146, %v2034
    %v2036 = vpop.f32.mrb[0].mxu0
    %2037 = vdwg.mxu0
    %2039 = vrot.lane.b32.xlu0 %v1958, 96
    %v2040 = vpop.permute.xlu0 %2039
    %v2041 = vsel %vm219, %v1958, 0
    %v2043 = vsel %vm219, %v2040, 0
    %2045 = vmatprep.subr.mxu0 0.0
    %2046 = vmatpush1.xpose.msra.mxu0 %v2043
    %2047 = vmatprep.subr.mxu0 0.0
    %2048 = vmatpush1.xpose.msra.mxu0 0.0
    %2049 = vmatprep.subr.mxu0 0.0
    %2050 = vmatpush1.xpose.msra.mxu0 0.0
    %2051 = vmatprep.subr.mxu0 0.0
    %2052 = vmatpush1.xpose.msra.mxu0 0.0
    %2053 = vmatprep.subr.mxu0 0.0
    %2054 = vmatpush1.xpose.msra.mxu0 0.0
    %2055 = vmatprep.subr.mxu0 0.0
    %2056 = vmatpush1.xpose.msra.mxu0 0.0
    %2057 = vmatprep.subr.mxu0 0.0
    %2058 = vmatpush1.xpose.msra.mxu0 0.0
    %2059 = vmatprep.subr.mxu0 0.0
    %2060 = vmatpush1.xpose.msra.mxu0 0.0
    %2061 = vmatprep.subr.mxu0 0.0
    %2062 = vmatpush1.xpose.msra.mxu0 0.0
    %2063 = vmatprep.subr.mxu0 0.0
    %2064 = vmatpush1.xpose.msra.mxu0 0.0
    %2065 = vmatprep.subr.mxu0 0.0
    %2066 = vmatpush1.xpose.msra.mxu0 0.0
    %2067 = vmatprep.subr.mxu0 0.0
    %2068 = vmatpush1.xpose.msra.mxu0 0.0
    %2069 = vmatprep.subr.mxu0 0.0
    %2070 = vmatpush1.xpose.msra.mxu0 0.0
    %2071 = vmatprep.subr.mxu0 0.0
    %2072 = vmatpush1.xpose.msra.mxu0 0.0
    %2073 = vmatprep.subr.mxu0 0.0
    %2074 = vmatpush1.xpose.msra.mxu0 0.0
    %2075 = vmatprep.subr.mxu0 0.0
    %2076 = vmatpush1.xpose.msra.mxu0 0.0
    %2077 = vmatprep.subr.mxu0 0.0
    %2078 = vmatpush1.xpose.msra.mxu0 0.0
    %2079 = vmatprep.subr.mxu0 0.0
    %2080 = vmatpush1.xpose.msra.mxu0 0.0
    %2081 = vmatprep.subr.mxu0 0.0
    %2082 = vmatpush1.xpose.msra.mxu0 0.0
    %2083 = vmatprep.subr.mxu0 0.0
    %2084 = vmatpush1.xpose.msra.mxu0 0.0
    %2085 = vmatprep.subr.mxu0 0.0
    %2086 = vmatpush1.xpose.msra.mxu0 0.0
    %2087 = vmatprep.subr.mxu0 0.0
    %2088 = vmatpush1.xpose.msra.mxu0 0.0
    %2089 = vmatprep.subr.mxu0 0.0
    %2090 = vmatpush1.xpose.msra.mxu0 0.0
    %2091 = vmatprep.subr.mxu0 0.0
    %2092 = vmatpush1.xpose.msra.mxu0 0.0
    %2093 = vmatprep.subr.mxu0 0.0
    %2094 = vmatpush1.xpose.msra.mxu0 0.0
    %2095 = vmatprep.subr.mxu0 0.0
    %2096 = vmatpush1.xpose.msra.mxu0 0.0
    %2097 = vmatprep.subr.mxu0 0.0
    %2098 = vmatpush1.xpose.msra.mxu0 0.0
    %2099 = vmatprep.subr.mxu0 0.0
    %2100 = vmatpush1.xpose.msra.mxu0 0.0
    %2101 = vmatprep.subr.mxu0 0.0
    %2102 = vmatpush1.xpose.msra.mxu0 0.0
    %2103 = vmatprep.subr.mxu0 0.0
    %2104 = vmatpush1.xpose.msra.mxu0 0.0
    %2105 = vmatprep.subr.mxu0 0.0
    %2106 = vmatpush1.xpose.msra.mxu0 0.0
    %2107 = vmatprep.subr.mxu0 0.0
    %2108 = vmatpush1.xpose.msra.mxu0 0.0
    %2109 = vmatprep.mubr.f32.mxu0 0.0
    %2110 = vmatmul.mubr.f32.gmra.mrb[0].mxu0 %v2041
    %v2111 = vpop.f32.mrb[0].mxu0
    %v2112 = vadd.f32 %v147, %v2111
    %v2113 = vpop.f32.mrb[0].mxu0
    %2114 = vdwg.mxu0
    %v2115 = vsel %vm219, %v2035, -inf
    %2116 = vmax.xlane.f32.xlu0 %v2115
    %v2117 = vpop.xlane.xlu0 %2116
    %v2118 = vsel %vm219, %v2112, -inf
    %2119 = vmax.xlane.f32.xlu0 %v2118
    %v2120 = vpop.xlane.xlu0 %2119
    %v2121 = vsub.f32 %v2035, %v2117
    %v2122 = vsub.f32 %v2112, %v2120
    %v2123 = vmul.f32 %v2121, 1.442695
    %v2124 = vpow.pop %v2123
    %v2125 = vmul.f32 %v2122, 1.442695
    %v2126 = vpow.pop %v2125
    %v2127 = vsel %vm219, %v2124, 0.0
    %2128 = vadd.xlane.f32.xlu0 %v2127
    %v2129 = vpop.xlane.xlu0 %2128
    %v2130 = vsel %vm219, %v2126, 0.0
    %2131 = vadd.xlane.f32.xlu0 %v2130
    %v2132 = vpop.xlane.xlu0 %2131
    %v2133 = vrcp.pop %v2129
    %v2134 = vrcp.pop %v2132
    %v2135 = vmul.f32 %v2124, %v2133
    %v2136 = vmul.f32 %v2126, %v2134
    %2137 = vrot.lane.b32.xlu0 %v1955, 64
    %v2138 = vpop.permute.xlu0 %2137
    %v2141 = vsel %vm219, %v2135, 0
    %2143 = vmatprep.subr.mxu0 0.0
    %2144 = vmatpush1.msra.mxu0 %v2138
    %2145 = vmatprep.subr.mxu0 0.0
    %2146 = vmatpush1.msra.mxu0 0.0
    %2147 = vmatprep.subr.mxu0 0.0
    %2148 = vmatpush1.msra.mxu0 0.0
    %2149 = vmatprep.subr.mxu0 0.0
    %2150 = vmatpush1.msra.mxu0 0.0
    %2151 = vmatprep.subr.mxu0 0.0
    %2152 = vmatpush1.msra.mxu0 0.0
    %2153 = vmatprep.subr.mxu0 0.0
    %2154 = vmatpush1.msra.mxu0 0.0
    %2155 = vmatprep.subr.mxu0 0.0
    %2156 = vmatpush1.msra.mxu0 0.0
    %2157 = vmatprep.subr.mxu0 0.0
    %2158 = vmatpush1.msra.mxu0 0.0
    %2159 = vmatprep.subr.mxu0 0.0
    %2160 = vmatpush1.msra.mxu0 0.0
    %2161 = vmatprep.subr.mxu0 0.0
    %2162 = vmatpush1.msra.mxu0 0.0
    %2163 = vmatprep.subr.mxu0 0.0
    %2164 = vmatpush1.msra.mxu0 0.0
    %2165 = vmatprep.subr.mxu0 0.0
    %2166 = vmatpush1.msra.mxu0 0.0
    %2167 = vmatprep.subr.mxu0 0.0
    %2168 = vmatpush1.msra.mxu0 0.0
    %2169 = vmatprep.subr.mxu0 0.0
    %2170 = vmatpush1.msra.mxu0 0.0
    %2171 = vmatprep.subr.mxu0 0.0
    %2172 = vmatpush1.msra.mxu0 0.0
    %2173 = vmatprep.subr.mxu0 0.0
    %2174 = vmatpush1.msra.mxu0 0.0
    %2175 = vmatprep.subr.mxu0 0.0
    %2176 = vmatpush1.msra.mxu0 0.0
    %2177 = vmatprep.subr.mxu0 0.0
    %2178 = vmatpush1.msra.mxu0 0.0
    %2179 = vmatprep.subr.mxu0 0.0
    %2180 = vmatpush1.msra.mxu0 0.0
    %2181 = vmatprep.subr.mxu0 0.0
    %2182 = vmatpush1.msra.mxu0 0.0
    %2183 = vmatprep.subr.mxu0 0.0
    %2184 = vmatpush1.msra.mxu0 0.0
    %2185 = vmatprep.subr.mxu0 0.0
    %2186 = vmatpush1.msra.mxu0 0.0
    %2187 = vmatprep.subr.mxu0 0.0
    %2188 = vmatpush1.msra.mxu0 0.0
    %2189 = vmatprep.subr.mxu0 0.0
    %2190 = vmatpush1.msra.mxu0 0.0
    %2191 = vmatprep.subr.mxu0 0.0
    %2192 = vmatpush1.msra.mxu0 0.0
    %2193 = vmatprep.subr.mxu0 0.0
    %2194 = vmatpush1.msra.mxu0 0.0
    %2195 = vmatprep.subr.mxu0 0.0
    %2196 = vmatpush1.msra.mxu0 0.0
    %2197 = vmatprep.subr.mxu0 0.0
    %2198 = vmatpush1.msra.mxu0 0.0
    %2199 = vmatprep.subr.mxu0 0.0
    %2200 = vmatpush1.msra.mxu0 0.0
    %2201 = vmatprep.subr.mxu0 0.0
    %2202 = vmatpush1.msra.mxu0 0.0
    %2203 = vmatprep.subr.mxu0 0.0
    %2204 = vmatpush1.msra.mxu0 0.0
    %2205 = vmatprep.subr.mxu0 0.0
    %2206 = vmatpush1.msra.mxu0 0.0
    %2207 = vmatprep.mubr.f32.mxu0 0.0
    %2208 = vmatmul.mubr.f32.gmra.mrb[0].mxu0 %v2141
    %v2209 = vpop.f32.mrb[0].mxu0
    %v2210 = vadd.f32 0.0, %v2209
    %v2211 = vpop.f32.mrb[0].mxu0
    %2212 = vdwg.mxu0
    %2213 = vrot.lane.b32.xlu0 %v1958, 64
    %v2214 = vpop.permute.xlu0 %2213
    %v2217 = vsel %vm219, %v2136, 0
    %2219 = vmatprep.subr.mxu0 0.0
    %2220 = vmatpush1.msra.mxu0 %v2214
    %2221 = vmatprep.subr.mxu0 0.0
    %2222 = vmatpush1.msra.mxu0 0.0
    %2223 = vmatprep.subr.mxu0 0.0
    %2224 = vmatpush1.msra.mxu0 0.0
    %2225 = vmatprep.subr.mxu0 0.0
    %2226 = vmatpush1.msra.mxu0 0.0
    %2227 = vmatprep.subr.mxu0 0.0
    %2228 = vmatpush1.msra.mxu0 0.0
    %2229 = vmatprep.subr.mxu0 0.0
    %2230 = vmatpush1.msra.mxu0 0.0
    %2231 = vmatprep.subr.mxu0 0.0
    %2232 = vmatpush1.msra.mxu0 0.0
    %2233 = vmatprep.subr.mxu0 0.0
    %2234 = vmatpush1.msra.mxu0 0.0
    %2235 = vmatprep.subr.mxu0 0.0
    %2236 = vmatpush1.msra.mxu0 0.0
    %2237 = vmatprep.subr.mxu0 0.0
    %2238 = vmatpush1.msra.mxu0 0.0
    %2239 = vmatprep.subr.mxu0 0.0
    %2240 = vmatpush1.msra.mxu0 0.0
    %2241 = vmatprep.subr.mxu0 0.0
    %2242 = vmatpush1.msra.mxu0 0.0
    %2243 = vmatprep.subr.mxu0 0.0
    %2244 = vmatpush1.msra.mxu0 0.0
    %2245 = vmatprep.subr.mxu0 0.0
    %2246 = vmatpush1.msra.mxu0 0.0
    %2247 = vmatprep.subr.mxu0 0.0
    %2248 = vmatpush1.msra.mxu0 0.0
    %2249 = vmatprep.subr.mxu0 0.0
    %2250 = vmatpush1.msra.mxu0 0.0
    %2251 = vmatprep.subr.mxu0 0.0
    %2252 = vmatpush1.msra.mxu0 0.0
    %2253 = vmatprep.subr.mxu0 0.0
    %2254 = vmatpush1.msra.mxu0 0.0
    %2255 = vmatprep.subr.mxu0 0.0
    %2256 = vmatpush1.msra.mxu0 0.0
    %2257 = vmatprep.subr.mxu0 0.0
    %2258 = vmatpush1.msra.mxu0 0.0
    %2259 = vmatprep.subr.mxu0 0.0
    %2260 = vmatpush1.msra.mxu0 0.0
    %2261 = vmatprep.subr.mxu0 0.0
    %2262 = vmatpush1.msra.mxu0 0.0
    %2263 = vmatprep.subr.mxu0 0.0
    %2264 = vmatpush1.msra.mxu0 0.0
    %2265 = vmatprep.subr.mxu0 0.0
    %2266 = vmatpush1.msra.mxu0 0.0
    %2267 = vmatprep.subr.mxu0 0.0
    %2268 = vmatpush1.msra.mxu0 0.0
    %2269 = vmatprep.subr.mxu0 0.0
    %2270 = vmatpush1.msra.mxu0 0.0
    %2271 = vmatprep.subr.mxu0 0.0
    %2272 = vmatpush1.msra.mxu0 0.0
    %2273 = vmatprep.subr.mxu0 0.0
    %2274 = vmatpush1.msra.mxu0 0.0
    %2275 = vmatprep.subr.mxu0 0.0
    %2276 = vmatpush1.msra.mxu0 0.0
    %2277 = vmatprep.subr.mxu0 0.0
    %2278 = vmatpush1.msra.mxu0 0.0
    %2279 = vmatprep.subr.mxu0 0.0
    %2280 = vmatpush1.msra.mxu0 0.0
    %2281 = vmatprep.subr.mxu0 0.0
    %2282 = vmatpush1.msra.mxu0 0.0
    %2283 = vmatprep.mubr.f32.mxu0 0.0
    %2284 = vmatmul.mubr.f32.gmra.mrb[0].mxu0 %v2217
    %v2285 = vpop.f32.mrb[0].mxu0
    %v2286 = vadd.f32 0.0, %v2285
    %v2287 = vpop.f32.mrb[0].mxu0
    %2288 = vdwg.mxu0
    %2289 = vrot.lane.b32.xlu0 %v1955, 120
    %v2290 = vpop.permute.xlu0 %2289
    %2291 = vrot.lane.b32.xlu0 %v1955, 88
    %v2292 = vpop.permute.xlu0 %2291
    %v2293 = vsel %vm219, %v2290, 0
    %v2295 = vsel %vm219, %v2292, 0
    %2297 = vmatprep.subr.mxu0 0.0
    %2298 = vmatpush1.xpose.msra.mxu0 %v2295
    %2299 = vmatprep.subr.mxu0 0.0
    %2300 = vmatpush1.xpose.msra.mxu0 0.0
    %2301 = vmatprep.subr.mxu0 0.0
    %2302 = vmatpush1.xpose.msra.mxu0 0.0
    %2303 = vmatprep.subr.mxu0 0.0
    %2304 = vmatpush1.xpose.msra.mxu0 0.0
    %2305 = vmatprep.subr.mxu0 0.0
    %2306 = vmatpush1.xpose.msra.mxu0 0.0
    %2307 = vmatprep.subr.mxu0 0.0
    %2308 = vmatpush1.xpose.msra.mxu0 0.0
    %2309 = vmatprep.subr.mxu0 0.0
    %2310 = vmatpush1.xpose.msra.mxu0 0.0
    %2311 = vmatprep.subr.mxu0 0.0
    %2312 = vmatpush1.xpose.msra.mxu0 0.0
    %2313 = vmatprep.subr.mxu0 0.0
    %2314 = vmatpush1.xpose.msra.mxu0 0.0
    %2315 = vmatprep.subr.mxu0 0.0
    %2316 = vmatpush1.xpose.msra.mxu0 0.0
    %2317 = vmatprep.subr.mxu0 0.0
    %2318 = vmatpush1.xpose.msra.mxu0 0.0
    %2319 = vmatprep.subr.mxu0 0.0
    %2320 = vmatpush1.xpose.msra.mxu0 0.0
    %2321 = vmatprep.subr.mxu0 0.0
    %2322 = vmatpush1.xpose.msra.mxu0 0.0
    %2323 = vmatprep.subr.mxu0 0.0
    %2324 = vmatpush1.xpose.msra.mxu0 0.0
    %2325 = vmatprep.subr.mxu0 0.0
    %2326 = vmatpush1.xpose.msra.mxu0 0.0
    %2327 = vmatprep.subr.mxu0 0.0
    %2328 = vmatpush1.xpose.msra.mxu0 0.0
    %2329 = vmatprep.subr.mxu0 0.0
    %2330 = vmatpush1.xpose.msra.mxu0 0.0
    %2331 = vmatprep.subr.mxu0 0.0
    %2332 = vmatpush1.xpose.msra.mxu0 0.0
    %2333 = vmatprep.subr.mxu0 0.0
    %2334 = vmatpush1.xpose.msra.mxu0 0.0
    %2335 = vmatprep.subr.mxu0 0.0
    %2336 = vmatpush1.xpose.msra.mxu0 0.0
    %2337 = vmatprep.subr.mxu0 0.0
    %2338 = vmatpush1.xpose.msra.mxu0 0.0
    %2339 = vmatprep.subr.mxu0 0.0
    %2340 = vmatpush1.xpose.msra.mxu0 0.0
    %2341 = vmatprep.subr.mxu0 0.0
    %2342 = vmatpush1.xpose.msra.mxu0 0.0
    %2343 = vmatprep.subr.mxu0 0.0
    %2344 = vmatpush1.xpose.msra.mxu0 0.0
    %2345 = vmatprep.subr.mxu0 0.0
    %2346 = vmatpush1.xpose.msra.mxu0 0.0
    %2347 = vmatprep.subr.mxu0 0.0
    %2348 = vmatpush1.xpose.msra.mxu0 0.0
    %2349 = vmatprep.subr.mxu0 0.0
    %2350 = vmatpush1.xpose.msra.mxu0 0.0
    %2351 = vmatprep.subr.mxu0 0.0
    %2352 = vmatpush1.xpose.msra.mxu0 0.0
    %2353 = vmatprep.subr.mxu0 0.0
    %2354 = vmatpush1.xpose.msra.mxu0 0.0
    %2355 = vmatprep.subr.mxu0 0.0
    %2356 = vmatpush1.xpose.msra.mxu0 0.0
    %2357 = vmatprep.subr.mxu0 0.0
    %2358 = vmatpush1.xpose.msra.mxu0 0.0
    %2359 = vmatprep.subr.mxu0 0.0
    %2360 = vmatpush1.xpose.msra.mxu0 0.0
    %2361 = vmatprep.mubr.f32.mxu0 0.0
    %2362 = vmatmul.mubr.f32.gmra.mrb[0].mxu0 %v2293
    %v2363 = vpop.f32.mrb[0].mxu0
    %v2364 = vadd.f32 %v146, %v2363
    %v2365 = vpop.f32.mrb[0].mxu0
    %2366 = vdwg.mxu0
    %2367 = vrot.lane.b32.xlu0 %v1958, 120
    %v2368 = vpop.permute.xlu0 %2367
    %2369 = vrot.lane.b32.xlu0 %v1958, 88
    %v2370 = vpop.permute.xlu0 %2369
    %v2371 = vsel %vm219, %v2368, 0
    %v2373 = vsel %vm219, %v2370, 0
    %2375 = vmatprep.subr.mxu0 0.0
    %2376 = vmatpush1.xpose.msra.mxu0 %v2373
    %2377 = vmatprep.subr.mxu0 0.0
    %2378 = vmatpush1.xpose.msra.mxu0 0.0
    %2379 = vmatprep.subr.mxu0 0.0
    %2380 = vmatpush1.xpose.msra.mxu0 0.0
    %2381 = vmatprep.subr.mxu0 0.0
    %2382 = vmatpush1.xpose.msra.mxu0 0.0
    %2383 = vmatprep.subr.mxu0 0.0
    %2384 = vmatpush1.xpose.msra.mxu0 0.0
    %2385 = vmatprep.subr.mxu0 0.0
    %2386 = vmatpush1.xpose.msra.mxu0 0.0
    %2387 = vmatprep.subr.mxu0 0.0
    %2388 = vmatpush1.xpose.msra.mxu0 0.0
    %2389 = vmatprep.subr.mxu0 0.0
    %2390 = vmatpush1.xpose.msra.mxu0 0.0
    %2391 = vmatprep.subr.mxu0 0.0
    %2392 = vmatpush1.xpose.msra.mxu0 0.0
    %2393 = vmatprep.subr.mxu0 0.0
    %2394 = vmatpush1.xpose.msra.mxu0 0.0
    %2395 = vmatprep.subr.mxu0 0.0
    %2396 = vmatpush1.xpose.msra.mxu0 0.0
    %2397 = vmatprep.subr.mxu0 0.0
    %2398 = vmatpush1.xpose.msra.mxu0 0.0
    %2399 = vmatprep.subr.mxu0 0.0
    %2400 = vmatpush1.xpose.msra.mxu0 0.0
    %2401 = vmatprep.subr.mxu0 0.0
    %2402 = vmatpush1.xpose.msra.mxu0 0.0
    %2403 = vmatprep.subr.mxu0 0.0
    %2404 = vmatpush1.xpose.msra.mxu0 0.0
    %2405 = vmatprep.subr.mxu0 0.0
    %2406 = vmatpush1.xpose.msra.mxu0 0.0
    %2407 = vmatprep.subr.mxu0 0.0
    %2408 = vmatpush1.xpose.msra.mxu0 0.0
    %2409 = vmatprep.subr.mxu0 0.0
    %2410 = vmatpush1.xpose.msra.mxu0 0.0
    %2411 = vmatprep.subr.mxu0 0.0
    %2412 = vmatpush1.xpose.msra.mxu0 0.0
    %2413 = vmatprep.subr.mxu0 0.0
    %2414 = vmatpush1.xpose.msra.mxu0 0.0
    %2415 = vmatprep.subr.mxu0 0.0
    %2416 = vmatpush1.xpose.msra.mxu0 0.0
    %2417 = vmatprep.subr.mxu0 0.0
    %2418 = vmatpush1.xpose.msra.mxu0 0.0
    %2419 = vmatprep.subr.mxu0 0.0
    %2420 = vmatpush1.xpose.msra.mxu0 0.0
    %2421 = vmatprep.subr.mxu0 0.0
    %2422 = vmatpush1.xpose.msra.mxu0 0.0
    %2423 = vmatprep.subr.mxu0 0.0
    %2424 = vmatpush1.xpose.msra.mxu0 0.0
    %2425 = vmatprep.subr.mxu0 0.0
    %2426 = vmatpush1.xpose.msra.mxu0 0.0
    %2427 = vmatprep.subr.mxu0 0.0
    %2428 = vmatpush1.xpose.msra.mxu0 0.0
    %2429 = vmatprep.subr.mxu0 0.0
    %2430 = vmatpush1.xpose.msra.mxu0 0.0
    %2431 = vmatprep.subr.mxu0 0.0
    %2432 = vmatpush1.xpose.msra.mxu0 0.0
    %2433 = vmatprep.subr.mxu0 0.0
    %2434 = vmatpush1.xpose.msra.mxu0 0.0
    %2435 = vmatprep.subr.mxu0 0.0
    %2436 = vmatpush1.xpose.msra.mxu0 0.0
    %2437 = vmatprep.subr.mxu0 0.0
    %2438 = vmatpush1.xpose.msra.mxu0 0.0
    %2439 = vmatprep.mubr.f32.mxu0 0.0
    %2440 = vmatmul.mubr.f32.gmra.mrb[0].mxu0 %v2371
    %v2441 = vpop.f32.mrb[0].mxu0
    %v2442 = vadd.f32 %v147, %v2441
    %v2443 = vpop.f32.mrb[0].mxu0
    %2444 = vdwg.mxu0
    %v2445 = vsel %vm219, %v2364, -inf
    %2446 = vmax.xlane.f32.xlu0 %v2445
    %v2447 = vpop.xlane.xlu0 %2446
    %v2448 = vsel %vm219, %v2442, -inf
    %2449 = vmax.xlane.f32.xlu0 %v2448
    %v2450 = vpop.xlane.xlu0 %2449
    %v2451 = vsub.f32 %v2364, %v2447
    %v2452 = vsub.f32 %v2442, %v2450
    %v2453 = vmul.f32 %v2451, 1.442695
    %v2454 = vpow.pop %v2453
    %v2455 = vmul.f32 %v2452, 1.442695
    %v2456 = vpow.pop %v2455
    %v2457 = vsel %vm219, %v2454, 0.0
    %2458 = vadd.xlane.f32.xlu0 %v2457
    %v2459 = vpop.xlane.xlu0 %2458
    %v2460 = vsel %vm219, %v2456, 0.0
    %2461 = vadd.xlane.f32.xlu0 %v2460
    %v2462 = vpop.xlane.xlu0 %2461
    %v2463 = vrcp.pop %v2459
    %v2464 = vrcp.pop %v2462
    %v2465 = vmul.f32 %v2454, %v2463
    %v2466 = vmul.f32 %v2456, %v2464
    %2467 = vrot.lane.b32.xlu0 %v1955, 56
    %v2468 = vpop.permute.xlu0 %2467
    %v2471 = vsel %vm219, %v2465, 0
    %2473 = vmatprep.subr.mxu0 0.0
    %2474 = vmatpush1.msra.mxu0 %v2468
    %2475 = vmatprep.subr.mxu0 0.0
    %2476 = vmatpush1.msra.mxu0 0.0
    %2477 = vmatprep.subr.mxu0 0.0
    %2478 = vmatpush1.msra.mxu0 0.0
    %2479 = vmatprep.subr.mxu0 0.0
    %2480 = vmatpush1.msra.mxu0 0.0
    %2481 = vmatprep.subr.mxu0 0.0
    %2482 = vmatpush1.msra.mxu0 0.0
    %2483 = vmatprep.subr.mxu0 0.0
    %2484 = vmatpush1.msra.mxu0 0.0
    %2485 = vmatprep.subr.mxu0 0.0
    %2486 = vmatpush1.msra.mxu0 0.0
    %2487 = vmatprep.subr.mxu0 0.0
    %2488 = vmatpush1.msra.mxu0 0.0
    %2489 = vmatprep.subr.mxu0 0.0
    %2490 = vmatpush1.msra.mxu0 0.0
    %2491 = vmatprep.subr.mxu0 0.0
    %2492 = vmatpush1.msra.mxu0 0.0
    %2493 = vmatprep.subr.mxu0 0.0
    %2494 = vmatpush1.msra.mxu0 0.0
    %2495 = vmatprep.subr.mxu0 0.0
    %2496 = vmatpush1.msra.mxu0 0.0
    %2497 = vmatprep.subr.mxu0 0.0
    %2498 = vmatpush1.msra.mxu0 0.0
    %2499 = vmatprep.subr.mxu0 0.0
    %2500 = vmatpush1.msra.mxu0 0.0
    %2501 = vmatprep.subr.mxu0 0.0
    %2502 = vmatpush1.msra.mxu0 0.0
    %2503 = vmatprep.subr.mxu0 0.0
    %2504 = vmatpush1.msra.mxu0 0.0
    %2505 = vmatprep.subr.mxu0 0.0
    %2506 = vmatpush1.msra.mxu0 0.0
    %2507 = vmatprep.subr.mxu0 0.0
    %2508 = vmatpush1.msra.mxu0 0.0
    %2509 = vmatprep.subr.mxu0 0.0
    %2510 = vmatpush1.msra.mxu0 0.0
    %2511 = vmatprep.subr.mxu0 0.0
    %2512 = vmatpush1.msra.mxu0 0.0
    %2513 = vmatprep.subr.mxu0 0.0
    %2514 = vmatpush1.msra.mxu0 0.0
    %2515 = vmatprep.subr.mxu0 0.0
    %2516 = vmatpush1.msra.mxu0 0.0
    %2517 = vmatprep.subr.mxu0 0.0
    %2518 = vmatpush1.msra.mxu0 0.0
    %2519 = vmatprep.subr.mxu0 0.0
    %2520 = vmatpush1.msra.mxu0 0.0
    %2521 = vmatprep.subr.mxu0 0.0
    %2522 = vmatpush1.msra.mxu0 0.0
    %2523 = vmatprep.subr.mxu0 0.0
    %2524 = vmatpush1.msra.mxu0 0.0
    %2525 = vmatprep.subr.mxu0 0.0
    %2526 = vmatpush1.msra.mxu0 0.0
    %2527 = vmatprep.subr.mxu0 0.0
    %2528 = vmatpush1.msra.mxu0 0.0
    %2529 = vmatprep.subr.mxu0 0.0
    %2530 = vmatpush1.msra.mxu0 0.0
    %2531 = vmatprep.subr.mxu0 0.0
    %2532 = vmatpush1.msra.mxu0 0.0
    %2533 = vmatprep.subr.mxu0 0.0
    %2534 = vmatpush1.msra.mxu0 0.0
    %2535 = vmatprep.subr.mxu0 0.0
    %2536 = vmatpush1.msra.mxu0 0.0
    %2537 = vmatprep.mubr.f32.mxu0 0.0
    %2538 = vmatmul.mubr.f32.gmra.mrb[0].mxu0 %v2471
    %v2539 = vpop.f32.mrb[0].mxu0
    %v2540 = vadd.f32 0.0, %v2539
    %v2541 = vpop.f32.mrb[0].mxu0
    %2542 = vdwg.mxu0
    %2543 = vrot.lane.b32.xlu0 %v1958, 56
    %v2544 = vpop.permute.xlu0 %2543
    %v2547 = vsel %vm219, %v2466, 0
    %2549 = vmatprep.subr.mxu0 0.0
    %2550 = vmatpush1.msra.mxu0 %v2544
    %2551 = vmatprep.subr.mxu0 0.0
    %2552 = vmatpush1.msra.mxu0 0.0
    %2553 = vmatprep.subr.mxu0 0.0
    %2554 = vmatpush1.msra.mxu0 0.0
    %2555 = vmatprep.subr.mxu0 0.0
    %2556 = vmatpush1.msra.mxu0 0.0
    %2557 = vmatprep.subr.mxu0 0.0
    %2558 = vmatpush1.msra.mxu0 0.0
    %2559 = vmatprep.subr.mxu0 0.0
    %2560 = vmatpush1.msra.mxu0 0.0
    %2561 = vmatprep.subr.mxu0 0.0
    %2562 = vmatpush1.msra.mxu0 0.0
    %2563 = vmatprep.subr.mxu0 0.0
    %2564 = vmatpush1.msra.mxu0 0.0
    %2565 = vmatprep.subr.mxu0 0.0
    %2566 = vmatpush1.msra.mxu0 0.0
    %2567 = vmatprep.subr.mxu0 0.0
    %2568 = vmatpush1.msra.mxu0 0.0
    %2569 = vmatprep.subr.mxu0 0.0
    %2570 = vmatpush1.msra.mxu0 0.0
    %2571 = vmatprep.subr.mxu0 0.0
    %2572 = vmatpush1.msra.mxu0 0.0
    %2573 = vmatprep.subr.mxu0 0.0
    %2574 = vmatpush1.msra.mxu0 0.0
    %2575 = vmatprep.subr.mxu0 0.0
    %2576 = vmatpush1.msra.mxu0 0.0
    %2577 = vmatprep.subr.mxu0 0.0
    %2578 = vmatpush1.msra.mxu0 0.0
    %2579 = vmatprep.subr.mxu0 0.0
    %2580 = vmatpush1.msra.mxu0 0.0
    %2581 = vmatprep.subr.mxu0 0.0
    %2582 = vmatpush1.msra.mxu0 0.0
    %2583 = vmatprep.subr.mxu0 0.0
    %2584 = vmatpush1.msra.mxu0 0.0
    %2585 = vmatprep.subr.mxu0 0.0
    %2586 = vmatpush1.msra.mxu0 0.0
    %2587 = vmatprep.subr.mxu0 0.0
    %2588 = vmatpush1.msra.mxu0 0.0
    %2589 = vmatprep.subr.mxu0 0.0
    %2590 = vmatpush1.msra.mxu0 0.0
    %2591 = vmatprep.subr.mxu0 0.0
    %2592 = vmatpush1.msra.mxu0 0.0
    %2593 = vmatprep.subr.mxu0 0.0
    %2594 = vmatpush1.msra.mxu0 0.0
    %2595 = vmatprep.subr.mxu0 0.0
    %2596 = vmatpush1.msra.mxu0 0.0
    %2597 = vmatprep.subr.mxu0 0.0
    %2598 = vmatpush1.msra.mxu0 0.0
    %2599 = vmatprep.subr.mxu0 0.0
    %2600 = vmatpush1.msra.mxu0 0.0
    %2601 = vmatprep.subr.mxu0 0.0
    %2602 = vmatpush1.msra.mxu0 0.0
    %2603 = vmatprep.subr.mxu0 0.0
    %2604 = vmatpush1.msra.mxu0 0.0
    %2605 = vmatprep.subr.mxu0 0.0
    %2606 = vmatpush1.msra.mxu0 0.0
    %2607 = vmatprep.subr.mxu0 0.0
    %2608 = vmatpush1.msra.mxu0 0.0
    %2609 = vmatprep.subr.mxu0 0.0
    %2610 = vmatpush1.msra.mxu0 0.0
    %2611 = vmatprep.subr.mxu0 0.0
    %2612 = vmatpush1.msra.mxu0 0.0
    %2613 = vmatprep.mubr.f32.mxu0 0.0
    %2614 = vmatmul.mubr.f32.gmra.mrb[0].mxu0 %v2547
    %v2615 = vpop.f32.mrb[0].mxu0
    %v2616 = vadd.f32 0.0, %v2615
    %v2617 = vpop.f32.mrb[0].mxu0
    %2618 = vdwg.mxu0
    %2619 = vrot.lane.b32.xlu0 %v1955, 112
    %v2620 = vpop.permute.xlu0 %2619
    %2621 = vrot.lane.b32.xlu0 %v1955, 80
    %v2622 = vpop.permute.xlu0 %2621
    %v2623 = vsel %vm219, %v2620, 0
    %v2625 = vsel %vm219, %v2622, 0
    %2627 = vmatprep.subr.mxu0 0.0
    %2628 = vmatpush1.xpose.msra.mxu0 %v2625
    %2629 = vmatprep.subr.mxu0 0.0
    %2630 = vmatpush1.xpose.msra.mxu0 0.0
    %2631 = vmatprep.subr.mxu0 0.0
    %2632 = vmatpush1.xpose.msra.mxu0 0.0
    %2633 = vmatprep.subr.mxu0 0.0
    %2634 = vmatpush1.xpose.msra.mxu0 0.0
    %2635 = vmatprep.subr.mxu0 0.0
    %2636 = vmatpush1.xpose.msra.mxu0 0.0
    %2637 = vmatprep.subr.mxu0 0.0
    %2638 = vmatpush1.xpose.msra.mxu0 0.0
    %2639 = vmatprep.subr.mxu0 0.0
    %2640 = vmatpush1.xpose.msra.mxu0 0.0
    %2641 = vmatprep.subr.mxu0 0.0
    %2642 = vmatpush1.xpose.msra.mxu0 0.0
    %2643 = vmatprep.subr.mxu0 0.0
    %2644 = vmatpush1.xpose.msra.mxu0 0.0
    %2645 = vmatprep.subr.mxu0 0.0
    %2646 = vmatpush1.xpose.msra.mxu0 0.0
    %2647 = vmatprep.subr.mxu0 0.0
    %2648 = vmatpush1.xpose.msra.mxu0 0.0
    %2649 = vmatprep.subr.mxu0 0.0
    %2650 = vmatpush1.xpose.msra.mxu0 0.0
    %2651 = vmatprep.subr.mxu0 0.0
    %2652 = vmatpush1.xpose.msra.mxu0 0.0
    %2653 = vmatprep.subr.mxu0 0.0
    %2654 = vmatpush1.xpose.msra.mxu0 0.0
    %2655 = vmatprep.subr.mxu0 0.0
    %2656 = vmatpush1.xpose.msra.mxu0 0.0
    %2657 = vmatprep.subr.mxu0 0.0
    %2658 = vmatpush1.xpose.msra.mxu0 0.0
    %2659 = vmatprep.subr.mxu0 0.0
    %2660 = vmatpush1.xpose.msra.mxu0 0.0
    %2661 = vmatprep.subr.mxu0 0.0
    %2662 = vmatpush1.xpose.msra.mxu0 0.0
    %2663 = vmatprep.subr.mxu0 0.0
    %2664 = vmatpush1.xpose.msra.mxu0 0.0
    %2665 = vmatprep.subr.mxu0 0.0
    %2666 = vmatpush1.xpose.msra.mxu0 0.0
    %2667 = vmatprep.subr.mxu0 0.0
    %2668 = vmatpush1.xpose.msra.mxu0 0.0
    %2669 = vmatprep.subr.mxu0 0.0
    %2670 = vmatpush1.xpose.msra.mxu0 0.0
    %2671 = vmatprep.subr.mxu0 0.0
    %2672 = vmatpush1.xpose.msra.mxu0 0.0
    %2673 = vmatprep.subr.mxu0 0.0
    %2674 = vmatpush1.xpose.msra.mxu0 0.0
    %2675 = vmatprep.subr.mxu0 0.0
    %2676 = vmatpush1.xpose.msra.mxu0 0.0
    %2677 = vmatprep.subr.mxu0 0.0
    %2678 = vmatpush1.xpose.msra.mxu0 0.0
    %2679 = vmatprep.subr.mxu0 0.0
    %2680 = vmatpush1.xpose.msra.mxu0 0.0
    %2681 = vmatprep.subr.mxu0 0.0
    %2682 = vmatpush1.xpose.msra.mxu0 0.0
    %2683 = vmatprep.subr.mxu0 0.0
    %2684 = vmatpush1.xpose.msra.mxu0 0.0
    %2685 = vmatprep.subr.mxu0 0.0
    %2686 = vmatpush1.xpose.msra.mxu0 0.0
    %2687 = vmatprep.subr.mxu0 0.0
    %2688 = vmatpush1.xpose.msra.mxu0 0.0
    %2689 = vmatprep.subr.mxu0 0.0
    %2690 = vmatpush1.xpose.msra.mxu0 0.0
    %2691 = vmatprep.mubr.f32.mxu0 0.0
    %2692 = vmatmul.mubr.f32.gmra.mrb[0].mxu0 %v2623
    %v2693 = vpop.f32.mrb[0].mxu0
    %v2694 = vadd.f32 %v146, %v2693
    %v2695 = vpop.f32.mrb[0].mxu0
    %2696 = vdwg.mxu0
    %2697 = vrot.lane.b32.xlu0 %v1958, 112
    %v2698 = vpop.permute.xlu0 %2697
    %2699 = vrot.lane.b32.xlu0 %v1958, 80
    %v2700 = vpop.permute.xlu0 %2699
    %v2701 = vsel %vm219, %v2698, 0
    %v2703 = vsel %vm219, %v2700, 0
    %2705 = vmatprep.subr.mxu0 0.0
    %2706 = vmatpush1.xpose.msra.mxu0 %v2703
    %2707 = vmatprep.subr.mxu0 0.0
    %2708 = vmatpush1.xpose.msra.mxu0 0.0
    %2709 = vmatprep.subr.mxu0 0.0
    %2710 = vmatpush1.xpose.msra.mxu0 0.0
    %2711 = vmatprep.subr.mxu0 0.0
    %2712 = vmatpush1.xpose.msra.mxu0 0.0
    %2713 = vmatprep.subr.mxu0 0.0
    %2714 = vmatpush1.xpose.msra.mxu0 0.0
    %2715 = vmatprep.subr.mxu0 0.0
    %2716 = vmatpush1.xpose.msra.mxu0 0.0
    %2717 = vmatprep.subr.mxu0 0.0
    %2718 = vmatpush1.xpose.msra.mxu0 0.0
    %2719 = vmatprep.subr.mxu0 0.0
    %2720 = vmatpush1.xpose.msra.mxu0 0.0
    %2721 = vmatprep.subr.mxu0 0.0
    %2722 = vmatpush1.xpose.msra.mxu0 0.0
    %2723 = vmatprep.subr.mxu0 0.0
    %2724 = vmatpush1.xpose.msra.mxu0 0.0
    %2725 = vmatprep.subr.mxu0 0.0
    %2726 = vmatpush1.xpose.msra.mxu0 0.0
    %2727 = vmatprep.subr.mxu0 0.0
    %2728 = vmatpush1.xpose.msra.mxu0 0.0
    %2729 = vmatprep.subr.mxu0 0.0
    %2730 = vmatpush1.xpose.msra.mxu0 0.0
    %2731 = vmatprep.subr.mxu0 0.0
    %2732 = vmatpush1.xpose.msra.mxu0 0.0
    %2733 = vmatprep.subr.mxu0 0.0
    %2734 = vmatpush1.xpose.msra.mxu0 0.0
    %2735 = vmatprep.subr.mxu0 0.0
    %2736 = vmatpush1.xpose.msra.mxu0 0.0
    %2737 = vmatprep.subr.mxu0 0.0
    %2738 = vmatpush1.xpose.msra.mxu0 0.0
    %2739 = vmatprep.subr.mxu0 0.0
    %2740 = vmatpush1.xpose.msra.mxu0 0.0
    %2741 = vmatprep.subr.mxu0 0.0
    %2742 = vmatpush1.xpose.msra.mxu0 0.0
    %2743 = vmatprep.subr.mxu0 0.0
    %2744 = vmatpush1.xpose.msra.mxu0 0.0
    %2745 = vmatprep.subr.mxu0 0.0
    %2746 = vmatpush1.xpose.msra.mxu0 0.0
    %2747 = vmatprep.subr.mxu0 0.0
    %2748 = vmatpush1.xpose.msra.mxu0 0.0
    %2749 = vmatprep.subr.mxu0 0.0
    %2750 = vmatpush1.xpose.msra.mxu0 0.0
    %2751 = vmatprep.subr.mxu0 0.0
    %2752 = vmatpush1.xpose.msra.mxu0 0.0
    %2753 = vmatprep.subr.mxu0 0.0
    %2754 = vmatpush1.xpose.msra.mxu0 0.0
    %2755 = vmatprep.subr.mxu0 0.0
    %2756 = vmatpush1.xpose.msra.mxu0 0.0
    %2757 = vmatprep.subr.mxu0 0.0
    %2758 = vmatpush1.xpose.msra.mxu0 0.0
    %2759 = vmatprep.subr.mxu0 0.0
    %2760 = vmatpush1.xpose.msra.mxu0 0.0
    %2761 = vmatprep.subr.mxu0 0.0
    %2762 = vmatpush1.xpose.msra.mxu0 0.0
    %2763 = vmatprep.subr.mxu0 0.0
    %2764 = vmatpush1.xpose.msra.mxu0 0.0
    %2765 = vmatprep.subr.mxu0 0.0
    %2766 = vmatpush1.xpose.msra.mxu0 0.0
    %2767 = vmatprep.subr.mxu0 0.0
    %2768 = vmatpush1.xpose.msra.mxu0 0.0
    %2769 = vmatprep.mubr.f32.mxu0 0.0
    %2770 = vmatmul.mubr.f32.gmra.mrb[0].mxu0 %v2701
    %v2771 = vpop.f32.mrb[0].mxu0
    %v2772 = vadd.f32 %v147, %v2771
    %v2773 = vpop.f32.mrb[0].mxu0
    %2774 = vdwg.mxu0
    %v2775 = vsel %vm219, %v2694, -inf
    %2776 = vmax.xlane.f32.xlu0 %v2775
    %v2777 = vpop.xlane.xlu0 %2776
    %v2778 = vsel %vm219, %v2772, -inf
    %2779 = vmax.xlane.f32.xlu0 %v2778
    %v2780 = vpop.xlane.xlu0 %2779
    %v2781 = vsub.f32 %v2694, %v2777
    %v2782 = vsub.f32 %v2772, %v2780
    %v2783 = vmul.f32 %v2781, 1.442695
    %v2784 = vpow.pop %v2783
    %v2785 = vmul.f32 %v2782, 1.442695
    %v2786 = vpow.pop %v2785
    %v2787 = vsel %vm219, %v2784, 0.0
    %2788 = vadd.xlane.f32.xlu0 %v2787
    %v2789 = vpop.xlane.xlu0 %2788
    %v2790 = vsel %vm219, %v2786, 0.0
    %2791 = vadd.xlane.f32.xlu0 %v2790
    %v2792 = vpop.xlane.xlu0 %2791
    %v2793 = vrcp.pop %v2789
    %v2794 = vrcp.pop %v2792
    %v2795 = vmul.f32 %v2784, %v2793
    %v2796 = vmul.f32 %v2786, %v2794
    %2797 = vrot.lane.b32.xlu0 %v1955, 48
    %v2798 = vpop.permute.xlu0 %2797
    %v2801 = vsel %vm219, %v2795, 0
    %2803 = vmatprep.subr.mxu0 0.0
    %2804 = vmatpush1.msra.mxu0 %v2798
    %2805 = vmatprep.subr.mxu0 0.0
    %2806 = vmatpush1.msra.mxu0 0.0
    %2807 = vmatprep.subr.mxu0 0.0
    %2808 = vmatpush1.msra.mxu0 0.0
    %2809 = vmatprep.subr.mxu0 0.0
    %2810 = vmatpush1.msra.mxu0 0.0
    %2811 = vmatprep.subr.mxu0 0.0
    %2812 = vmatpush1.msra.mxu0 0.0
    %2813 = vmatprep.subr.mxu0 0.0
    %2814 = vmatpush1.msra.mxu0 0.0
    %2815 = vmatprep.subr.mxu0 0.0
    %2816 = vmatpush1.msra.mxu0 0.0
    %2817 = vmatprep.subr.mxu0 0.0
    %2818 = vmatpush1.msra.mxu0 0.0
    %2819 = vmatprep.subr.mxu0 0.0
    %2820 = vmatpush1.msra.mxu0 0.0
    %2821 = vmatprep.subr.mxu0 0.0
    %2822 = vmatpush1.msra.mxu0 0.0
    %2823 = vmatprep.subr.mxu0 0.0
    %2824 = vmatpush1.msra.mxu0 0.0
    %2825 = vmatprep.subr.mxu0 0.0
    %2826 = vmatpush1.msra.mxu0 0.0
    %2827 = vmatprep.subr.mxu0 0.0
    %2828 = vmatpush1.msra.mxu0 0.0
    %2829 = vmatprep.subr.mxu0 0.0
    %2830 = vmatpush1.msra.mxu0 0.0
    %2831 = vmatprep.subr.mxu0 0.0
    %2832 = vmatpush1.msra.mxu0 0.0
    %2833 = vmatprep.subr.mxu0 0.0
    %2834 = vmatpush1.msra.mxu0 0.0
    %2835 = vmatprep.subr.mxu0 0.0
    %2836 = vmatpush1.msra.mxu0 0.0
    %2837 = vmatprep.subr.mxu0 0.0
    %2838 = vmatpush1.msra.mxu0 0.0
    %2839 = vmatprep.subr.mxu0 0.0
    %2840 = vmatpush1.msra.mxu0 0.0
    %2841 = vmatprep.subr.mxu0 0.0
    %2842 = vmatpush1.msra.mxu0 0.0
    %2843 = vmatprep.subr.mxu0 0.0
    %2844 = vmatpush1.msra.mxu0 0.0
    %2845 = vmatprep.subr.mxu0 0.0
    %2846 = vmatpush1.msra.mxu0 0.0
    %2847 = vmatprep.subr.mxu0 0.0
    %2848 = vmatpush1.msra.mxu0 0.0
    %2849 = vmatprep.subr.mxu0 0.0
    %2850 = vmatpush1.msra.mxu0 0.0
    %2851 = vmatprep.subr.mxu0 0.0
    %2852 = vmatpush1.msra.mxu0 0.0
    %2853 = vmatprep.subr.mxu0 0.0
    %2854 = vmatpush1.msra.mxu0 0.0
    %2855 = vmatprep.subr.mxu0 0.0
    %2856 = vmatpush1.msra.mxu0 0.0
    %2857 = vmatprep.subr.mxu0 0.0
    %2858 = vmatpush1.msra.mxu0 0.0
    %2859 = vmatprep.subr.mxu0 0.0
    %2860 = vmatpush1.msra.mxu0 0.0
    %2861 = vmatprep.subr.mxu0 0.0
    %2862 = vmatpush1.msra.mxu0 0.0
    %2863 = vmatprep.subr.mxu0 0.0
    %2864 = vmatpush1.msra.mxu0 0.0
    %2865 = vmatprep.subr.mxu0 0.0
    %2866 = vmatpush1.msra.mxu0 0.0
    %2867 = vmatprep.mubr.f32.mxu0 0.0
    %2868 = vmatmul.mubr.f32.gmra.mrb[0].mxu0 %v2801
    %v2869 = vpop.f32.mrb[0].mxu0
    %v2870 = vadd.f32 0.0, %v2869
    %v2871 = vpop.f32.mrb[0].mxu0
    %2872 = vdwg.mxu0
    %2873 = vrot.lane.b32.xlu0 %v1958, 48
    %v2874 = vpop.permute.xlu0 %2873
    %v2877 = vsel %vm219, %v2796, 0
    %2879 = vmatprep.subr.mxu0 0.0
    %2880 = vmatpush1.msra.mxu0 %v2874
    %2881 = vmatprep.subr.mxu0 0.0
    %2882 = vmatpush1.msra.mxu0 0.0
    %2883 = vmatprep.subr.mxu0 0.0
    %2884 = vmatpush1.msra.mxu0 0.0
    %2885 = vmatprep.subr.mxu0 0.0
    %2886 = vmatpush1.msra.mxu0 0.0
    %2887 = vmatprep.subr.mxu0 0.0
    %2888 = vmatpush1.msra.mxu0 0.0
    %2889 = vmatprep.subr.mxu0 0.0
    %2890 = vmatpush1.msra.mxu0 0.0
    %2891 = vmatprep.subr.mxu0 0.0
    %2892 = vmatpush1.msra.mxu0 0.0
    %2893 = vmatprep.subr.mxu0 0.0
    %2894 = vmatpush1.msra.mxu0 0.0
    %2895 = vmatprep.subr.mxu0 0.0
    %2896 = vmatpush1.msra.mxu0 0.0
    %2897 = vmatprep.subr.mxu0 0.0
    %2898 = vmatpush1.msra.mxu0 0.0
    %2899 = vmatprep.subr.mxu0 0.0
    %2900 = vmatpush1.msra.mxu0 0.0
    %2901 = vmatprep.subr.mxu0 0.0
    %2902 = vmatpush1.msra.mxu0 0.0
    %2903 = vmatprep.subr.mxu0 0.0
    %2904 = vmatpush1.msra.mxu0 0.0
    %2905 = vmatprep.subr.mxu0 0.0
    %2906 = vmatpush1.msra.mxu0 0.0
    %2907 = vmatprep.subr.mxu0 0.0
    %2908 = vmatpush1.msra.mxu0 0.0
    %2909 = vmatprep.subr.mxu0 0.0
    %2910 = vmatpush1.msra.mxu0 0.0
    %2911 = vmatprep.subr.mxu0 0.0
    %2912 = vmatpush1.msra.mxu0 0.0
    %2913 = vmatprep.subr.mxu0 0.0
    %2914 = vmatpush1.msra.mxu0 0.0
    %2915 = vmatprep.subr.mxu0 0.0
    %2916 = vmatpush1.msra.mxu0 0.0
    %2917 = vmatprep.subr.mxu0 0.0
    %2918 = vmatpush1.msra.mxu0 0.0
    %2919 = vmatprep.subr.mxu0 0.0
    %2920 = vmatpush1.msra.mxu0 0.0
    %2921 = vmatprep.subr.mxu0 0.0
    %2922 = vmatpush1.msra.mxu0 0.0
    %2923 = vmatprep.subr.mxu0 0.0
    %2924 = vmatpush1.msra.mxu0 0.0
    %2925 = vmatprep.subr.mxu0 0.0
    %2926 = vmatpush1.msra.mxu0 0.0
    %2927 = vmatprep.subr.mxu0 0.0
    %2928 = vmatpush1.msra.mxu0 0.0
    %2929 = vmatprep.subr.mxu0 0.0
    %2930 = vmatpush1.msra.mxu0 0.0
    %2931 = vmatprep.subr.mxu0 0.0
    %2932 = vmatpush1.msra.mxu0 0.0
    %2933 = vmatprep.subr.mxu0 0.0
    %2934 = vmatpush1.msra.mxu0 0.0
    %2935 = vmatprep.subr.mxu0 0.0
    %2936 = vmatpush1.msra.mxu0 0.0
    %2937 = vmatprep.subr.mxu0 0.0
    %2938 = vmatpush1.msra.mxu0 0.0
    %2939 = vmatprep.subr.mxu0 0.0
    %2940 = vmatpush1.msra.mxu0 0.0
    %2941 = vmatprep.subr.mxu0 0.0
    %2942 = vmatpush1.msra.mxu0 0.0
    %2943 = vmatprep.mubr.f32.mxu0 0.0
    %2944 = vmatmul.mubr.f32.gmra.mrb[0].mxu0 %v2877
    %v2945 = vpop.f32.mrb[0].mxu0
    %v2946 = vadd.f32 0.0, %v2945
    %v2947 = vpop.f32.mrb[0].mxu0
    %2948 = vdwg.mxu0
    %2949 = vrot.lane.b32.xlu0 %v1955, 104
    %v2950 = vpop.permute.xlu0 %2949
    %2951 = vrot.lane.b32.xlu0 %v1955, 72
    %v2952 = vpop.permute.xlu0 %2951
    %v2953 = vsel %vm219, %v2950, 0
    %v2955 = vsel %vm219, %v2952, 0
    %2957 = vmatprep.subr.mxu0 0.0
    %2958 = vmatpush1.xpose.msra.mxu0 %v2955
    %2959 = vmatprep.subr.mxu0 0.0
    %2960 = vmatpush1.xpose.msra.mxu0 0.0
    %2961 = vmatprep.subr.mxu0 0.0
    %2962 = vmatpush1.xpose.msra.mxu0 0.0
    %2963 = vmatprep.subr.mxu0 0.0
    %2964 = vmatpush1.xpose.msra.mxu0 0.0
    %2965 = vmatprep.subr.mxu0 0.0
    %2966 = vmatpush1.xpose.msra.mxu0 0.0
    %2967 = vmatprep.subr.mxu0 0.0
    %2968 = vmatpush1.xpose.msra.mxu0 0.0
    %2969 = vmatprep.subr.mxu0 0.0
    %2970 = vmatpush1.xpose.msra.mxu0 0.0
    %2971 = vmatprep.subr.mxu0 0.0
    %2972 = vmatpush1.xpose.msra.mxu0 0.0
    %2973 = vmatprep.subr.mxu0 0.0
    %2974 = vmatpush1.xpose.msra.mxu0 0.0
    %2975 = vmatprep.subr.mxu0 0.0
    %2976 = vmatpush1.xpose.msra.mxu0 0.0
    %2977 = vmatprep.subr.mxu0 0.0
    %2978 = vmatpush1.xpose.msra.mxu0 0.0
    %2979 = vmatprep.subr.mxu0 0.0
    %2980 = vmatpush1.xpose.msra.mxu0 0.0
    %2981 = vmatprep.subr.mxu0 0.0
    %2982 = vmatpush1.xpose.msra.mxu0 0.0
    %2983 = vmatprep.subr.mxu0 0.0
    %2984 = vmatpush1.xpose.msra.mxu0 0.0
    %2985 = vmatprep.subr.mxu0 0.0
    %2986 = vmatpush1.xpose.msra.mxu0 0.0
    %2987 = vmatprep.subr.mxu0 0.0
    %2988 = vmatpush1.xpose.msra.mxu0 0.0
    %2989 = vmatprep.subr.mxu0 0.0
    %2990 = vmatpush1.xpose.msra.mxu0 0.0
    %2991 = vmatprep.subr.mxu0 0.0
    %2992 = vmatpush1.xpose.msra.mxu0 0.0
    %2993 = vmatprep.subr.mxu0 0.0
    %2994 = vmatpush1.xpose.msra.mxu0 0.0
    %2995 = vmatprep.subr.mxu0 0.0
    %2996 = vmatpush1.xpose.msra.mxu0 0.0
    %2997 = vmatprep.subr.mxu0 0.0
    %2998 = vmatpush1.xpose.msra.mxu0 0.0
    %2999 = vmatprep.subr.mxu0 0.0
    %3000 = vmatpush1.xpose.msra.mxu0 0.0
    %3001 = vmatprep.subr.mxu0 0.0
    %3002 = vmatpush1.xpose.msra.mxu0 0.0
    %3003 = vmatprep.subr.mxu0 0.0
    %3004 = vmatpush1.xpose.msra.mxu0 0.0
    %3005 = vmatprep.subr.mxu0 0.0
    %3006 = vmatpush1.xpose.msra.mxu0 0.0
    %3007 = vmatprep.subr.mxu0 0.0
    %3008 = vmatpush1.xpose.msra.mxu0 0.0
    %3009 = vmatprep.subr.mxu0 0.0
    %3010 = vmatpush1.xpose.msra.mxu0 0.0
    %3011 = vmatprep.subr.mxu0 0.0
    %3012 = vmatpush1.xpose.msra.mxu0 0.0
    %3013 = vmatprep.subr.mxu0 0.0
    %3014 = vmatpush1.xpose.msra.mxu0 0.0
    %3015 = vmatprep.subr.mxu0 0.0
    %3016 = vmatpush1.xpose.msra.mxu0 0.0
    %3017 = vmatprep.subr.mxu0 0.0
    %3018 = vmatpush1.xpose.msra.mxu0 0.0
    %3019 = vmatprep.subr.mxu0 0.0
    %3020 = vmatpush1.xpose.msra.mxu0 0.0
    %3021 = vmatprep.mubr.f32.mxu0 0.0
    %3022 = vmatmul.mubr.f32.gmra.mrb[0].mxu0 %v2953
    %v3023 = vpop.f32.mrb[0].mxu0
    %v3024 = vadd.f32 %v146, %v3023
    %v3025 = vpop.f32.mrb[0].mxu0
    %3026 = vdwg.mxu0
    %3027 = vrot.lane.b32.xlu0 %v1958, 104
    %v3028 = vpop.permute.xlu0 %3027
    %3029 = vrot.lane.b32.xlu0 %v1958, 72
    %v3030 = vpop.permute.xlu0 %3029
    %v3031 = vsel %vm219, %v3028, 0
    %v3033 = vsel %vm219, %v3030, 0
    %3035 = vmatprep.subr.mxu0 0.0
    %3036 = vmatpush1.xpose.msra.mxu0 %v3033
    %3037 = vmatprep.subr.mxu0 0.0
    %3038 = vmatpush1.xpose.msra.mxu0 0.0
    %3039 = vmatprep.subr.mxu0 0.0
    %3040 = vmatpush1.xpose.msra.mxu0 0.0
    %3041 = vmatprep.subr.mxu0 0.0
    %3042 = vmatpush1.xpose.msra.mxu0 0.0
    %3043 = vmatprep.subr.mxu0 0.0
    %3044 = vmatpush1.xpose.msra.mxu0 0.0
    %3045 = vmatprep.subr.mxu0 0.0
    %3046 = vmatpush1.xpose.msra.mxu0 0.0
    %3047 = vmatprep.subr.mxu0 0.0
    %3048 = vmatpush1.xpose.msra.mxu0 0.0
    %3049 = vmatprep.subr.mxu0 0.0
    %3050 = vmatpush1.xpose.msra.mxu0 0.0
    %3051 = vmatprep.subr.mxu0 0.0
    %3052 = vmatpush1.xpose.msra.mxu0 0.0
    %3053 = vmatprep.subr.mxu0 0.0
    %3054 = vmatpush1.xpose.msra.mxu0 0.0
    %3055 = vmatprep.subr.mxu0 0.0
    %3056 = vmatpush1.xpose.msra.mxu0 0.0
    %3057 = vmatprep.subr.mxu0 0.0
    %3058 = vmatpush1.xpose.msra.mxu0 0.0
    %3059 = vmatprep.subr.mxu0 0.0
    %3060 = vmatpush1.xpose.msra.mxu0 0.0
    %3061 = vmatprep.subr.mxu0 0.0
    %3062 = vmatpush1.xpose.msra.mxu0 0.0
    %3063 = vmatprep.subr.mxu0 0.0
    %3064 = vmatpush1.xpose.msra.mxu0 0.0
    %3065 = vmatprep.subr.mxu0 0.0
    %3066 = vmatpush1.xpose.msra.mxu0 0.0
    %3067 = vmatprep.subr.mxu0 0.0
    %3068 = vmatpush1.xpose.msra.mxu0 0.0
    %3069 = vmatprep.subr.mxu0 0.0
    %3070 = vmatpush1.xpose.msra.mxu0 0.0
    %3071 = vmatprep.subr.mxu0 0.0
    %3072 = vmatpush1.xpose.msra.mxu0 0.0
    %3073 = vmatprep.subr.mxu0 0.0
    %3074 = vmatpush1.xpose.msra.mxu0 0.0
    %3075 = vmatprep.subr.mxu0 0.0
    %3076 = vmatpush1.xpose.msra.mxu0 0.0
    %3077 = vmatprep.subr.mxu0 0.0
    %3078 = vmatpush1.xpose.msra.mxu0 0.0
    %3079 = vmatprep.subr.mxu0 0.0
    %3080 = vmatpush1.xpose.msra.mxu0 0.0
    %3081 = vmatprep.subr.mxu0 0.0
    %3082 = vmatpush1.xpose.msra.mxu0 0.0
    %3083 = vmatprep.subr.mxu0 0.0
    %3084 = vmatpush1.xpose.msra.mxu0 0.0
    %3085 = vmatprep.subr.mxu0 0.0
    %3086 = vmatpush1.xpose.msra.mxu0 0.0
    %3087 = vmatprep.subr.mxu0 0.0
    %3088 = vmatpush1.xpose.msra.mxu0 0.0
    %3089 = vmatprep.subr.mxu0 0.0
    %3090 = vmatpush1.xpose.msra.mxu0 0.0
    %3091 = vmatprep.subr.mxu0 0.0
    %3092 = vmatpush1.xpose.msra.mxu0 0.0
    %3093 = vmatprep.subr.mxu0 0.0
    %3094 = vmatpush1.xpose.msra.mxu0 0.0
    %3095 = vmatprep.subr.mxu0 0.0
    %3096 = vmatpush1.xpose.msra.mxu0 0.0
    %3097 = vmatprep.subr.mxu0 0.0
    %3098 = vmatpush1.xpose.msra.mxu0 0.0
    %3099 = vmatprep.mubr.f32.mxu0 0.0
    %3100 = vmatmul.mubr.f32.gmra.mrb[0].mxu0 %v3031
    %v3101 = vpop.f32.mrb[0].mxu0
    %v3102 = vadd.f32 %v147, %v3101
    %v3103 = vpop.f32.mrb[0].mxu0
    %3104 = vdwg.mxu0
    %v3105 = vsel %vm219, %v3024, -inf
    %3106 = vmax.xlane.f32.xlu0 %v3105
    %v3107 = vpop.xlane.xlu0 %3106
    %v3108 = vsel %vm219, %v3102, -inf
    %3109 = vmax.xlane.f32.xlu0 %v3108
    %v3110 = vpop.xlane.xlu0 %3109
    %v3111 = vsub.f32 %v3024, %v3107
    %v3112 = vsub.f32 %v3102, %v3110
    %v3113 = vmul.f32 %v3111, 1.442695
    %v3114 = vpow.pop %v3113
    %v3115 = vmul.f32 %v3112, 1.442695
    %v3116 = vpow.pop %v3115
    %v3117 = vsel %vm219, %v3114, 0.0
    %3118 = vadd.xlane.f32.xlu0 %v3117
    %v3119 = vpop.xlane.xlu0 %3118
    %v3120 = vsel %vm219, %v3116, 0.0
    %3121 = vadd.xlane.f32.xlu0 %v3120
    %v3122 = vpop.xlane.xlu0 %3121
    %v3123 = vrcp.pop %v3119
    %v3124 = vrcp.pop %v3122
    %v3125 = vmul.f32 %v3114, %v3123
    %v3126 = vmul.f32 %v3116, %v3124
    %3127 = vrot.lane.b32.xlu0 %v1955, 40
    %v3128 = vpop.permute.xlu0 %3127
    %v3131 = vsel %vm219, %v3125, 0
    %3133 = vmatprep.subr.mxu0 0.0
    %3134 = vmatpush1.msra.mxu0 %v3128
    %3135 = vmatprep.subr.mxu0 0.0
    %3136 = vmatpush1.msra.mxu0 0.0
    %3137 = vmatprep.subr.mxu0 0.0
    %3138 = vmatpush1.msra.mxu0 0.0
    %3139 = vmatprep.subr.mxu0 0.0
    %3140 = vmatpush1.msra.mxu0 0.0
    %3141 = vmatprep.subr.mxu0 0.0
    %3142 = vmatpush1.msra.mxu0 0.0
    %3143 = vmatprep.subr.mxu0 0.0
    %3144 = vmatpush1.msra.mxu0 0.0
    %3145 = vmatprep.subr.mxu0 0.0
    %3146 = vmatpush1.msra.mxu0 0.0
    %3147 = vmatprep.subr.mxu0 0.0
    %3148 = vmatpush1.msra.mxu0 0.0
    %3149 = vmatprep.subr.mxu0 0.0
    %3150 = vmatpush1.msra.mxu0 0.0
    %3151 = vmatprep.subr.mxu0 0.0
    %3152 = vmatpush1.msra.mxu0 0.0
    %3153 = vmatprep.subr.mxu0 0.0
    %3154 = vmatpush1.msra.mxu0 0.0
    %3155 = vmatprep.subr.mxu0 0.0
    %3156 = vmatpush1.msra.mxu0 0.0
    %3157 = vmatprep.subr.mxu0 0.0
    %3158 = vmatpush1.msra.mxu0 0.0
    %3159 = vmatprep.subr.mxu0 0.0
    %3160 = vmatpush1.msra.mxu0 0.0
    %3161 = vmatprep.subr.mxu0 0.0
    %3162 = vmatpush1.msra.mxu0 0.0
    %3163 = vmatprep.subr.mxu0 0.0
    %3164 = vmatpush1.msra.mxu0 0.0
    %3165 = vmatprep.subr.mxu0 0.0
    %3166 = vmatpush1.msra.mxu0 0.0
    %3167 = vmatprep.subr.mxu0 0.0
    %3168 = vmatpush1.msra.mxu0 0.0
    %3169 = vmatprep.subr.mxu0 0.0
    %3170 = vmatpush1.msra.mxu0 0.0
    %3171 = vmatprep.subr.mxu0 0.0
    %3172 = vmatpush1.msra.mxu0 0.0
    %3173 = vmatprep.subr.mxu0 0.0
    %3174 = vmatpush1.msra.mxu0 0.0
    %3175 = vmatprep.subr.mxu0 0.0
    %3176 = vmatpush1.msra.mxu0 0.0
    %3177 = vmatprep.subr.mxu0 0.0
    %3178 = vmatpush1.msra.mxu0 0.0
    %3179 = vmatprep.subr.mxu0 0.0
    %3180 = vmatpush1.msra.mxu0 0.0
    %3181 = vmatprep.subr.mxu0 0.0
    %3182 = vmatpush1.msra.mxu0 0.0
    %3183 = vmatprep.subr.mxu0 0.0
    %3184 = vmatpush1.msra.mxu0 0.0
    %3185 = vmatprep.subr.mxu0 0.0
    %3186 = vmatpush1.msra.mxu0 0.0
    %3187 = vmatprep.subr.mxu0 0.0
    %3188 = vmatpush1.msra.mxu0 0.0
    %3189 = vmatprep.subr.mxu0 0.0
    %3190 = vmatpush1.msra.mxu0 0.0
    %3191 = vmatprep.subr.mxu0 0.0
    %3192 = vmatpush1.msra.mxu0 0.0
    %3193 = vmatprep.subr.mxu0 0.0
    %3194 = vmatpush1.msra.mxu0 0.0
    %3195 = vmatprep.subr.mxu0 0.0
    %3196 = vmatpush1.msra.mxu0 0.0
    %3197 = vmatprep.mubr.f32.mxu0 0.0
    %3198 = vmatmul.mubr.f32.gmra.mrb[0].mxu0 %v3131
    %v3199 = vpop.f32.mrb[0].mxu0
    %v3200 = vadd.f32 0.0, %v3199
    %v3201 = vpop.f32.mrb[0].mxu0
    %3202 = vdwg.mxu0
    %3203 = vrot.lane.b32.xlu0 %v1958, 40
    %v3204 = vpop.permute.xlu0 %3203
    %v3207 = vsel %vm219, %v3126, 0
    %3209 = vmatprep.subr.mxu0 0.0
    %3210 = vmatpush1.msra.mxu0 %v3204
    %3211 = vmatprep.subr.mxu0 0.0
    %3212 = vmatpush1.msra.mxu0 0.0
    %3213 = vmatprep.subr.mxu0 0.0
    %3214 = vmatpush1.msra.mxu0 0.0
    %3215 = vmatprep.subr.mxu0 0.0
    %3216 = vmatpush1.msra.mxu0 0.0
    %3217 = vmatprep.subr.mxu0 0.0
    %3218 = vmatpush1.msra.mxu0 0.0
    %3219 = vmatprep.subr.mxu0 0.0
    %3220 = vmatpush1.msra.mxu0 0.0
    %3221 = vmatprep.subr.mxu0 0.0
    %3222 = vmatpush1.msra.mxu0 0.0
    %3223 = vmatprep.subr.mxu0 0.0
    %3224 = vmatpush1.msra.mxu0 0.0
    %3225 = vmatprep.subr.mxu0 0.0
    %3226 = vmatpush1.msra.mxu0 0.0
    %3227 = vmatprep.subr.mxu0 0.0
    %3228 = vmatpush1.msra.mxu0 0.0
    %3229 = vmatprep.subr.mxu0 0.0
    %3230 = vmatpush1.msra.mxu0 0.0
    %3231 = vmatprep.subr.mxu0 0.0
    %3232 = vmatpush1.msra.mxu0 0.0
    %3233 = vmatprep.subr.mxu0 0.0
    %3234 = vmatpush1.msra.mxu0 0.0
    %3235 = vmatprep.subr.mxu0 0.0
    %3236 = vmatpush1.msra.mxu0 0.0
    %3237 = vmatprep.subr.mxu0 0.0
    %3238 = vmatpush1.msra.mxu0 0.0
    %3239 = vmatprep.subr.mxu0 0.0
    %3240 = vmatpush1.msra.mxu0 0.0
    %3241 = vmatprep.subr.mxu0 0.0
    %3242 = vmatpush1.msra.mxu0 0.0
    %3243 = vmatprep.subr.mxu0 0.0
    %3244 = vmatpush1.msra.mxu0 0.0
    %3245 = vmatprep.subr.mxu0 0.0
    %3246 = vmatpush1.msra.mxu0 0.0
    %3247 = vmatprep.subr.mxu0 0.0
    %3248 = vmatpush1.msra.mxu0 0.0
    %3249 = vmatprep.subr.mxu0 0.0
    %3250 = vmatpush1.msra.mxu0 0.0
    %3251 = vmatprep.subr.mxu0 0.0
    %3252 = vmatpush1.msra.mxu0 0.0
    %3253 = vmatprep.subr.mxu0 0.0
    %3254 = vmatpush1.msra.mxu0 0.0
    %3255 = vmatprep.subr.mxu0 0.0
    %3256 = vmatpush1.msra.mxu0 0.0
    %3257 = vmatprep.subr.mxu0 0.0
    %3258 = vmatpush1.msra.mxu0 0.0
    %3259 = vmatprep.subr.mxu0 0.0
    %3260 = vmatpush1.msra.mxu0 0.0
    %3261 = vmatprep.subr.mxu0 0.0
    %3262 = vmatpush1.msra.mxu0 0.0
    %3263 = vmatprep.subr.mxu0 0.0
    %3264 = vmatpush1.msra.mxu0 0.0
    %3265 = vmatprep.subr.mxu0 0.0
    %3266 = vmatpush1.msra.mxu0 0.0
    %3267 = vmatprep.subr.mxu0 0.0
    %3268 = vmatpush1.msra.mxu0 0.0
    %3269 = vmatprep.subr.mxu0 0.0
    %3270 = vmatpush1.msra.mxu0 0.0
    %3271 = vmatprep.subr.mxu0 0.0
    %3272 = vmatpush1.msra.mxu0 0.0
    %3273 = vmatprep.mubr.f32.mxu0 0.0
    %3274 = vmatmul.mubr.f32.gmra.mrb[0].mxu0 %v3207
    %v3275 = vpop.f32.mrb[0].mxu0
    %v3276 = vadd.f32 0.0, %v3275
    %v3277 = vpop.f32.mrb[0].mxu0
    %3278 = vdwg.mxu0
    %3281 = vrot.lane.b32.xlu0 %v2540, 8
    %v3282 = vpop.permute.xlu0 %3281
    %3283 = vrot.lane.b32.xlu0 %v2616, 8
    %v3284 = vpop.permute.xlu0 %3283
    %3289 = vrot.lane.b32.xlu0 %v2870, 16
    %v3290 = vpop.permute.xlu0 %3289
    %3291 = vrot.lane.b32.xlu0 %v2946, 16
    %v3292 = vpop.permute.xlu0 %3291
    %3297 = vrot.lane.b32.xlu0 %v3200, 24
    %v3298 = vpop.permute.xlu0 %3297
    %3299 = vrot.lane.b32.xlu0 %v3276, 24
    %v3300 = vpop.permute.xlu0 %3299
    %v3303 = vsel %vm219, %v2210, %v3282
    %v3304 = vsel %vm219, %v2286, %v3284
    %v3305 = vsel %vm1561, %v3303, %v3290
    %v3306 = vsel %vm1561, %v3304, %v3292
    %v3307 = vsel %vm1564, %v3305, %v3298
    %v3308 = vsel %vm1564, %v3306, %v3300
    %s3309 = scalar_lea.vmem %s6, 16
    %v3310 = vld [vmem:[%s3309] sm:$0xf]
    %v3311 = vld [vmem:[%s3309 + $0x4] sm:$0xf]
    %v3312 = vld [vmem:[%s3309 + $0x8] sm:$0xf]
    %v3313 = vld [vmem:[%s3309 + $0xc] sm:$0xf]
    %s3314 = scalar_lea.vmem %s7, 1
    %v3315 = vld [vmem:[%s3314] sm:$0x1]
    %v3316 = vpack.c.bf16 %v3308, %v3307
    %v3318 = vlaneseq
    %v3319 = vshrl.u32 %v3318, 7
    %v3320 = vsub.s32 0, %v3319
    %v3321 = vrot.slane %v3315, %v3320
    %v3327 = vunpack.c.l.b16 %v3310
    %v3328 = vunpack.c.l.b16 %v3311
    %v3329 = vunpack.c.l.b16 %v3312
    %v3330 = vunpack.c.l.b16 %v3313
    %v3331 = vpack.c.b16 %v3328, %v3327
    %v3332 = vpack.c.b16 %v3330, %v3329
    %v3336 = vsel %vm77, %v3316, 0
    %3338 = vmatprep.subr.bf16.mxu0 0
    %3339 = vmatpush1.bf16.msra.mxu0 %v3331
    %3340 = vmatprep.subr.bf16.mxu0 0
    %3341 = vmatpush1.bf16.msra.mxu0 %v3332
    %3342 = vmatprep.subr.bf16.mxu0 0
    %3343 = vmatpush1.bf16.msra.mxu0 0
    %3344 = vmatprep.subr.bf16.mxu0 0
    %3345 = vmatpush1.bf16.msra.mxu0 0
    %3346 = vmatprep.subr.bf16.mxu0 0
    %3347 = vmatpush1.bf16.msra.mxu0 0
    %3348 = vmatprep.subr.bf16.mxu0 0
    %3349 = vmatpush1.bf16.msra.mxu0 0
    %3350 = vmatprep.subr.bf16.mxu0 0
    %3351 = vmatpush1.bf16.msra.mxu0 0
    %3352 = vmatprep.subr.bf16.mxu0 0
    %3353 = vmatpush1.bf16.msra.mxu0 0
    %3354 = vmatprep.subr.bf16.mxu0 0
    %3355 = vmatpush1.bf16.msra.mxu0 0
    %3356 = vmatprep.subr.bf16.mxu0 0
    %3357 = vmatpush1.bf16.msra.mxu0 0
    %3358 = vmatprep.subr.bf16.mxu0 0
    %3359 = vmatpush1.bf16.msra.mxu0 0
    %3360 = vmatprep.subr.bf16.mxu0 0
    %3361 = vmatpush1.bf16.msra.mxu0 0
    %3362 = vmatprep.subr.bf16.mxu0 0
    %3363 = vmatpush1.bf16.msra.mxu0 0
    %3364 = vmatprep.subr.bf16.mxu0 0
    %3365 = vmatpush1.bf16.msra.mxu0 0
    %3366 = vmatprep.subr.bf16.mxu0 0
    %3367 = vmatpush1.bf16.msra.mxu0 0
    %3368 = vmatprep.subr.bf16.mxu0 0
    %3369 = vmatpush1.bf16.msra.mxu0 0
    %3370 = vmatprep.mubr.bf16.mxu0 0
    %3371 = vmatmul.mubr.bf16.gmra.mrb[0].mxu0 %v3336
    %v3372 = vpop.f32.mrb[0].mxu0
    %v3373 = vadd.f32 %v3321, %v3372
    %v3374 = vpop.f32.mrb[0].mxu0
    %v3375 = vpop.f32.mrb[0].mxu0
    %v3376 = vadd.f32 %v3321, %v3375
    %v3377 = vpop.f32.mrb[0].mxu0
    %3378 = vdwg.mxu0
    %v3379 = vadd.f32 %v3373, %v1889
    %v3380 = vadd.f32 %v3376, %v1890
    %s3381 = scalar_lea.vmem %s8, 1
    %v3382 = vld [vmem:[%s3381] sm:$0x1]
    %s3383 = scalar_lea.vmem %s9, 1
    %v3384 = vld [vmem:[%s3383] sm:$0x1]
    %v3385 = vsel %vm77, %v3379, 0.0
    %3386 = vadd.xlane.f32.xlu0 %v3385
    %v3387 = vpop.xlane.xlu0 %3386
    %v3388 = vsel %vm77, %v3380, 0.0
    %3389 = vadd.xlane.f32.xlu0 %v3388
    %v3390 = vpop.xlane.xlu0 %3389
    %v3391 = vmul.f32 %v3387, %v84
    %v3392 = vmul.f32 %v3390, %v84
    %v3393 = vsub.f32 %v3379, %v3391
    %v3394 = vsub.f32 %v3380, %v3392
    %v3395 = vmul.f32 %v3393, %v3393
    %v3396 = vmul.f32 %v3394, %v3394
    %v3397 = vsel %vm77, %v3395, 0.0
    %3398 = vadd.xlane.f32.xlu0 %v3397
    %v3399 = vpop.xlane.xlu0 %3398
    %v3400 = vsel %vm77, %v3396, 0.0
    %3401 = vadd.xlane.f32.xlu0 %v3400
    %v3402 = vpop.xlane.xlu0 %3401
    %v3403 = vmul.f32 %v3399, %v84
    %v3404 = vmul.f32 %v3402, %v84
    %v3405 = vadd.f32 %v3403, 1e-12
    %v3406 = vadd.f32 %v3404, 1e-12
    %v3407 = vrsqrt.pop %v3405
    %v3408 = vrsqrt.pop %v3406
    %v3409 = vmul.f32 %v3393, %v3407
    %v3410 = vmul.f32 %v3394, %v3408
    %v3412 = vlaneseq
    %v3413 = vshrl.u32 %v3412, 7
    %v3414 = vsub.s32 0, %v3413
    %v3415 = vrot.slane %v3382, %v3414
    %v3417 = vmul.f32 %v3409, %v3415
    %v3418 = vmul.f32 %v3410, %v3415
    %v3420 = vlaneseq
    %v3421 = vshrl.u32 %v3420, 7
    %v3422 = vsub.s32 0, %v3421
    %v3423 = vrot.slane %v3384, %v3422
    %v3425 = vadd.f32 %v3417, %v3423
    %v3426 = vadd.f32 %v3418, %v3423
    %s3427 = scalar_lea.vmem %s10, 16
    %v3428 = vld [vmem:[%s3427] sm:$0xf]
    %v3429 = vld [vmem:[%s3427 + $0x4] sm:$0xf]
    %v3430 = vld [vmem:[%s3427 + $0x8] sm:$0xf]
    %v3431 = vld [vmem:[%s3427 + $0xc] sm:$0xf]
    %s3432 = scalar_lea.vmem %s11, 1
    %v3433 = vld [vmem:[%s3432] sm:$0x1]
    %v3434 = vpack.c.bf16 %v3426, %v3425
    %v3436 = vlaneseq
    %v3437 = vshrl.u32 %v3436, 7
    %v3438 = vsub.s32 0, %v3437
    %v3439 = vrot.slane %v3433, %v3438
    %v3445 = vunpack.c.l.b16 %v3428
    %v3446 = vunpack.c.l.b16 %v3429
    %v3447 = vunpack.c.l.b16 %v3430
    %v3448 = vunpack.c.l.b16 %v3431
    %v3449 = vpack.c.b16 %v3446, %v3445
    %v3450 = vpack.c.b16 %v3448, %v3447
    %v3454 = vsel %vm77, %v3434, 0
    %3456 = vmatprep.subr.bf16.mxu0 0
    %3457 = vmatpush1.bf16.msra.mxu0 %v3449
    %3458 = vmatprep.subr.bf16.mxu0 0
    %3459 = vmatpush1.bf16.msra.mxu0 %v3450
    %3460 = vmatprep.subr.bf16.mxu0 0
    %3461 = vmatpush1.bf16.msra.mxu0 0
    %3462 = vmatprep.subr.bf16.mxu0 0
    %3463 = vmatpush1.bf16.msra.mxu0 0
    %3464 = vmatprep.subr.bf16.mxu0 0
    %3465 = vmatpush1.bf16.msra.mxu0 0
    %3466 = vmatprep.subr.bf16.mxu0 0
    %3467 = vmatpush1.bf16.msra.mxu0 0
    %3468 = vmatprep.subr.bf16.mxu0 0
    %3469 = vmatpush1.bf16.msra.mxu0 0
    %3470 = vmatprep.subr.bf16.mxu0 0
    %3471 = vmatpush1.bf16.msra.mxu0 0
    %3472 = vmatprep.subr.bf16.mxu0 0
    %3473 = vmatpush1.bf16.msra.mxu0 0
    %3474 = vmatprep.subr.bf16.mxu0 0
    %3475 = vmatpush1.bf16.msra.mxu0 0
    %3476 = vmatprep.subr.bf16.mxu0 0
    %3477 = vmatpush1.bf16.msra.mxu0 0
    %3478 = vmatprep.subr.bf16.mxu0 0
    %3479 = vmatpush1.bf16.msra.mxu0 0
    %3480 = vmatprep.subr.bf16.mxu0 0
    %3481 = vmatpush1.bf16.msra.mxu0 0
    %3482 = vmatprep.subr.bf16.mxu0 0
    %3483 = vmatpush1.bf16.msra.mxu0 0
    %3484 = vmatprep.subr.bf16.mxu0 0
    %3485 = vmatpush1.bf16.msra.mxu0 0
    %3486 = vmatprep.subr.bf16.mxu0 0
    %3487 = vmatpush1.bf16.msra.mxu0 0
    %3488 = vmatprep.mubr.bf16.mxu0 0
    %3489 = vmatmul.mubr.bf16.gmra.mrb[0].mxu0 %v3454
    %v3490 = vpop.f32.mrb[0].mxu0
    %v3491 = vadd.f32 %v3439, %v3490
    %v3492 = vpop.f32.mrb[0].mxu0
    %v3493 = vpop.f32.mrb[0].mxu0
    %v3494 = vadd.f32 %v3439, %v3493
    %v3495 = vpop.f32.mrb[0].mxu0
    %3496 = vdwg.mxu0
    %v3497 = vmul.f32 %v3491, 0.5
    %v3498 = vmul.f32 %v3494, 0.5
    %v3499 = vmul.f32 %v3491, %v1751
    %v3500 = vmul.f32 %v3494, %v1751
    %v3501 = verf.f32.pop %v3499
    %v3502 = verf.f32.pop %v3500
    %v3503 = vadd.f32 %v3501, 1.0
    %v3504 = vadd.f32 %v3502, 1.0
    %v3505 = vmul.f32 %v3497, %v3503
    %v3506 = vmul.f32 %v3498, %v3504
    %s3507 = scalar_lea.vmem %s12, 32
    %v3508 = vld [vmem:[%s3507] sm:$0xf]
    %v3509 = vld [vmem:[%s3507 + $0x4] sm:$0xf]
    %v3510 = vld [vmem:[%s3507 + $0x8] sm:$0xf]
    %v3511 = vld [vmem:[%s3507 + $0xc] sm:$0xf]
    %v3512 = vld [vmem:[%s3507 + $0x10] sm:$0xf]
    %v3513 = vld [vmem:[%s3507 + $0x14] sm:$0xf]
    %v3514 = vld [vmem:[%s3507 + $0x18] sm:$0xf]
    %v3515 = vld [vmem:[%s3507 + $0x1c] sm:$0xf]
    %s3516 = scalar_lea.vmem %s13, 1
    %v3517 = vld [vmem:[%s3516] sm:$0x1]
    %v3518 = vpack.c.bf16 %v3506, %v3505
    %v3520 = vlaneseq
    %v3521 = vshrl.u32 %v3520, 7
    %v3522 = vsub.s32 0, %v3521
    %v3523 = vrot.slane %v3517, %v3522
    %v3533 = vunpack.c.l.b16 %v3508
    %v3534 = vunpack.c.l.b16 %v3509
    %v3535 = vunpack.c.l.b16 %v3510
    %v3536 = vunpack.c.l.b16 %v3511
    %v3537 = vunpack.c.l.b16 %v3512
    %v3538 = vunpack.c.l.b16 %v3513
    %v3539 = vunpack.c.l.b16 %v3514
    %v3540 = vunpack.c.l.b16 %v3515
    %v3541 = vpack.c.b16 %v3534, %v3533
    %v3542 = vpack.c.b16 %v3536, %v3535
    %v3543 = vpack.c.b16 %v3538, %v3537
    %v3544 = vpack.c.b16 %v3540, %v3539
    %v3550 = vsel %vm1800, %v3518, 0
    %3552 = vmatprep.subr.bf16.mxu0 0
    %3553 = vmatpush1.bf16.msra.mxu0 %v3541
    %3554 = vmatprep.subr.bf16.mxu0 0
    %3555 = vmatpush1.bf16.msra.mxu0 %v3542
    %3556 = vmatprep.subr.bf16.mxu0 0
    %3557 = vmatpush1.bf16.msra.mxu0 %v3543
    %3558 = vmatprep.subr.bf16.mxu0 0
    %3559 = vmatpush1.bf16.msra.mxu0 %v3544
    %3560 = vmatprep.subr.bf16.mxu0 0
    %3561 = vmatpush1.bf16.msra.mxu0 0
    %3562 = vmatprep.subr.bf16.mxu0 0
    %3563 = vmatpush1.bf16.msra.mxu0 0
    %3564 = vmatprep.subr.bf16.mxu0 0
    %3565 = vmatpush1.bf16.msra.mxu0 0
    %3566 = vmatprep.subr.bf16.mxu0 0
    %3567 = vmatpush1.bf16.msra.mxu0 0
    %3568 = vmatprep.subr.bf16.mxu0 0
    %3569 = vmatpush1.bf16.msra.mxu0 0
    %3570 = vmatprep.subr.bf16.mxu0 0
    %3571 = vmatpush1.bf16.msra.mxu0 0
    %3572 = vmatprep.subr.bf16.mxu0 0
    %3573 = vmatpush1.bf16.msra.mxu0 0
    %3574 = vmatprep.subr.bf16.mxu0 0
    %3575 = vmatpush1.bf16.msra.mxu0 0
    %3576 = vmatprep.subr.bf16.mxu0 0
    %3577 = vmatpush1.bf16.msra.mxu0 0
    %3578 = vmatprep.subr.bf16.mxu0 0
    %3579 = vmatpush1.bf16.msra.mxu0 0
    %3580 = vmatprep.subr.bf16.mxu0 0
    %3581 = vmatpush1.bf16.msra.mxu0 0
    %3582 = vmatprep.subr.bf16.mxu0 0
    %3583 = vmatpush1.bf16.msra.mxu0 0
    %3584 = vmatprep.mubr.bf16.mxu0 0
    %3585 = vmatmul.mubr.bf16.gmra.mrb[0].mxu0 %v3550
    %v3586 = vpop.f32.mrb[0].mxu0
    %v3587 = vadd.f32 %v3523, %v3586
    %v3588 = vpop.f32.mrb[0].mxu0
    %v3589 = vpop.f32.mrb[0].mxu0
    %v3590 = vadd.f32 %v3523, %v3589
    %v3591 = vpop.f32.mrb[0].mxu0
    %3592 = vdwg.mxu0
    %v3593 = vadd.f32 %v3587, %v3425
    %v3594 = vadd.f32 %v3590, %v3426
    %s3595 = scalar_lea.vmem %s14, 1
    %v3596 = vld [vmem:[%s3595] sm:$0x1]
    %s3597 = scalar_lea.vmem %s15, 1
    %v3598 = vld [vmem:[%s3597] sm:$0x1]
    %v3599 = vsel %vm77, %v3593, 0.0
    %3600 = vadd.xlane.f32.xlu0 %v3599
    %v3601 = vpop.xlane.xlu0 %3600
    %v3602 = vsel %vm77, %v3594, 0.0
    %3603 = vadd.xlane.f32.xlu0 %v3602
    %v3604 = vpop.xlane.xlu0 %3603
    %v3605 = vmul.f32 %v3601, %v84
    %v3606 = vmul.f32 %v3604, %v84
    %v3607 = vsub.f32 %v3593, %v3605
    %v3608 = vsub.f32 %v3594, %v3606
    %v3609 = vmul.f32 %v3607, %v3607
    %v3610 = vmul.f32 %v3608, %v3608
    %v3611 = vsel %vm77, %v3609, 0.0
    %3612 = vadd.xlane.f32.xlu0 %v3611
    %v3613 = vpop.xlane.xlu0 %3612
    %v3614 = vsel %vm77, %v3610, 0.0
    %3615 = vadd.xlane.f32.xlu0 %v3614
    %v3616 = vpop.xlane.xlu0 %3615
    %v3617 = vmul.f32 %v3613, %v84
    %v3618 = vmul.f32 %v3616, %v84
    %v3619 = vadd.f32 %v3617, 1e-12
    %v3620 = vadd.f32 %v3618, 1e-12
    %v3621 = vrsqrt.pop %v3619
    %v3622 = vrsqrt.pop %v3620
    %v3623 = vmul.f32 %v3607, %v3621
    %v3624 = vmul.f32 %v3608, %v3622
    %v3626 = vlaneseq
    %v3627 = vshrl.u32 %v3626, 7
    %v3628 = vsub.s32 0, %v3627
    %v3629 = vrot.slane %v3596, %v3628
    %v3631 = vmul.f32 %v3623, %v3629
    %v3632 = vmul.f32 %v3624, %v3629
    %v3634 = vlaneseq
    %v3635 = vshrl.u32 %v3634, 7
    %v3636 = vsub.s32 0, %v3635
    %v3637 = vrot.slane %v3598, %v3636
    %v3639 = vadd.f32 %v3631, %v3637
    %v3640 = vadd.f32 %v3632, %v3637
    %v3641 = vld [vmem:[%s16] sm:$0xf]
    %v3642 = vld [vmem:[%s16 + $0x4] sm:$0xf]
    %v3643 = vld [vmem:[%s16 + $0x8] sm:$0xf]
    %v3644 = vld [vmem:[%s16 + $0xc] sm:$0xf]
    %v3645 = vld [vmem:[%s17] sm:$0x1]
    %v3646 = vpack.c.bf16 %v3640, %v3639
    %v3648 = vlaneseq
    %v3649 = vshrl.u32 %v3648, 7
    %v3650 = vsub.s32 0, %v3649
    %v3651 = vrot.slane %v3645, %v3650
    %v3657 = vunpack.c.l.b16 %v3641
    %v3658 = vunpack.c.l.b16 %v3642
    %v3659 = vunpack.c.l.b16 %v3643
    %v3660 = vunpack.c.l.b16 %v3644
    %v3661 = vpack.c.b16 %v3658, %v3657
    %v3662 = vpack.c.b16 %v3660, %v3659
    %v3666 = vsel %vm77, %v3646, 0
    %3668 = vmatprep.subr.bf16.mxu0 0
    %3669 = vmatpush1.bf16.msra.mxu0 %v3661
    %3670 = vmatprep.subr.bf16.mxu0 0
    %3671 = vmatpush1.bf16.msra.mxu0 %v3662
    %3672 = vmatprep.subr.bf16.mxu0 0
    %3673 = vmatpush1.bf16.msra.mxu0 0
    %3674 = vmatprep.subr.bf16.mxu0 0
    %3675 = vmatpush1.bf16.msra.mxu0 0
    %3676 = vmatprep.subr.bf16.mxu0 0
    %3677 = vmatpush1.bf16.msra.mxu0 0
    %3678 = vmatprep.subr.bf16.mxu0 0
    %3679 = vmatpush1.bf16.msra.mxu0 0
    %3680 = vmatprep.subr.bf16.mxu0 0
    %3681 = vmatpush1.bf16.msra.mxu0 0
    %3682 = vmatprep.subr.bf16.mxu0 0
    %3683 = vmatpush1.bf16.msra.mxu0 0
    %3684 = vmatprep.subr.bf16.mxu0 0
    %3685 = vmatpush1.bf16.msra.mxu0 0
    %3686 = vmatprep.subr.bf16.mxu0 0
    %3687 = vmatpush1.bf16.msra.mxu0 0
    %3688 = vmatprep.subr.bf16.mxu0 0
    %3689 = vmatpush1.bf16.msra.mxu0 0
    %3690 = vmatprep.subr.bf16.mxu0 0
    %3691 = vmatpush1.bf16.msra.mxu0 0
    %3692 = vmatprep.subr.bf16.mxu0 0
    %3693 = vmatpush1.bf16.msra.mxu0 0
    %3694 = vmatprep.subr.bf16.mxu0 0
    %3695 = vmatpush1.bf16.msra.mxu0 0
    %3696 = vmatprep.subr.bf16.mxu0 0
    %3697 = vmatpush1.bf16.msra.mxu0 0
    %3698 = vmatprep.subr.bf16.mxu0 0
    %3699 = vmatpush1.bf16.msra.mxu0 0
    %3700 = vmatprep.mubr.bf16.mxu0 0
    %3701 = vmatmul.mubr.bf16.gmra.mrb[0].mxu0 %v3666
    %v3702 = vpop.f32.mrb[0].mxu0
    %v3703 = vadd.f32 %v3651, %v3702
    %v3704 = vpop.f32.mrb[0].mxu0
    %v3705 = vpop.f32.mrb[0].mxu0
    %v3706 = vadd.f32 %v3651, %v3705
    %v3707 = vpop.f32.mrb[0].mxu0
    %3708 = vdwg.mxu0
    %v3709 = vmul.f32 %v3703, 0.5
    %v3710 = vmul.f32 %v3706, 0.5
    %v3711 = vmul.f32 %v3703, %v1751
    %v3712 = vmul.f32 %v3706, %v1751
    %v3713 = verf.f32.pop %v3711
    %v3714 = verf.f32.pop %v3712
    %v3715 = vadd.f32 %v3713, 1.0
    %v3716 = vadd.f32 %v3714, 1.0
    %v3717 = vmul.f32 %v3709, %v3715
    %v3718 = vmul.f32 %v3710, %v3716
    %v3719 = vld [vmem:[%s18] sm:$0x1]
    %v3720 = vld [vmem:[%s19] sm:$0x1]
    %v3721 = vsel %vm77, %v3717, 0.0
    %3722 = vadd.xlane.f32.xlu0 %v3721
    %v3723 = vpop.xlane.xlu0 %3722
    %v3724 = vsel %vm77, %v3718, 0.0
    %3725 = vadd.xlane.f32.xlu0 %v3724
    %v3726 = vpop.xlane.xlu0 %3725
    %v3727 = vmul.f32 %v3723, %v84
    %v3728 = vmul.f32 %v3726, %v84
    %v3729 = vsub.f32 %v3717, %v3727
    %v3730 = vsub.f32 %v3718, %v3728
    %v3731 = vmul.f32 %v3729, %v3729
    %v3732 = vmul.f32 %v3730, %v3730
    %v3733 = vsel %vm77, %v3731, 0.0
    %3734 = vadd.xlane.f32.xlu0 %v3733
    %v3735 = vpop.xlane.xlu0 %3734
    %v3736 = vsel %vm77, %v3732, 0.0
    %3737 = vadd.xlane.f32.xlu0 %v3736
    %v3738 = vpop.xlane.xlu0 %3737
    %v3739 = vmul.f32 %v3735, %v84
    %v3740 = vmul.f32 %v3738, %v84
    %v3741 = vadd.f32 %v3739, 1e-12
    %v3742 = vadd.f32 %v3740, 1e-12
    %v3743 = vrsqrt.pop %v3741
    %v3744 = vrsqrt.pop %v3742
    %v3745 = vmul.f32 %v3729, %v3743
    %v3746 = vmul.f32 %v3730, %v3744
    %v3748 = vlaneseq
    %v3749 = vshrl.u32 %v3748, 7
    %v3750 = vsub.s32 0, %v3749
    %v3751 = vrot.slane %v3719, %v3750
    %v3753 = vmul.f32 %v3745, %v3751
    %v3754 = vmul.f32 %v3746, %v3751
    %v3756 = vlaneseq
    %v3757 = vshrl.u32 %v3756, 7
    %v3758 = vsub.s32 0, %v3757
    %v3759 = vrot.slane %v3720, %v3758
    %v3761 = vadd.f32 %v3753, %v3759
    %v3762 = vadd.f32 %v3754, %v3759
    %v3763 = vld [vmem:[%s20] sm:$0xf]
    %v3764 = vld [vmem:[%s20 + $0x4] sm:$0xf]
    %v3765 = vld [vmem:[%s20 + $0x8] sm:$0xf]
    %v3766 = vld [vmem:[%s20 + $0xc] sm:$0xf]
    %v3767 = vld [vmem:[%s21] sm:$0x1]
    %v3768 = vpack.c.bf16 %v3762, %v3761
    %v3770 = vlaneseq
    %v3771 = vshrl.u32 %v3770, 7
    %v3772 = vsub.s32 0, %v3771
    %v3773 = vrot.slane %v3767, %v3772
    %v3779 = vunpack.c.l.b16 %v3763
    %v3780 = vunpack.c.l.b16 %v3764
    %v3781 = vunpack.c.l.b16 %v3765
    %v3782 = vunpack.c.l.b16 %v3766
    %v3783 = vpack.c.b16 %v3780, %v3779
    %v3784 = vpack.c.b16 %v3782, %v3781
    %v3788 = vsel %vm77, %v3768, 0
    %3790 = vmatprep.subr.bf16.mxu0 0
    %3791 = vmatpush1.bf16.msra.mxu0 %v3783
    %3792 = vmatprep.subr.bf16.mxu0 0
    %3793 = vmatpush1.bf16.msra.mxu0 %v3784
    %3794 = vmatprep.subr.bf16.mxu0 0
    %3795 = vmatpush1.bf16.msra.mxu0 0
    %3796 = vmatprep.subr.bf16.mxu0 0
    %3797 = vmatpush1.bf16.msra.mxu0 0
    %3798 = vmatprep.subr.bf16.mxu0 0
    %3799 = vmatpush1.bf16.msra.mxu0 0
    %3800 = vmatprep.subr.bf16.mxu0 0
    %3801 = vmatpush1.bf16.msra.mxu0 0
    %3802 = vmatprep.subr.bf16.mxu0 0
    %3803 = vmatpush1.bf16.msra.mxu0 0
    %3804 = vmatprep.subr.bf16.mxu0 0
    %3805 = vmatpush1.bf16.msra.mxu0 0
    %3806 = vmatprep.subr.bf16.mxu0 0
    %3807 = vmatpush1.bf16.msra.mxu0 0
    %3808 = vmatprep.subr.bf16.mxu0 0
    %3809 = vmatpush1.bf16.msra.mxu0 0
    %3810 = vmatprep.subr.bf16.mxu0 0
    %3811 = vmatpush1.bf16.msra.mxu0 0
    %3812 = vmatprep.subr.bf16.mxu0 0
    %3813 = vmatpush1.bf16.msra.mxu0 0
    %3814 = vmatprep.subr.bf16.mxu0 0
    %3815 = vmatpush1.bf16.msra.mxu0 0
    %3816 = vmatprep.subr.bf16.mxu0 0
    %3817 = vmatpush1.bf16.msra.mxu0 0
    %3818 = vmatprep.subr.bf16.mxu0 0
    %3819 = vmatpush1.bf16.msra.mxu0 0
    %3820 = vmatprep.subr.bf16.mxu0 0
    %3821 = vmatpush1.bf16.msra.mxu0 0
    %3822 = vmatprep.mubr.bf16.mxu0 0
    %3823 = vmatmul.mubr.bf16.gmra.mrb[0].mxu0 %v3788
    %v3824 = vpop.f32.mrb[0].mxu0
    %v3825 = vadd.f32 %v3773, %v3824
    %v3826 = vpop.f32.mrb[0].mxu0
    %v3827 = vpop.f32.mrb[0].mxu0
    %v3828 = vadd.f32 %v3773, %v3827
    %v3829 = vpop.f32.mrb[0].mxu0
    %3830 = vdwg.mxu0
    %3831 = vst [vmem:[#allocation2] sm:$0xff] %v3825
    %3832 = vst [vmem:[#allocation2 + $0x8] sm:$0xff] %v3828
    // Predicated region
    $region90: #{bert_seq_forward.1} parent=1 // pred_check
      _
    $region91: #{bert_seq_forward.1} parent=1 // pred_check_branch
      %3834 = sbr.rel (0) target = $region93
    $region92: #{bert_seq_forward.1} parent=1 // pred_region
      %s3836 = ssub.s32 256, 256
      %3837 = vsyncadd [#allocation3], %s3836
      %s3838 = sshll.u32 [#allocation2], 4
      %s3839 = int_to_ptr.vmem [resolvable:$true] %s3838
      %3844 = dma.vmem_to_hbm [thread:$0]  %s3839, 256, %s22, [#allocation3], 128, 128, 8
    $region93: #{bert_seq_forward.1} parent=1 // pred_fallthru
      _
    // Predicated region
    $region94: #{bert_seq_forward.1} parent=1 // pred_check
      _
    $region95: #{bert_seq_forward.1} parent=1 // pred_check_branch
      %3846 = sbr.rel (0) target = $region97
    $region96: #{bert_seq_forward.1} parent=1 // pred_region
      %3847 = dma.done [#allocation3], 256
    $region97: #{bert_seq_forward.1} parent=1 // pred_fallthru
      _
    %3848 = vsyncpa [#allocation3], 1

</llo_original>
